<compile_context>
chip_gen: v7x
topology: tpu7x:2x2x1
jax: 0.10.0
libtpu: 0.0.40
codegen_flags: <defaults>
</compile_context>

<pallas_src>
import functools

import jax
import jax.numpy as jnp
import numpy as np
from jax.experimental import pallas as pl
from jax.experimental.pallas import tpu as pltpu

NUM_ROUTING_ITERS = 3
SQUASH_EPS = 1e-8


def digitcaps_kernel(x_ref, w_ref, out_ref):
    # x_ref block:   (TB, N, D_in)        -- sublanes = N, lanes = D_in
    # w_ref block:   (D_in, O, N, D_out)  -- sublanes = N, lanes = D_out (dense)
    # out_ref block: (TB*O, D_out)        -- lane/sublane-dense store
    d_in, num_out, num_in, d_out = w_ref.shape
    tb = x_ref.shape[0]

    # x_hat[t, o, n, d] = sum_j W[j, o, n, d] * x[t, n, j]
    # Each j-step: lane-broadcast of the x column (N already on sublanes) times
    # a fully-packed, lane-dense W slab -> pure VPU FMAs, no relayouts.
    def xj(j):
        return x_ref[:, :, j:j + 1][:, None, :, :]          # (TB, 1, N, 1)

    x_hat = w_ref[0:1] * xj(0)                               # (TB, O, N, D_out)
    for j in range(1, d_in):
        x_hat = x_hat + w_ref[j:j + 1] * xj(j)

    # Dynamic routing.  b/c live in the (N-on-sublane, single-lane) layout that
    # the reductions naturally produce/consume, so the loop has no
    # lane<->sublane relayouts.  Softmax is over the O axis (torch dim=1).
    b_log = jnp.zeros((tb, num_out, num_in, 1), jnp.float32)
    for i in range(NUM_ROUTING_ITERS):
        b_max = jnp.max(b_log, axis=1, keepdims=True)
        e = jnp.exp(b_log - b_max)
        denom = jnp.sum(e, axis=1, keepdims=True)
        c = e * pl.reciprocal(denom, approx=True)            # EUP reciprocal
        # s[t,o,d] = sum_n c[t,o,n] * x_hat[t,o,n,d]  (sublane-axis reduce)
        s = jnp.sum(c * x_hat, axis=2, keepdims=True)         # (TB, O, 1, D_out)
        # TODO(synk): self.squash is not defined in the provided PyTorch
        # snippet; this is the canonical capsule squash over the last axis,
        # with the divide/sqrt moved to the EUP (rsqrt + approx reciprocal).
        norm_sq = jnp.sum(s * s, axis=-1, keepdims=True)      # (TB, O, 1, 1)
        inv_norm = jax.lax.rsqrt(norm_sq + SQUASH_EPS)
        scale = norm_sq * inv_norm * pl.reciprocal(1.0 + norm_sq, approx=True)
        v = scale * s                                          # (TB, O, 1, D_out)
        if i < NUM_ROUTING_ITERS - 1:
            # b += sum_d v[t,o,d] * x_hat[t,o,n,d]  (lane-axis reduce).
            # (.detach() in the torch code only affects grads; forward identical)
            b_log = b_log + jnp.sum(v * x_hat, axis=3, keepdims=True)

    # Single repack into a dense (TB*O, D_out) slab -> unmasked vreg stores.
    out_ref[...] = v.reshape(tb * num_out, d_out)


def prepare_digitcaps_weights(W):
    """One-time (parameter-init) transform: (O, N, D_out, D_in) -> (D_in, O, N, D_out).

    Hoisted out of the per-call path so the forward pass does not pay an HBM
    round trip re-transposing a constant parameter on every call.
    """
    return jnp.transpose(W, (3, 0, 1, 2))


def _tensorcores_per_chip():
    """Deterministic capability check (replaces the old try/except ladder)."""
    kind = jax.devices()[0].device_kind.lower()
    # Single-TensorCore chips: v2/v3 (one TC per JAX device), v5e/v6e ("lite").
    if any(tag in kind for tag in ("lite", "v5e", "v6e", "v2", "v3")):
        return 1
    # v4 / v5p megacore and v7x: two TensorCores shard the "parallel" grid axis.
    return 2


def _pick_row_tile(B, O, cores):
    # One grid step per TensorCore: grid=(1,) on single-TC chips (no fixed
    # per-step overhead), grid=(cores,) on dual-TC chips so no core sits idle.
    tb = B // cores if (cores > 1 and B % cores == 0) else B
    # Keep the flat output block sublane-dense unless it is the full array.
    if tb != B and (tb * O) % 8 != 0:
        tb = B
    return tb


@functools.lru_cache(maxsize=None)
def _build_digitcaps_call(B, N, D_in, O, D_out, tb):
    return pl.pallas_call(
        digitcaps_kernel,
        out_shape=jax.ShapeDtypeStruct((B * O, D_out), jnp.float32),
        grid_spec=pltpu.PrefetchScalarGridSpec(
            num_scalar_prefetch=0,
            grid=(B // tb,),
            in_specs=[
                # x in its natural (B, N, D_in) layout: N on sublanes.
                pl.BlockSpec((tb, N, D_in), lambda b: (b, 0, 0)),
                # W block index is constant across the grid: Pallas skips the
                # re-DMA on revisits and each core runs <= a couple of steps,
                # so no pipeline_mode override is needed.
                pl.BlockSpec((D_in, O, N, D_out), lambda b: (0, 0, 0, 0)),
            ],
            # Flat lane/sublane-dense output block; reshaped (free) in the wrapper.
            out_specs=pl.BlockSpec((tb * O, D_out), lambda b: (b, 0)),
        ),
        compiler_params=pltpu.CompilerParams(
            # Batch rows are independent -> megacore/v7x shardable.
            dimension_semantics=("parallel",),
            # Plenty of headroom at these shapes; raise (v5e/v6e: up to ~100+
            # MiB, v7x: cap ~48-56 MiB of its 64 MiB) when scaling TB / N.
            vmem_limit_bytes=32 * 1024 * 1024,
        ),
    )


def digitcaps_forward(x, w_t, decode_idx=-1, row_tile=None):
    """x: (B, N, D_in) f32;  w_t: (D_in, O, N, D_out) f32 (prepare_digitcaps_weights)
       -> (t: (B, 1, D_out), outputs: (B, O, D_out))."""
    B, N, D_in = x.shape
    d_in2, O, n2, D_out = w_t.shape
    assert d_in2 == D_in and n2 == N
    if row_tile is None:
        row_tile = _pick_row_tile(B, O, _tensorcores_per_chip())
    assert B % row_tile == 0

    call = _build_digitcaps_call(B, N, D_in, O, D_out, row_tile)
    v_flat = call(x, w_t)                          # (B*O, D_out), dense rows t*O+o
    outputs = v_flat.reshape(B, O, D_out)          # contiguous -> free in XLA

    # decode_idx / masking path: a handful of cheap XLA ops, kept out of the
    # hot kernel.  softmax over capsule lengths is monotone => same argmax.
    if decode_idx == -1:
        classes = jnp.sqrt(jnp.sum(outputs * outputs, axis=-1))      # (B, O)
        idx = jnp.argmax(classes, axis=1)
    else:
        idx = jnp.full((B,), decode_idx, dtype=jnp.int32)
    mask = jax.nn.one_hot(idx, O, dtype=outputs.dtype)               # (B, O)
    t = jnp.sum(outputs * mask[:, :, None], axis=1, keepdims=True)   # (B, 1, D_out)
    return t, outputs


def digitcaps_ref(x, W):
    """Pure-JAX reference mirroring the PyTorch forward (exact f32 math)."""
    x_hat = jnp.einsum('onij,bnj->boni', W, x,
                       precision=jax.lax.Precision.HIGHEST)          # (B, O, N, D_out)
    B = x.shape[0]
    O, N, D_out, _ = W.shape
    b = jnp.zeros((B, O, N), jnp.float32)
    v = None
    for i in range(NUM_ROUTING_ITERS):
        c = jax.nn.softmax(b, axis=1)
        s = jnp.sum(c[..., None] * x_hat, axis=2)                    # (B, O, D_out)
        norm_sq = jnp.sum(s * s, axis=-1, keepdims=True)
        norm = jnp.sqrt(norm_sq)
        v = (norm_sq / ((1.0 + norm_sq) * (norm + SQUASH_EPS))) * s
        if i < NUM_ROUTING_ITERS - 1:
            b = b + jnp.sum(v[:, :, None, :] * x_hat, axis=-1)
    classes = jnp.sqrt(jnp.sum(v * v, axis=2))                       # (B, O)
    idx = jnp.argmax(classes, axis=1)
    mask = jax.nn.one_hot(idx, O, dtype=v.dtype)
    t = jnp.sum(v * mask[:, :, None], axis=1, keepdims=True)
    return t, v


if __name__ == "__main__":
    # Small shapes consistent with
    # DigitCaps(out_num_caps=O, in_num_caps=N, in_dim_caps=D_in, out_dim_caps=D_out)
    B, O, N, D_in, D_out = 8, 2, 64, 8, 128

    key = jax.random.PRNGKey(0)
    kx, kw = jax.random.split(key)
    x = jax.random.normal(kx, (B, N, D_in), dtype=jnp.float32)
    W = 0.01 * jax.random.normal(kw, (O, N, D_out, D_in), dtype=jnp.float32)

    # W transpose happens once here ("parameter init"), not per forward call.
    w_t = prepare_digitcaps_weights(W)
    w_t = jax.block_until_ready(w_t)

    t, outputs = digitcaps_forward(x, w_t)
    t, outputs = jax.block_until_ready((t, outputs))
    assert t.shape == (B, 1, D_out) and outputs.shape == (B, O, D_out)

    t_exp, out_exp = digitcaps_ref(x, W)
    # Tolerances loosened slightly vs f32-exact because the kernel uses the EUP
    # approximate reciprocal / rsqrt (per perf review); routing is iteratively
    # self-normalizing so the drift stays ~1e-4 absolute at these magnitudes.
    np.testing.assert_allclose(np.asarray(outputs), np.asarray(out_exp),
                               rtol=5e-3, atol=5e-4)
    np.testing.assert_allclose(np.asarray(t), np.asarray(t_exp),
                               rtol=5e-3, atol=5e-4)

    print("KERNEL_OK")
</pallas_src>

<mosaic_0001>
module attributes {stable_mosaic.version = 11 : i64} {
  func.func @digitcaps_kernel(%arg0: i32, %arg1: memref<4x64x8xf32, #tpu.memory_space<vmem>>, %arg2: memref<8x2x64x128xf32, #tpu.memory_space<vmem>>, %arg3: memref<8x128xf32, #tpu.memory_space<vmem>>) attributes {dimension_semantics = [#tpu.dimension_semantics<parallel>], iteration_bounds = array<i64: 2>, scalar_prefetch = 0 : i64, scratch_operands = 0 : i64, tpu.core_type = #tpu.core_type<tc>, window_params = [{transform_indices = @transform_0, window_bounds = array<i64: 4, 64, 8>}, {pipeline_mode = #tpu.pipeline_mode<synchronous>, transform_indices = @transform_1, window_bounds = array<i64: 8, 2, 64, 128>}, {transform_indices = @transform_2, window_bounds = array<i64: 8, 128>}]} {
    %c0 = arith.constant 0 : index
    %c0_0 = arith.constant 0 : index
    %c0_1 = arith.constant 0 : index
    %c0_2 = arith.constant 0 : index
    %0 = vector.load %arg2[%c0, %c0_0, %c0_1, %c0_2] : memref<8x2x64x128xf32, #tpu.memory_space<vmem>>, vector<1x2x64x128xf32>
    %c0_3 = arith.constant 0 : index
    %c0_4 = arith.constant 0 : index
    %c0_5 = arith.constant 0 : index
    %1 = vector.load %arg1[%c0_3, %c0_4, %c0_5] : memref<4x64x8xf32, #tpu.memory_space<vmem>>, vector<4x64x1xf32>
    %2 = vector.shape_cast %1 : vector<4x64x1xf32> to vector<4x1x64x1xf32>
    %3 = vector.broadcast %0 : vector<1x2x64x128xf32> to vector<4x2x64x128xf32>
    %4 = vector.broadcast %2 : vector<4x1x64x1xf32> to vector<4x2x64x128xf32>
    %5 = arith.mulf %3, %4 : vector<4x2x64x128xf32>
    %c1 = arith.constant 1 : index
    %c0_6 = arith.constant 0 : index
    %c0_7 = arith.constant 0 : index
    %c0_8 = arith.constant 0 : index
    %6 = vector.load %arg2[%c1, %c0_6, %c0_7, %c0_8] : memref<8x2x64x128xf32, #tpu.memory_space<vmem>>, vector<1x2x64x128xf32>
    %c0_9 = arith.constant 0 : index
    %c0_10 = arith.constant 0 : index
    %c1_11 = arith.constant 1 : index
    %7 = vector.load %arg1[%c0_9, %c0_10, %c1_11] : memref<4x64x8xf32, #tpu.memory_space<vmem>>, vector<4x64x1xf32>
    %8 = vector.shape_cast %7 : vector<4x64x1xf32> to vector<4x1x64x1xf32>
    %9 = vector.broadcast %6 : vector<1x2x64x128xf32> to vector<4x2x64x128xf32>
    %10 = vector.broadcast %8 : vector<4x1x64x1xf32> to vector<4x2x64x128xf32>
    %11 = arith.mulf %9, %10 : vector<4x2x64x128xf32>
    %12 = arith.addf %5, %11 : vector<4x2x64x128xf32>
    %c2 = arith.constant 2 : index
    %c0_12 = arith.constant 0 : index
    %c0_13 = arith.constant 0 : index
    %c0_14 = arith.constant 0 : index
    %13 = vector.load %arg2[%c2, %c0_12, %c0_13, %c0_14] : memref<8x2x64x128xf32, #tpu.memory_space<vmem>>, vector<1x2x64x128xf32>
    %c0_15 = arith.constant 0 : index
    %c0_16 = arith.constant 0 : index
    %c2_17 = arith.constant 2 : index
    %14 = vector.load %arg1[%c0_15, %c0_16, %c2_17] : memref<4x64x8xf32, #tpu.memory_space<vmem>>, vector<4x64x1xf32>
    %15 = vector.shape_cast %14 : vector<4x64x1xf32> to vector<4x1x64x1xf32>
    %16 = vector.broadcast %13 : vector<1x2x64x128xf32> to vector<4x2x64x128xf32>
    %17 = vector.broadcast %15 : vector<4x1x64x1xf32> to vector<4x2x64x128xf32>
    %18 = arith.mulf %16, %17 : vector<4x2x64x128xf32>
    %19 = arith.addf %12, %18 : vector<4x2x64x128xf32>
    %c3 = arith.constant 3 : index
    %c0_18 = arith.constant 0 : index
    %c0_19 = arith.constant 0 : index
    %c0_20 = arith.constant 0 : index
    %20 = vector.load %arg2[%c3, %c0_18, %c0_19, %c0_20] : memref<8x2x64x128xf32, #tpu.memory_space<vmem>>, vector<1x2x64x128xf32>
    %c0_21 = arith.constant 0 : index
    %c0_22 = arith.constant 0 : index
    %c3_23 = arith.constant 3 : index
    %21 = vector.load %arg1[%c0_21, %c0_22, %c3_23] : memref<4x64x8xf32, #tpu.memory_space<vmem>>, vector<4x64x1xf32>
    %22 = vector.shape_cast %21 : vector<4x64x1xf32> to vector<4x1x64x1xf32>
    %23 = vector.broadcast %20 : vector<1x2x64x128xf32> to vector<4x2x64x128xf32>
    %24 = vector.broadcast %22 : vector<4x1x64x1xf32> to vector<4x2x64x128xf32>
    %25 = arith.mulf %23, %24 : vector<4x2x64x128xf32>
    %26 = arith.addf %19, %25 : vector<4x2x64x128xf32>
    %c4 = arith.constant 4 : index
    %c0_24 = arith.constant 0 : index
    %c0_25 = arith.constant 0 : index
    %c0_26 = arith.constant 0 : index
    %27 = vector.load %arg2[%c4, %c0_24, %c0_25, %c0_26] : memref<8x2x64x128xf32, #tpu.memory_space<vmem>>, vector<1x2x64x128xf32>
    %c0_27 = arith.constant 0 : index
    %c0_28 = arith.constant 0 : index
    %c4_29 = arith.constant 4 : index
    %28 = vector.load %arg1[%c0_27, %c0_28, %c4_29] : memref<4x64x8xf32, #tpu.memory_space<vmem>>, vector<4x64x1xf32>
    %29 = vector.shape_cast %28 : vector<4x64x1xf32> to vector<4x1x64x1xf32>
    %30 = vector.broadcast %27 : vector<1x2x64x128xf32> to vector<4x2x64x128xf32>
    %31 = vector.broadcast %29 : vector<4x1x64x1xf32> to vector<4x2x64x128xf32>
    %32 = arith.mulf %30, %31 : vector<4x2x64x128xf32>
    %33 = arith.addf %26, %32 : vector<4x2x64x128xf32>
    %c5 = arith.constant 5 : index
    %c0_30 = arith.constant 0 : index
    %c0_31 = arith.constant 0 : index
    %c0_32 = arith.constant 0 : index
    %34 = vector.load %arg2[%c5, %c0_30, %c0_31, %c0_32] : memref<8x2x64x128xf32, #tpu.memory_space<vmem>>, vector<1x2x64x128xf32>
    %c0_33 = arith.constant 0 : index
    %c0_34 = arith.constant 0 : index
    %c5_35 = arith.constant 5 : index
    %35 = vector.load %arg1[%c0_33, %c0_34, %c5_35] : memref<4x64x8xf32, #tpu.memory_space<vmem>>, vector<4x64x1xf32>
    %36 = vector.shape_cast %35 : vector<4x64x1xf32> to vector<4x1x64x1xf32>
    %37 = vector.broadcast %34 : vector<1x2x64x128xf32> to vector<4x2x64x128xf32>
    %38 = vector.broadcast %36 : vector<4x1x64x1xf32> to vector<4x2x64x128xf32>
    %39 = arith.mulf %37, %38 : vector<4x2x64x128xf32>
    %40 = arith.addf %33, %39 : vector<4x2x64x128xf32>
    %c6 = arith.constant 6 : index
    %c0_36 = arith.constant 0 : index
    %c0_37 = arith.constant 0 : index
    %c0_38 = arith.constant 0 : index
    %41 = vector.load %arg2[%c6, %c0_36, %c0_37, %c0_38] : memref<8x2x64x128xf32, #tpu.memory_space<vmem>>, vector<1x2x64x128xf32>
    %c0_39 = arith.constant 0 : index
    %c0_40 = arith.constant 0 : index
    %c6_41 = arith.constant 6 : index
    %42 = vector.load %arg1[%c0_39, %c0_40, %c6_41] : memref<4x64x8xf32, #tpu.memory_space<vmem>>, vector<4x64x1xf32>
    %43 = vector.shape_cast %42 : vector<4x64x1xf32> to vector<4x1x64x1xf32>
    %44 = vector.broadcast %41 : vector<1x2x64x128xf32> to vector<4x2x64x128xf32>
    %45 = vector.broadcast %43 : vector<4x1x64x1xf32> to vector<4x2x64x128xf32>
    %46 = arith.mulf %44, %45 : vector<4x2x64x128xf32>
    %47 = arith.addf %40, %46 : vector<4x2x64x128xf32>
    %c7 = arith.constant 7 : index
    %c0_42 = arith.constant 0 : index
    %c0_43 = arith.constant 0 : index
    %c0_44 = arith.constant 0 : index
    %48 = vector.load %arg2[%c7, %c0_42, %c0_43, %c0_44] : memref<8x2x64x128xf32, #tpu.memory_space<vmem>>, vector<1x2x64x128xf32>
    %c0_45 = arith.constant 0 : index
    %c0_46 = arith.constant 0 : index
    %c7_47 = arith.constant 7 : index
    %49 = vector.load %arg1[%c0_45, %c0_46, %c7_47] : memref<4x64x8xf32, #tpu.memory_space<vmem>>, vector<4x64x1xf32>
    %50 = vector.shape_cast %49 : vector<4x64x1xf32> to vector<4x1x64x1xf32>
    %51 = vector.broadcast %48 : vector<1x2x64x128xf32> to vector<4x2x64x128xf32>
    %52 = vector.broadcast %50 : vector<4x1x64x1xf32> to vector<4x2x64x128xf32>
    %53 = arith.mulf %51, %52 : vector<4x2x64x128xf32>
    %54 = arith.addf %47, %53 : vector<4x2x64x128xf32>
    %cst = arith.constant 0.000000e+00 : f32
    %55 = vector.broadcast %cst : f32 to vector<4x2x64x1xf32>
    %cst_48 = arith.constant dense<0xFF800000> : vector<4x64x1xf32>
    %56 = vector.multi_reduction <maximumf>, %55, %cst_48 [1] : vector<4x2x64x1xf32> to vector<4x64x1xf32>
    %57 = vector.shape_cast %56 : vector<4x64x1xf32> to vector<4x1x64x1xf32>
    %58 = vector.broadcast %57 : vector<4x1x64x1xf32> to vector<4x2x64x1xf32>
    %59 = arith.subf %55, %58 : vector<4x2x64x1xf32>
    %60 = math.exp %59 : vector<4x2x64x1xf32>
    %cst_49 = arith.constant dense<0.000000e+00> : vector<4x64x1xf32>
    %61 = vector.multi_reduction <add>, %60, %cst_49 [1] : vector<4x2x64x1xf32> to vector<4x64x1xf32>
    %62 = vector.shape_cast %61 : vector<4x64x1xf32> to vector<4x1x64x1xf32>
    %63 = tpu.reciprocal %62 {approx = true} : vector<4x1x64x1xf32> -> vector<4x1x64x1xf32>
    %64 = vector.broadcast %63 : vector<4x1x64x1xf32> to vector<4x2x64x1xf32>
    %65 = arith.mulf %60, %64 : vector<4x2x64x1xf32>
    %66 = vector.broadcast %65 : vector<4x2x64x1xf32> to vector<4x2x64x128xf32>
    %67 = arith.mulf %66, %54 : vector<4x2x64x128xf32>
    %cst_50 = arith.constant dense<0.000000e+00> : vector<4x2x128xf32>
    %68 = vector.multi_reduction <add>, %67, %cst_50 [2] : vector<4x2x64x128xf32> to vector<4x2x128xf32>
    %69 = vector.shape_cast %68 : vector<4x2x128xf32> to vector<4x2x1x128xf32>
    %70 = arith.mulf %69, %69 : vector<4x2x1x128xf32>
    %cst_51 = arith.constant dense<0.000000e+00> : vector<4x2x1xf32>
    %71 = vector.multi_reduction <add>, %70, %cst_51 [3] : vector<4x2x1x128xf32> to vector<4x2x1xf32>
    %72 = vector.shape_cast %71 : vector<4x2x1xf32> to vector<4x2x1x1xf32>
    %cst_52 = arith.constant 9.99999993E-9 : f32
    %73 = vector.broadcast %cst_52 : f32 to vector<4x2x1x1xf32>
    %74 = arith.addf %72, %73 : vector<4x2x1x1xf32>
    %75 = math.rsqrt %74 : vector<4x2x1x1xf32>
    %76 = arith.mulf %72, %75 : vector<4x2x1x1xf32>
    %cst_53 = arith.constant 1.000000e+00 : f32
    %77 = vector.broadcast %cst_53 : f32 to vector<4x2x1x1xf32>
    %78 = arith.addf %77, %72 : vector<4x2x1x1xf32>
    %79 = tpu.reciprocal %78 {approx = true} : vector<4x2x1x1xf32> -> vector<4x2x1x1xf32>
    %80 = arith.mulf %76, %79 : vector<4x2x1x1xf32>
    %81 = vector.broadcast %80 : vector<4x2x1x1xf32> to vector<4x2x1x128xf32>
    %82 = arith.mulf %81, %69 : vector<4x2x1x128xf32>
    %83 = vector.broadcast %82 : vector<4x2x1x128xf32> to vector<4x2x64x128xf32>
    %84 = arith.mulf %83, %54 : vector<4x2x64x128xf32>
    %cst_54 = arith.constant dense<0.000000e+00> : vector<4x2x64xf32>
    %85 = vector.multi_reduction <add>, %84, %cst_54 [3] : vector<4x2x64x128xf32> to vector<4x2x64xf32>
    %86 = vector.shape_cast %85 : vector<4x2x64xf32> to vector<4x2x64x1xf32>
    %87 = arith.addf %55, %86 : vector<4x2x64x1xf32>
    %cst_55 = arith.constant dense<0xFF800000> : vector<4x64x1xf32>
    %88 = vector.multi_reduction <maximumf>, %87, %cst_55 [1] : vector<4x2x64x1xf32> to vector<4x64x1xf32>
    %89 = vector.shape_cast %88 : vector<4x64x1xf32> to vector<4x1x64x1xf32>
    %90 = vector.broadcast %89 : vector<4x1x64x1xf32> to vector<4x2x64x1xf32>
    %91 = arith.subf %87, %90 : vector<4x2x64x1xf32>
    %92 = math.exp %91 : vector<4x2x64x1xf32>
    %cst_56 = arith.constant dense<0.000000e+00> : vector<4x64x1xf32>
    %93 = vector.multi_reduction <add>, %92, %cst_56 [1] : vector<4x2x64x1xf32> to vector<4x64x1xf32>
    %94 = vector.shape_cast %93 : vector<4x64x1xf32> to vector<4x1x64x1xf32>
    %95 = tpu.reciprocal %94 {approx = true} : vector<4x1x64x1xf32> -> vector<4x1x64x1xf32>
    %96 = vector.broadcast %95 : vector<4x1x64x1xf32> to vector<4x2x64x1xf32>
    %97 = arith.mulf %92, %96 : vector<4x2x64x1xf32>
    %98 = vector.broadcast %97 : vector<4x2x64x1xf32> to vector<4x2x64x128xf32>
    %99 = arith.mulf %98, %54 : vector<4x2x64x128xf32>
    %cst_57 = arith.constant dense<0.000000e+00> : vector<4x2x128xf32>
    %100 = vector.multi_reduction <add>, %99, %cst_57 [2] : vector<4x2x64x128xf32> to vector<4x2x128xf32>
    %101 = vector.shape_cast %100 : vector<4x2x128xf32> to vector<4x2x1x128xf32>
    %102 = arith.mulf %101, %101 : vector<4x2x1x128xf32>
    %cst_58 = arith.constant dense<0.000000e+00> : vector<4x2x1xf32>
    %103 = vector.multi_reduction <add>, %102, %cst_58 [3] : vector<4x2x1x128xf32> to vector<4x2x1xf32>
    %104 = vector.shape_cast %103 : vector<4x2x1xf32> to vector<4x2x1x1xf32>
    %cst_59 = arith.constant 9.99999993E-9 : f32
    %105 = vector.broadcast %cst_59 : f32 to vector<4x2x1x1xf32>
    %106 = arith.addf %104, %105 : vector<4x2x1x1xf32>
    %107 = math.rsqrt %106 : vector<4x2x1x1xf32>
    %108 = arith.mulf %104, %107 : vector<4x2x1x1xf32>
    %cst_60 = arith.constant 1.000000e+00 : f32
    %109 = vector.broadcast %cst_60 : f32 to vector<4x2x1x1xf32>
    %110 = arith.addf %109, %104 : vector<4x2x1x1xf32>
    %111 = tpu.reciprocal %110 {approx = true} : vector<4x2x1x1xf32> -> vector<4x2x1x1xf32>
    %112 = arith.mulf %108, %111 : vector<4x2x1x1xf32>
    %113 = vector.broadcast %112 : vector<4x2x1x1xf32> to vector<4x2x1x128xf32>
    %114 = arith.mulf %113, %101 : vector<4x2x1x128xf32>
    %115 = vector.broadcast %114 : vector<4x2x1x128xf32> to vector<4x2x64x128xf32>
    %116 = arith.mulf %115, %54 : vector<4x2x64x128xf32>
    %cst_61 = arith.constant dense<0.000000e+00> : vector<4x2x64xf32>
    %117 = vector.multi_reduction <add>, %116, %cst_61 [3] : vector<4x2x64x128xf32> to vector<4x2x64xf32>
    %118 = vector.shape_cast %117 : vector<4x2x64xf32> to vector<4x2x64x1xf32>
    %119 = arith.addf %87, %118 : vector<4x2x64x1xf32>
    %cst_62 = arith.constant dense<0xFF800000> : vector<4x64x1xf32>
    %120 = vector.multi_reduction <maximumf>, %119, %cst_62 [1] : vector<4x2x64x1xf32> to vector<4x64x1xf32>
    %121 = vector.shape_cast %120 : vector<4x64x1xf32> to vector<4x1x64x1xf32>
    %122 = vector.broadcast %121 : vector<4x1x64x1xf32> to vector<4x2x64x1xf32>
    %123 = arith.subf %119, %122 : vector<4x2x64x1xf32>
    %124 = math.exp %123 : vector<4x2x64x1xf32>
    %cst_63 = arith.constant dense<0.000000e+00> : vector<4x64x1xf32>
    %125 = vector.multi_reduction <add>, %124, %cst_63 [1] : vector<4x2x64x1xf32> to vector<4x64x1xf32>
    %126 = vector.shape_cast %125 : vector<4x64x1xf32> to vector<4x1x64x1xf32>
    %127 = tpu.reciprocal %126 {approx = true} : vector<4x1x64x1xf32> -> vector<4x1x64x1xf32>
    %128 = vector.broadcast %127 : vector<4x1x64x1xf32> to vector<4x2x64x1xf32>
    %129 = arith.mulf %124, %128 : vector<4x2x64x1xf32>
    %130 = vector.broadcast %129 : vector<4x2x64x1xf32> to vector<4x2x64x128xf32>
    %131 = arith.mulf %130, %54 : vector<4x2x64x128xf32>
    %cst_64 = arith.constant dense<0.000000e+00> : vector<4x2x128xf32>
    %132 = vector.multi_reduction <add>, %131, %cst_64 [2] : vector<4x2x64x128xf32> to vector<4x2x128xf32>
    %133 = vector.shape_cast %132 : vector<4x2x128xf32> to vector<4x2x1x128xf32>
    %134 = arith.mulf %133, %133 : vector<4x2x1x128xf32>
    %cst_65 = arith.constant dense<0.000000e+00> : vector<4x2x1xf32>
    %135 = vector.multi_reduction <add>, %134, %cst_65 [3] : vector<4x2x1x128xf32> to vector<4x2x1xf32>
    %136 = vector.shape_cast %135 : vector<4x2x1xf32> to vector<4x2x1x1xf32>
    %cst_66 = arith.constant 9.99999993E-9 : f32
    %137 = vector.broadcast %cst_66 : f32 to vector<4x2x1x1xf32>
    %138 = arith.addf %136, %137 : vector<4x2x1x1xf32>
    %139 = math.rsqrt %138 : vector<4x2x1x1xf32>
    %140 = arith.mulf %136, %139 : vector<4x2x1x1xf32>
    %cst_67 = arith.constant 1.000000e+00 : f32
    %141 = vector.broadcast %cst_67 : f32 to vector<4x2x1x1xf32>
    %142 = arith.addf %141, %136 : vector<4x2x1x1xf32>
    %143 = tpu.reciprocal %142 {approx = true} : vector<4x2x1x1xf32> -> vector<4x2x1x1xf32>
    %144 = arith.mulf %140, %143 : vector<4x2x1x1xf32>
    %145 = vector.broadcast %144 : vector<4x2x1x1xf32> to vector<4x2x1x128xf32>
    %146 = arith.mulf %145, %133 : vector<4x2x1x128xf32>
    %147 = vector.shape_cast %146 : vector<4x2x1x128xf32> to vector<8x128xf32>
    %c0_68 = arith.constant 0 : index
    %c0_69 = arith.constant 0 : index
    %148 = vector.load %arg3[%c0_68, %c0_69] : memref<8x128xf32, #tpu.memory_space<vmem>>, vector<8x128xf32>
    tpu.vector_store %arg3[%c0_68, %c0_69], %147 {strides = array<i32>} : memref<8x128xf32, #tpu.memory_space<vmem>>, vector<8x128xf32>,
    return
  }
  func.func @transform_0(%arg0: i32) -> (i32, i32, i32) {
    %c0_i32 = arith.constant 0 : i32
    %c0_i32_0 = arith.constant 0 : i32
    %c0_i32_1 = arith.constant 0 : i32
    return %arg0, %c0_i32, %c0_i32_0 : i32, i32, i32
  }
  func.func @transform_1(%arg0: i32) -> (i32, i32, i32, i32) {
    %c0_i32 = arith.constant 0 : i32
    %c0_i32_0 = arith.constant 0 : i32
    %c0_i32_1 = arith.constant 0 : i32
    %c0_i32_2 = arith.constant 0 : i32
    %c0_i32_3 = arith.constant 0 : i32
    return %c0_i32, %c0_i32_0, %c0_i32_1, %c0_i32_2 : i32, i32, i32, i32
  }
  func.func @transform_2(%arg0: i32) -> (i32, i32) {
    %c0_i32 = arith.constant 0 : i32
    %c0_i32_0 = arith.constant 0 : i32
    return %arg0, %c0_i32 : i32, i32
  }
}

</mosaic_0001>

<llo_original>
// kernel: tpu_custom_call.1
$region0: #{tpu_custom_call.1}
  #allocation0 [shape = 'u32[]', space=smem, size = 0x4, offset = 0x4, fixed_abs, tag = 'smem constant byte address 0x4 - core index']
  #allocation1 [shape = 'u32[144,128]{1,0:T(1,128)}', space=vmem, size = 0x12000, scoped, tag = 'internal scratch']
  %s0 = inlined_call_operand.vmem [shape: f32[8,64,8], index: 0, kind: input, shape index: {}]
  %s1 = inlined_call_operand.hbm [shape: f32[8,2,64,128], index: 1, kind: input, shape index: {}]
  %s2 = inlined_call_operand.hbm [shape: f32[16,128], index: 2, kind: output, shape index: {}]
  %s3 = sld [smem:[#allocation0]]
  $region45: #{tpu_custom_call.1} parent=0
    _
  %s5 = ssub.s32 1, %s3
  %s6 = scalar_select 0, %s5, %s3
  $region1: #{tpu_custom_call.1} parent=0
    #allocation2 [shape = 'u8[524288]{0}', space=vmem, size = 0x80000, scoped, tag = 'input window, operand 1, single buffered']
    #allocation3 [shape = 's32[2]{0}', space=sflag, size = 0x8, scoped, tag = 'scoped memory for tpu_custom_call.1']
    #allocation4 [shape = 's32[2]{0}', space=sflag, size = 0x8, scoped, tag = 'scoped memory for tpu_custom_call.1']
    #allocation5 [shape = 'u8[8192]{0}', space=vmem, size = 0x2000, scoped, tag = 'output window, operand 0']
    %7 = vsyncpa [#allocation3], 0
    %8 = vsyncpa [#allocation4], 0
    %s9 = scalar_lea.sflag [#allocation4], 1
    %10 = vsyncpa %s9, 0
    loop: start=0, step=1, limit=4
    $region2: #{tpu_custom_call.1} parent=1 // loop_pre_header
      _
    $region3: #{tpu_custom_call.1} parent=1 // loop_header
      %s12 = sphi 0, %s16
      %p13 = scmp.ge.s32.totalorder %s12, 4
      %s22 = sphi 0, %s24
      %s25 = sphi 0, %s22
      %s26 = sphi 0, %s25
      %s42 = sphi 0, %s26
      %s46 = sphi 0, %s46
      %s48 = sphi 0, %s46
      %s49 = sphi 0, %s48
      %s63 = sphi 0, %s49
      %s69 = sphi 0, %s71
      %s72 = sphi 0, %s69
      %s73 = sphi 0, %s72
      %s89 = sphi 0, %s73
    $region4: #{tpu_custom_call.1} parent=1 // loop_header_branch
      %15 = sbr.rel (%p13) target = $region8
    $region5: #{tpu_custom_call.1} parent=1 // loop_body
      %s17 = ssub.s32 %s12, 1
      %s18 = ssub.s32 %s12, 2
      %s19 = sadd.s32 %s12, 1
      %s20 = ssub.s32 %s12, %s19
      %p21 = scmp.eq.s32.totalorder %s20, 0
      %s23 = sadd.s32 %s22, 1
      %s24 = scalar_select %p21, %s22, %s23
      %p27 = pneg %p21
      %p28 = scmp.eq.s32.totalorder %s12, 1
      %p29 = por %p27, %p28
      %p30 = scmp.ne.s32.totalorder %s22, %s25
      %p31 = scmp.eq.s32.totalorder %s12, 0
      %p32 = por %p30, %p31
      %p33 = scmp.ne.s32.totalorder %s22, %s25
      %p34 = scmp.eq.s32.totalorder %s17, 1
      %p35 = por %p33, %p34
      %p36 = scmp.ne.s32.totalorder %s25, %s26
      %p37 = scmp.eq.s32.totalorder %s17, 0
      %p38 = por %p36, %p37
      %p39 = scmp.ne.s32.totalorder %s25, %s26
      %p40 = scmp.eq.s32.totalorder %s18, 1
      %p41 = por %p39, %p40
      %p43 = scmp.ne.s32.totalorder %s26, %s42
      %p44 = scmp.eq.s32.totalorder %s18, 0
      %p45 = por %p43, %p44
      %s47 = sadd.s32 %s46, 1
      %p50 = scmp.eq.s32.totalorder %s12, 1
      %p51 = scmp.ne.s32.totalorder %s46, %s48
      %p52 = scmp.eq.s32.totalorder %s12, 0
      %p53 = por %p51, %p52
      %p54 = scmp.ne.s32.totalorder %s46, %s48
      %p55 = scmp.eq.s32.totalorder %s17, 1
      %p56 = por %p54, %p55
      %p57 = scmp.ne.s32.totalorder %s48, %s49
      %p58 = scmp.eq.s32.totalorder %s17, 0
      %p59 = por %p57, %p58
      %p60 = scmp.ne.s32.totalorder %s48, %s49
      %p61 = scmp.eq.s32.totalorder %s18, 1
      %p62 = por %p60, %p61
      %p64 = scmp.ne.s32.totalorder %s49, %s63
      %p65 = scmp.eq.s32.totalorder %s18, 0
      %p66 = por %p64, %p65
      %s67 = ssub.s32 %s12, %s19
      %p68 = scmp.eq.s32.totalorder %s67, 0
      %s70 = sadd.s32 %s69, 1
      %s71 = scalar_select %p68, %s69, %s70
      %p74 = pneg %p68
      %p75 = scmp.eq.s32.totalorder %s12, 1
      %p76 = por %p74, %p75
      %p77 = scmp.ne.s32.totalorder %s69, %s72
      %p78 = scmp.eq.s32.totalorder %s12, 0
      %p79 = por %p77, %p78
      %p80 = scmp.ne.s32.totalorder %s69, %s72
      %p81 = scmp.eq.s32.totalorder %s17, 1
      %p82 = por %p80, %p81
      %p83 = scmp.ne.s32.totalorder %s72, %s73
      %p84 = scmp.eq.s32.totalorder %s17, 0
      %p85 = por %p83, %p84
      %p86 = scmp.ne.s32.totalorder %s72, %s73
      %p87 = scmp.eq.s32.totalorder %s18, 1
      %p88 = por %p86, %p87
      %p90 = scmp.ne.s32.totalorder %s73, %s89
      %p91 = scmp.eq.s32.totalorder %s18, 0
      %p92 = por %p90, %p91
      %p93 = scmp.le.s32.totalorder 1, %s12
      %p94 = scmp.lt.s32.totalorder %s12, 3
      %p95 = pnand %p93, %p94
      %p96 = pneg %p95
      // Predicated region
      $region9: #{tpu_custom_call.1} parent=5 // pred_check
        _
      $region10: #{tpu_custom_call.1} parent=5 // pred_check_branch
        %98 = sbr.rel (%p95) target = $region12
      $region11: #{tpu_custom_call.1} parent=5 // pred_region
        %s99 = ssub.s32 %s12, 1
        // Predicated region
        $region13: #{tpu_custom_call.1} parent=11 // pred_check
          %p100 = pneg %p59
        $region14: #{tpu_custom_call.1} parent=11 // pred_check_branch
          %102 = sbr.rel (%p100) target = $region16
        $region15: #{tpu_custom_call.1} parent=11 // pred_region
          %s104 = ssub.s32 16384, 16384
          %105 = vsyncadd [#allocation3], %s104
          %s106 = sshll.u32 [#allocation2], 4
          %s107 = int_to_ptr.vmem [resolvable:$true] %s106
          %112 = dma.hbm_to_vmem [thread:$0]  %s1, 16384, %s107, [#allocation3], 128, 128, 8
        $region16: #{tpu_custom_call.1} parent=11 // pred_fallthru
          _
      $region12: #{tpu_custom_call.1} parent=5 // pred_fallthru
        _
      %p113 = scmp.lt.s32.totalorder %s12, 2
      // Predicated region
      $region17: #{tpu_custom_call.1} parent=5 // pred_check
        %p114 = pneg %p113
      $region18: #{tpu_custom_call.1} parent=5 // pred_check_branch
        %116 = sbr.rel (%p114) target = $region20
      $region19: #{tpu_custom_call.1} parent=5 // pred_region
        // Predicated region
        $region21: #{tpu_custom_call.1} parent=19 // pred_check
          %p117 = pneg %p32
        $region22: #{tpu_custom_call.1} parent=19 // pred_check_branch
          %119 = sbr.rel (%p117) target = $region24
        $region23: #{tpu_custom_call.1} parent=19 // pred_region
          %s120 = smul.u32 4, %s12
          %p121 = scmp.lt.s32.totalorder %s120, 7
          %s122 = scalar_select %p121, %s120, 7
          %s123 = smul.addr %s122, 8
          %s124 = smul.addr %s123, 8
          %s125 = scalar_lea.vmem %s0, %s124
          %s126 = smul.u32 4, %s12
        $region24: #{tpu_custom_call.1} parent=19 // pred_fallthru
          _
      $region20: #{tpu_custom_call.1} parent=5 // pred_fallthru
        _
      %p127 = scmp.le.s32.totalorder 1, %s12
      %p128 = scmp.lt.s32.totalorder %s12, 3
      %p129 = pnand %p127, %p128
      %p130 = pneg %p129
      // Predicated region
      $region25: #{tpu_custom_call.1} parent=5 // pred_check
        _
      $region26: #{tpu_custom_call.1} parent=5 // pred_check_branch
        %132 = sbr.rel (%p129) target = $region28
      $region27: #{tpu_custom_call.1} parent=5 // pred_region
        %s133 = ssub.s32 %s12, 1
        // Predicated region
        $region29: #{tpu_custom_call.1} parent=27 // pred_check
          %p134 = pneg %p59
        $region30: #{tpu_custom_call.1} parent=27 // pred_check_branch
          %136 = sbr.rel (%p134) target = $region32
        $region31: #{tpu_custom_call.1} parent=27 // pred_region
          %137 = dma.done [#allocation3], 16384
        $region32: #{tpu_custom_call.1} parent=27 // pred_fallthru
          _
        %s138 = smul.u32 4, %s17
        %p139 = scmp.lt.s32.totalorder %s138, 7
        %s140 = scalar_select %p139, %s138, 7
        %s141 = smul.addr %s140, 8
        %s142 = smul.addr %s141, 8
        %s143 = scalar_lea.vmem %s0, %s142
        %p144 = pneg %p38
        %p145 = pneg %p35
        %p146 = pneg %p59
        %p147 = pneg %p56
        %p148 = pneg %p85
        %p149 = pneg %p82
        %s150 = sand.u32 %s72, 1
        %s151 = scalar_lea.sflag [#allocation4], %s150
        %s152 = sand.u32 %s72, 1
        %s153 = smul.addr %s152, 8
        %s154 = scalar_lea.vmem [#allocation5], %s153
        %s155 = smul.u32 4, %s17
        %p156 = scmp.lt.s32.totalorder %s155, 7
        %s157 = scalar_select %p156, %s155, 7
        %s158 = smul.addr %s157, 8
        %s159 = smul.addr %s158, 8
        %s160 = scalar_lea.vmem %s0, %s159
        %s161 = smul.u32 4, %s17
        %v162 = vld [vmem:[#allocation2] sm:$0xff]
        %v163 = vld [vmem:[#allocation2 + $0x8] sm:$0xff]
        %v164 = vld [vmem:[#allocation2 + $0x10] sm:$0xff]
        %v165 = vld [vmem:[#allocation2 + $0x18] sm:$0xff]
        %v166 = vld [vmem:[#allocation2 + $0x20] sm:$0xff]
        %v167 = vld [vmem:[#allocation2 + $0x28] sm:$0xff]
        %v168 = vld [vmem:[#allocation2 + $0x30] sm:$0xff]
        %v169 = vld [vmem:[#allocation2 + $0x38] sm:$0xff]
        %v170 = vld [vmem:[#allocation2 + $0x40] sm:$0xff]
        %v171 = vld [vmem:[#allocation2 + $0x48] sm:$0xff]
        %v172 = vld [vmem:[#allocation2 + $0x50] sm:$0xff]
        %v173 = vld [vmem:[#allocation2 + $0x58] sm:$0xff]
        %v174 = vld [vmem:[#allocation2 + $0x60] sm:$0xff]
        %v175 = vld [vmem:[#allocation2 + $0x68] sm:$0xff]
        %v176 = vld [vmem:[#allocation2 + $0x70] sm:$0xff]
        %v177 = vld [vmem:[#allocation2 + $0x78] sm:$0xff]
        %v178 = vld [vmem:[%s160] sm:$0xff]
        %v179 = vld [vmem:[%s160 + $0x8] sm:$0xff]
        %v180 = vld [vmem:[%s160 + $0x10] sm:$0xff]
        %v181 = vld [vmem:[%s160 + $0x18] sm:$0xff]
        %v182 = vld [vmem:[%s160 + $0x20] sm:$0xff]
        %v183 = vld [vmem:[%s160 + $0x28] sm:$0xff]
        %v184 = vld [vmem:[%s160 + $0x30] sm:$0xff]
        %v185 = vld [vmem:[%s160 + $0x38] sm:$0xff]
        %v186 = vld [vmem:[%s160 + $0x40] sm:$0xff]
        %v187 = vld [vmem:[%s160 + $0x48] sm:$0xff]
        %v188 = vld [vmem:[%s160 + $0x50] sm:$0xff]
        %v189 = vld [vmem:[%s160 + $0x58] sm:$0xff]
        %v190 = vld [vmem:[%s160 + $0x60] sm:$0xff]
        %v191 = vld [vmem:[%s160 + $0x68] sm:$0xff]
        %v192 = vld [vmem:[%s160 + $0x70] sm:$0xff]
        %v193 = vld [vmem:[%s160 + $0x78] sm:$0xff]
        %v194 = vld [vmem:[%s160 + $0x80] sm:$0xff]
        %v195 = vld [vmem:[%s160 + $0x88] sm:$0xff]
        %v196 = vld [vmem:[%s160 + $0x90] sm:$0xff]
        %v197 = vld [vmem:[%s160 + $0x98] sm:$0xff]
        %v198 = vld [vmem:[%s160 + $0xa0] sm:$0xff]
        %v199 = vld [vmem:[%s160 + $0xa8] sm:$0xff]
        %v200 = vld [vmem:[%s160 + $0xb0] sm:$0xff]
        %v201 = vld [vmem:[%s160 + $0xb8] sm:$0xff]
        %v202 = vld [vmem:[%s160 + $0xc0] sm:$0xff]
        %v203 = vld [vmem:[%s160 + $0xc8] sm:$0xff]
        %v204 = vld [vmem:[%s160 + $0xd0] sm:$0xff]
        %v205 = vld [vmem:[%s160 + $0xd8] sm:$0xff]
        %v206 = vld [vmem:[%s160 + $0xe0] sm:$0xff]
        %v207 = vld [vmem:[%s160 + $0xe8] sm:$0xff]
        %v208 = vld [vmem:[%s160 + $0xf0] sm:$0xff]
        %v209 = vld [vmem:[%s160 + $0xf8] sm:$0xff]
        %211 = vset.pattern.permute.xlu0 0
        %212 = vperm.xlu0 %211, %v178
        %v213 = vpop.permute.xlu0 %212
        %216 = vset.pattern.permute.xlu0 0
        %217 = vperm.xlu0 %216, %v179
        %v218 = vpop.permute.xlu0 %217
        %221 = vset.pattern.permute.xlu0 0
        %222 = vperm.xlu0 %221, %v180
        %v223 = vpop.permute.xlu0 %222
        %226 = vset.pattern.permute.xlu0 0
        %227 = vperm.xlu0 %226, %v181
        %v228 = vpop.permute.xlu0 %227
        %231 = vset.pattern.permute.xlu0 0
        %232 = vperm.xlu0 %231, %v182
        %v233 = vpop.permute.xlu0 %232
        %236 = vset.pattern.permute.xlu0 0
        %237 = vperm.xlu0 %236, %v183
        %v238 = vpop.permute.xlu0 %237
        %241 = vset.pattern.permute.xlu0 0
        %242 = vperm.xlu0 %241, %v184
        %v243 = vpop.permute.xlu0 %242
        %246 = vset.pattern.permute.xlu0 0
        %247 = vperm.xlu0 %246, %v185
        %v248 = vpop.permute.xlu0 %247
        %251 = vset.pattern.permute.xlu0 0
        %252 = vperm.xlu0 %251, %v186
        %v253 = vpop.permute.xlu0 %252
        %256 = vset.pattern.permute.xlu0 0
        %257 = vperm.xlu0 %256, %v187
        %v258 = vpop.permute.xlu0 %257
        %261 = vset.pattern.permute.xlu0 0
        %262 = vperm.xlu0 %261, %v188
        %v263 = vpop.permute.xlu0 %262
        %266 = vset.pattern.permute.xlu0 0
        %267 = vperm.xlu0 %266, %v189
        %v268 = vpop.permute.xlu0 %267
        %271 = vset.pattern.permute.xlu0 0
        %272 = vperm.xlu0 %271, %v190
        %v273 = vpop.permute.xlu0 %272
        %276 = vset.pattern.permute.xlu0 0
        %277 = vperm.xlu0 %276, %v191
        %v278 = vpop.permute.xlu0 %277
        %281 = vset.pattern.permute.xlu0 0
        %282 = vperm.xlu0 %281, %v192
        %v283 = vpop.permute.xlu0 %282
        %286 = vset.pattern.permute.xlu0 0
        %287 = vperm.xlu0 %286, %v193
        %v288 = vpop.permute.xlu0 %287
        %291 = vset.pattern.permute.xlu0 0
        %292 = vperm.xlu0 %291, %v194
        %v293 = vpop.permute.xlu0 %292
        %296 = vset.pattern.permute.xlu0 0
        %297 = vperm.xlu0 %296, %v195
        %v298 = vpop.permute.xlu0 %297
        %301 = vset.pattern.permute.xlu0 0
        %302 = vperm.xlu0 %301, %v196
        %v303 = vpop.permute.xlu0 %302
        %306 = vset.pattern.permute.xlu0 0
        %307 = vperm.xlu0 %306, %v197
        %v308 = vpop.permute.xlu0 %307
        %311 = vset.pattern.permute.xlu0 0
        %312 = vperm.xlu0 %311, %v198
        %v313 = vpop.permute.xlu0 %312
        %316 = vset.pattern.permute.xlu0 0
        %317 = vperm.xlu0 %316, %v199
        %v318 = vpop.permute.xlu0 %317
        %321 = vset.pattern.permute.xlu0 0
        %322 = vperm.xlu0 %321, %v200
        %v323 = vpop.permute.xlu0 %322
        %326 = vset.pattern.permute.xlu0 0
        %327 = vperm.xlu0 %326, %v201
        %v328 = vpop.permute.xlu0 %327
        %331 = vset.pattern.permute.xlu0 0
        %332 = vperm.xlu0 %331, %v202
        %v333 = vpop.permute.xlu0 %332
        %336 = vset.pattern.permute.xlu0 0
        %337 = vperm.xlu0 %336, %v203
        %v338 = vpop.permute.xlu0 %337
        %341 = vset.pattern.permute.xlu0 0
        %342 = vperm.xlu0 %341, %v204
        %v343 = vpop.permute.xlu0 %342
        %346 = vset.pattern.permute.xlu0 0
        %347 = vperm.xlu0 %346, %v205
        %v348 = vpop.permute.xlu0 %347
        %351 = vset.pattern.permute.xlu0 0
        %352 = vperm.xlu0 %351, %v206
        %v353 = vpop.permute.xlu0 %352
        %356 = vset.pattern.permute.xlu0 0
        %357 = vperm.xlu0 %356, %v207
        %v358 = vpop.permute.xlu0 %357
        %361 = vset.pattern.permute.xlu0 0
        %362 = vperm.xlu0 %361, %v208
        %v363 = vpop.permute.xlu0 %362
        %366 = vset.pattern.permute.xlu0 0
        %367 = vperm.xlu0 %366, %v209
        %v368 = vpop.permute.xlu0 %367
        %v370 = vmul.f32 %v162, %v213
        %v371 = vmul.f32 %v163, %v218
        %v372 = vmul.f32 %v164, %v223
        %v373 = vmul.f32 %v165, %v228
        %v374 = vmul.f32 %v166, %v233
        %v375 = vmul.f32 %v167, %v238
        %v376 = vmul.f32 %v168, %v243
        %v377 = vmul.f32 %v169, %v248
        %v378 = vmul.f32 %v170, %v213
        %v379 = vmul.f32 %v171, %v218
        %v380 = vmul.f32 %v172, %v223
        %v381 = vmul.f32 %v173, %v228
        %v382 = vmul.f32 %v174, %v233
        %v383 = vmul.f32 %v175, %v238
        %v384 = vmul.f32 %v176, %v243
        %v385 = vmul.f32 %v177, %v248
        %v386 = vmul.f32 %v162, %v253
        %v387 = vmul.f32 %v163, %v258
        %v388 = vmul.f32 %v164, %v263
        %v389 = vmul.f32 %v165, %v268
        %v390 = vmul.f32 %v166, %v273
        %v391 = vmul.f32 %v167, %v278
        %v392 = vmul.f32 %v168, %v283
        %v393 = vmul.f32 %v169, %v288
        %v394 = vmul.f32 %v170, %v253
        %v395 = vmul.f32 %v171, %v258
        %v396 = vmul.f32 %v172, %v263
        %v397 = vmul.f32 %v173, %v268
        %v398 = vmul.f32 %v174, %v273
        %v399 = vmul.f32 %v175, %v278
        %v400 = vmul.f32 %v176, %v283
        %v401 = vmul.f32 %v177, %v288
        %v402 = vmul.f32 %v162, %v293
        %v403 = vmul.f32 %v163, %v298
        %v404 = vmul.f32 %v164, %v303
        %v405 = vmul.f32 %v165, %v308
        %v406 = vmul.f32 %v166, %v313
        %v407 = vmul.f32 %v167, %v318
        %v408 = vmul.f32 %v168, %v323
        %v409 = vmul.f32 %v169, %v328
        %v410 = vmul.f32 %v170, %v293
        %v411 = vmul.f32 %v171, %v298
        %v412 = vmul.f32 %v172, %v303
        %v413 = vmul.f32 %v173, %v308
        %v414 = vmul.f32 %v174, %v313
        %v415 = vmul.f32 %v175, %v318
        %v416 = vmul.f32 %v176, %v323
        %v417 = vmul.f32 %v177, %v328
        %v418 = vmul.f32 %v162, %v333
        %v419 = vmul.f32 %v163, %v338
        %v420 = vmul.f32 %v164, %v343
        %v421 = vmul.f32 %v165, %v348
        %v422 = vmul.f32 %v166, %v353
        %v423 = vmul.f32 %v167, %v358
        %v424 = vmul.f32 %v168, %v363
        %v425 = vmul.f32 %v169, %v368
        %v426 = vmul.f32 %v170, %v333
        %v427 = vmul.f32 %v171, %v338
        %v428 = vmul.f32 %v172, %v343
        %v429 = vmul.f32 %v173, %v348
        %v430 = vmul.f32 %v174, %v353
        %v431 = vmul.f32 %v175, %v358
        %v432 = vmul.f32 %v176, %v363
        %v433 = vmul.f32 %v177, %v368
        %s434 = scalar_lea.vmem [#allocation2], 128
        %v435 = vld [vmem:[%s434] sm:$0xff]
        %v436 = vld [vmem:[%s434 + $0x8] sm:$0xff]
        %v437 = vld [vmem:[%s434 + $0x10] sm:$0xff]
        %v438 = vld [vmem:[%s434 + $0x18] sm:$0xff]
        %v439 = vld [vmem:[%s434 + $0x20] sm:$0xff]
        %v440 = vld [vmem:[%s434 + $0x28] sm:$0xff]
        %v441 = vld [vmem:[%s434 + $0x30] sm:$0xff]
        %v442 = vld [vmem:[%s434 + $0x38] sm:$0xff]
        %v443 = vld [vmem:[%s434 + $0x40] sm:$0xff]
        %v444 = vld [vmem:[%s434 + $0x48] sm:$0xff]
        %v445 = vld [vmem:[%s434 + $0x50] sm:$0xff]
        %v446 = vld [vmem:[%s434 + $0x58] sm:$0xff]
        %v447 = vld [vmem:[%s434 + $0x60] sm:$0xff]
        %v448 = vld [vmem:[%s434 + $0x68] sm:$0xff]
        %v449 = vld [vmem:[%s434 + $0x70] sm:$0xff]
        %v450 = vld [vmem:[%s434 + $0x78] sm:$0xff]
        %451 = vset.pattern.permute.xlu0 1
        %452 = vperm.xlu0 %451, %v178
        %v453 = vpop.permute.xlu0 %452
        %455 = vset.pattern.permute.xlu0 1
        %456 = vperm.xlu0 %455, %v179
        %v457 = vpop.permute.xlu0 %456
        %459 = vset.pattern.permute.xlu0 1
        %460 = vperm.xlu0 %459, %v180
        %v461 = vpop.permute.xlu0 %460
        %463 = vset.pattern.permute.xlu0 1
        %464 = vperm.xlu0 %463, %v181
        %v465 = vpop.permute.xlu0 %464
        %467 = vset.pattern.permute.xlu0 1
        %468 = vperm.xlu0 %467, %v182
        %v469 = vpop.permute.xlu0 %468
        %471 = vset.pattern.permute.xlu0 1
        %472 = vperm.xlu0 %471, %v183
        %v473 = vpop.permute.xlu0 %472
        %475 = vset.pattern.permute.xlu0 1
        %476 = vperm.xlu0 %475, %v184
        %v477 = vpop.permute.xlu0 %476
        %479 = vset.pattern.permute.xlu0 1
        %480 = vperm.xlu0 %479, %v185
        %v481 = vpop.permute.xlu0 %480
        %483 = vset.pattern.permute.xlu0 1
        %484 = vperm.xlu0 %483, %v186
        %v485 = vpop.permute.xlu0 %484
        %487 = vset.pattern.permute.xlu0 1
        %488 = vperm.xlu0 %487, %v187
        %v489 = vpop.permute.xlu0 %488
        %491 = vset.pattern.permute.xlu0 1
        %492 = vperm.xlu0 %491, %v188
        %v493 = vpop.permute.xlu0 %492
        %495 = vset.pattern.permute.xlu0 1
        %496 = vperm.xlu0 %495, %v189
        %v497 = vpop.permute.xlu0 %496
        %499 = vset.pattern.permute.xlu0 1
        %500 = vperm.xlu0 %499, %v190
        %v501 = vpop.permute.xlu0 %500
        %503 = vset.pattern.permute.xlu0 1
        %504 = vperm.xlu0 %503, %v191
        %v505 = vpop.permute.xlu0 %504
        %507 = vset.pattern.permute.xlu0 1
        %508 = vperm.xlu0 %507, %v192
        %v509 = vpop.permute.xlu0 %508
        %511 = vset.pattern.permute.xlu0 1
        %512 = vperm.xlu0 %511, %v193
        %v513 = vpop.permute.xlu0 %512
        %515 = vset.pattern.permute.xlu0 1
        %516 = vperm.xlu0 %515, %v194
        %v517 = vpop.permute.xlu0 %516
        %519 = vset.pattern.permute.xlu0 1
        %520 = vperm.xlu0 %519, %v195
        %v521 = vpop.permute.xlu0 %520
        %523 = vset.pattern.permute.xlu0 1
        %524 = vperm.xlu0 %523, %v196
        %v525 = vpop.permute.xlu0 %524
        %527 = vset.pattern.permute.xlu0 1
        %528 = vperm.xlu0 %527, %v197
        %v529 = vpop.permute.xlu0 %528
        %531 = vset.pattern.permute.xlu0 1
        %532 = vperm.xlu0 %531, %v198
        %v533 = vpop.permute.xlu0 %532
        %535 = vset.pattern.permute.xlu0 1
        %536 = vperm.xlu0 %535, %v199
        %v537 = vpop.permute.xlu0 %536
        %539 = vset.pattern.permute.xlu0 1
        %540 = vperm.xlu0 %539, %v200
        %v541 = vpop.permute.xlu0 %540
        %543 = vset.pattern.permute.xlu0 1
        %544 = vperm.xlu0 %543, %v201
        %v545 = vpop.permute.xlu0 %544
        %547 = vset.pattern.permute.xlu0 1
        %548 = vperm.xlu0 %547, %v202
        %v549 = vpop.permute.xlu0 %548
        %551 = vset.pattern.permute.xlu0 1
        %552 = vperm.xlu0 %551, %v203
        %v553 = vpop.permute.xlu0 %552
        %555 = vset.pattern.permute.xlu0 1
        %556 = vperm.xlu0 %555, %v204
        %v557 = vpop.permute.xlu0 %556
        %559 = vset.pattern.permute.xlu0 1
        %560 = vperm.xlu0 %559, %v205
        %v561 = vpop.permute.xlu0 %560
        %563 = vset.pattern.permute.xlu0 1
        %564 = vperm.xlu0 %563, %v206
        %v565 = vpop.permute.xlu0 %564
        %567 = vset.pattern.permute.xlu0 1
        %568 = vperm.xlu0 %567, %v207
        %v569 = vpop.permute.xlu0 %568
        %571 = vset.pattern.permute.xlu0 1
        %572 = vperm.xlu0 %571, %v208
        %v573 = vpop.permute.xlu0 %572
        %575 = vset.pattern.permute.xlu0 1
        %576 = vperm.xlu0 %575, %v209
        %v577 = vpop.permute.xlu0 %576
        %v579 = vmul.f32 %v435, %v453
        %v580 = vmul.f32 %v436, %v457
        %v581 = vmul.f32 %v437, %v461
        %v582 = vmul.f32 %v438, %v465
        %v583 = vmul.f32 %v439, %v469
        %v584 = vmul.f32 %v440, %v473
        %v585 = vmul.f32 %v441, %v477
        %v586 = vmul.f32 %v442, %v481
        %v587 = vmul.f32 %v443, %v453
        %v588 = vmul.f32 %v444, %v457
        %v589 = vmul.f32 %v445, %v461
        %v590 = vmul.f32 %v446, %v465
        %v591 = vmul.f32 %v447, %v469
        %v592 = vmul.f32 %v448, %v473
        %v593 = vmul.f32 %v449, %v477
        %v594 = vmul.f32 %v450, %v481
        %v595 = vmul.f32 %v435, %v485
        %v596 = vmul.f32 %v436, %v489
        %v597 = vmul.f32 %v437, %v493
        %v598 = vmul.f32 %v438, %v497
        %v599 = vmul.f32 %v439, %v501
        %v600 = vmul.f32 %v440, %v505
        %v601 = vmul.f32 %v441, %v509
        %v602 = vmul.f32 %v442, %v513
        %v603 = vmul.f32 %v443, %v485
        %v604 = vmul.f32 %v444, %v489
        %v605 = vmul.f32 %v445, %v493
        %v606 = vmul.f32 %v446, %v497
        %v607 = vmul.f32 %v447, %v501
        %v608 = vmul.f32 %v448, %v505
        %v609 = vmul.f32 %v449, %v509
        %v610 = vmul.f32 %v450, %v513
        %v611 = vmul.f32 %v435, %v517
        %v612 = vmul.f32 %v436, %v521
        %v613 = vmul.f32 %v437, %v525
        %v614 = vmul.f32 %v438, %v529
        %v615 = vmul.f32 %v439, %v533
        %v616 = vmul.f32 %v440, %v537
        %v617 = vmul.f32 %v441, %v541
        %v618 = vmul.f32 %v442, %v545
        %v619 = vmul.f32 %v443, %v517
        %v620 = vmul.f32 %v444, %v521
        %v621 = vmul.f32 %v445, %v525
        %v622 = vmul.f32 %v446, %v529
        %v623 = vmul.f32 %v447, %v533
        %v624 = vmul.f32 %v448, %v537
        %v625 = vmul.f32 %v449, %v541
        %v626 = vmul.f32 %v450, %v545
        %v627 = vmul.f32 %v435, %v549
        %v628 = vmul.f32 %v436, %v553
        %v629 = vmul.f32 %v437, %v557
        %v630 = vmul.f32 %v438, %v561
        %v631 = vmul.f32 %v439, %v565
        %v632 = vmul.f32 %v440, %v569
        %v633 = vmul.f32 %v441, %v573
        %v634 = vmul.f32 %v442, %v577
        %v635 = vmul.f32 %v443, %v549
        %v636 = vmul.f32 %v444, %v553
        %v637 = vmul.f32 %v445, %v557
        %v638 = vmul.f32 %v446, %v561
        %v639 = vmul.f32 %v447, %v565
        %v640 = vmul.f32 %v448, %v569
        %v641 = vmul.f32 %v449, %v573
        %v642 = vmul.f32 %v450, %v577
        %v643 = vadd.f32 %v370, %v579
        %v644 = vadd.f32 %v371, %v580
        %v645 = vadd.f32 %v372, %v581
        %v646 = vadd.f32 %v373, %v582
        %v647 = vadd.f32 %v374, %v583
        %v648 = vadd.f32 %v375, %v584
        %v649 = vadd.f32 %v376, %v585
        %v650 = vadd.f32 %v377, %v586
        %v651 = vadd.f32 %v378, %v587
        %v652 = vadd.f32 %v379, %v588
        %v653 = vadd.f32 %v380, %v589
        %v654 = vadd.f32 %v381, %v590
        %v655 = vadd.f32 %v382, %v591
        %v656 = vadd.f32 %v383, %v592
        %v657 = vadd.f32 %v384, %v593
        %v658 = vadd.f32 %v385, %v594
        %v659 = vadd.f32 %v386, %v595
        %v660 = vadd.f32 %v387, %v596
        %v661 = vadd.f32 %v388, %v597
        %v662 = vadd.f32 %v389, %v598
        %v663 = vadd.f32 %v390, %v599
        %v664 = vadd.f32 %v391, %v600
        %v665 = vadd.f32 %v392, %v601
        %v666 = vadd.f32 %v393, %v602
        %v667 = vadd.f32 %v394, %v603
        %v668 = vadd.f32 %v395, %v604
        %v669 = vadd.f32 %v396, %v605
        %v670 = vadd.f32 %v397, %v606
        %v671 = vadd.f32 %v398, %v607
        %v672 = vadd.f32 %v399, %v608
        %v673 = vadd.f32 %v400, %v609
        %v674 = vadd.f32 %v401, %v610
        %v675 = vadd.f32 %v402, %v611
        %v676 = vadd.f32 %v403, %v612
        %v677 = vadd.f32 %v404, %v613
        %v678 = vadd.f32 %v405, %v614
        %v679 = vadd.f32 %v406, %v615
        %v680 = vadd.f32 %v407, %v616
        %v681 = vadd.f32 %v408, %v617
        %v682 = vadd.f32 %v409, %v618
        %v683 = vadd.f32 %v410, %v619
        %v684 = vadd.f32 %v411, %v620
        %v685 = vadd.f32 %v412, %v621
        %v686 = vadd.f32 %v413, %v622
        %v687 = vadd.f32 %v414, %v623
        %v688 = vadd.f32 %v415, %v624
        %v689 = vadd.f32 %v416, %v625
        %v690 = vadd.f32 %v417, %v626
        %v691 = vadd.f32 %v418, %v627
        %v692 = vadd.f32 %v419, %v628
        %v693 = vadd.f32 %v420, %v629
        %v694 = vadd.f32 %v421, %v630
        %v695 = vadd.f32 %v422, %v631
        %v696 = vadd.f32 %v423, %v632
        %v697 = vadd.f32 %v424, %v633
        %v698 = vadd.f32 %v425, %v634
        %v699 = vadd.f32 %v426, %v635
        %v700 = vadd.f32 %v427, %v636
        %v701 = vadd.f32 %v428, %v637
        %v702 = vadd.f32 %v429, %v638
        %v703 = vadd.f32 %v430, %v639
        %v704 = vadd.f32 %v431, %v640
        %v705 = vadd.f32 %v432, %v641
        %v706 = vadd.f32 %v433, %v642
        %s707 = scalar_lea.vmem [#allocation2], 256
        %v708 = vld [vmem:[%s707] sm:$0xff]
        %v709 = vld [vmem:[%s707 + $0x8] sm:$0xff]
        %v710 = vld [vmem:[%s707 + $0x10] sm:$0xff]
        %v711 = vld [vmem:[%s707 + $0x18] sm:$0xff]
        %v712 = vld [vmem:[%s707 + $0x20] sm:$0xff]
        %v713 = vld [vmem:[%s707 + $0x28] sm:$0xff]
        %v714 = vld [vmem:[%s707 + $0x30] sm:$0xff]
        %v715 = vld [vmem:[%s707 + $0x38] sm:$0xff]
        %v716 = vld [vmem:[%s707 + $0x40] sm:$0xff]
        %v717 = vld [vmem:[%s707 + $0x48] sm:$0xff]
        %v718 = vld [vmem:[%s707 + $0x50] sm:$0xff]
        %v719 = vld [vmem:[%s707 + $0x58] sm:$0xff]
        %v720 = vld [vmem:[%s707 + $0x60] sm:$0xff]
        %v721 = vld [vmem:[%s707 + $0x68] sm:$0xff]
        %v722 = vld [vmem:[%s707 + $0x70] sm:$0xff]
        %v723 = vld [vmem:[%s707 + $0x78] sm:$0xff]
        %724 = vset.pattern.permute.xlu0 2
        %725 = vperm.xlu0 %724, %v178
        %v726 = vpop.permute.xlu0 %725
        %728 = vset.pattern.permute.xlu0 2
        %729 = vperm.xlu0 %728, %v179
        %v730 = vpop.permute.xlu0 %729
        %732 = vset.pattern.permute.xlu0 2
        %733 = vperm.xlu0 %732, %v180
        %v734 = vpop.permute.xlu0 %733
        %736 = vset.pattern.permute.xlu0 2
        %737 = vperm.xlu0 %736, %v181
        %v738 = vpop.permute.xlu0 %737
        %740 = vset.pattern.permute.xlu0 2
        %741 = vperm.xlu0 %740, %v182
        %v742 = vpop.permute.xlu0 %741
        %744 = vset.pattern.permute.xlu0 2
        %745 = vperm.xlu0 %744, %v183
        %v746 = vpop.permute.xlu0 %745
        %748 = vset.pattern.permute.xlu0 2
        %749 = vperm.xlu0 %748, %v184
        %v750 = vpop.permute.xlu0 %749
        %752 = vset.pattern.permute.xlu0 2
        %753 = vperm.xlu0 %752, %v185
        %v754 = vpop.permute.xlu0 %753
        %756 = vset.pattern.permute.xlu0 2
        %757 = vperm.xlu0 %756, %v186
        %v758 = vpop.permute.xlu0 %757
        %760 = vset.pattern.permute.xlu0 2
        %761 = vperm.xlu0 %760, %v187
        %v762 = vpop.permute.xlu0 %761
        %764 = vset.pattern.permute.xlu0 2
        %765 = vperm.xlu0 %764, %v188
        %v766 = vpop.permute.xlu0 %765
        %768 = vset.pattern.permute.xlu0 2
        %769 = vperm.xlu0 %768, %v189
        %v770 = vpop.permute.xlu0 %769
        %772 = vset.pattern.permute.xlu0 2
        %773 = vperm.xlu0 %772, %v190
        %v774 = vpop.permute.xlu0 %773
        %776 = vset.pattern.permute.xlu0 2
        %777 = vperm.xlu0 %776, %v191
        %v778 = vpop.permute.xlu0 %777
        %780 = vset.pattern.permute.xlu0 2
        %781 = vperm.xlu0 %780, %v192
        %v782 = vpop.permute.xlu0 %781
        %784 = vset.pattern.permute.xlu0 2
        %785 = vperm.xlu0 %784, %v193
        %v786 = vpop.permute.xlu0 %785
        %788 = vset.pattern.permute.xlu0 2
        %789 = vperm.xlu0 %788, %v194
        %v790 = vpop.permute.xlu0 %789
        %792 = vset.pattern.permute.xlu0 2
        %793 = vperm.xlu0 %792, %v195
        %v794 = vpop.permute.xlu0 %793
        %796 = vset.pattern.permute.xlu0 2
        %797 = vperm.xlu0 %796, %v196
        %v798 = vpop.permute.xlu0 %797
        %800 = vset.pattern.permute.xlu0 2
        %801 = vperm.xlu0 %800, %v197
        %v802 = vpop.permute.xlu0 %801
        %804 = vset.pattern.permute.xlu0 2
        %805 = vperm.xlu0 %804, %v198
        %v806 = vpop.permute.xlu0 %805
        %808 = vset.pattern.permute.xlu0 2
        %809 = vperm.xlu0 %808, %v199
        %v810 = vpop.permute.xlu0 %809
        %812 = vset.pattern.permute.xlu0 2
        %813 = vperm.xlu0 %812, %v200
        %v814 = vpop.permute.xlu0 %813
        %816 = vset.pattern.permute.xlu0 2
        %817 = vperm.xlu0 %816, %v201
        %v818 = vpop.permute.xlu0 %817
        %820 = vset.pattern.permute.xlu0 2
        %821 = vperm.xlu0 %820, %v202
        %v822 = vpop.permute.xlu0 %821
        %824 = vset.pattern.permute.xlu0 2
        %825 = vperm.xlu0 %824, %v203
        %v826 = vpop.permute.xlu0 %825
        %828 = vset.pattern.permute.xlu0 2
        %829 = vperm.xlu0 %828, %v204
        %v830 = vpop.permute.xlu0 %829
        %832 = vset.pattern.permute.xlu0 2
        %833 = vperm.xlu0 %832, %v205
        %v834 = vpop.permute.xlu0 %833
        %836 = vset.pattern.permute.xlu0 2
        %837 = vperm.xlu0 %836, %v206
        %v838 = vpop.permute.xlu0 %837
        %840 = vset.pattern.permute.xlu0 2
        %841 = vperm.xlu0 %840, %v207
        %v842 = vpop.permute.xlu0 %841
        %844 = vset.pattern.permute.xlu0 2
        %845 = vperm.xlu0 %844, %v208
        %v846 = vpop.permute.xlu0 %845
        %848 = vset.pattern.permute.xlu0 2
        %849 = vperm.xlu0 %848, %v209
        %v850 = vpop.permute.xlu0 %849
        %v852 = vmul.f32 %v708, %v726
        %v853 = vmul.f32 %v709, %v730
        %v854 = vmul.f32 %v710, %v734
        %v855 = vmul.f32 %v711, %v738
        %v856 = vmul.f32 %v712, %v742
        %v857 = vmul.f32 %v713, %v746
        %v858 = vmul.f32 %v714, %v750
        %v859 = vmul.f32 %v715, %v754
        %v860 = vmul.f32 %v716, %v726
        %v861 = vmul.f32 %v717, %v730
        %v862 = vmul.f32 %v718, %v734
        %v863 = vmul.f32 %v719, %v738
        %v864 = vmul.f32 %v720, %v742
        %v865 = vmul.f32 %v721, %v746
        %v866 = vmul.f32 %v722, %v750
        %v867 = vmul.f32 %v723, %v754
        %v868 = vmul.f32 %v708, %v758
        %v869 = vmul.f32 %v709, %v762
        %v870 = vmul.f32 %v710, %v766
        %v871 = vmul.f32 %v711, %v770
        %v872 = vmul.f32 %v712, %v774
        %v873 = vmul.f32 %v713, %v778
        %v874 = vmul.f32 %v714, %v782
        %v875 = vmul.f32 %v715, %v786
        %v876 = vmul.f32 %v716, %v758
        %v877 = vmul.f32 %v717, %v762
        %v878 = vmul.f32 %v718, %v766
        %v879 = vmul.f32 %v719, %v770
        %v880 = vmul.f32 %v720, %v774
        %v881 = vmul.f32 %v721, %v778
        %v882 = vmul.f32 %v722, %v782
        %v883 = vmul.f32 %v723, %v786
        %v884 = vmul.f32 %v708, %v790
        %v885 = vmul.f32 %v709, %v794
        %v886 = vmul.f32 %v710, %v798
        %v887 = vmul.f32 %v711, %v802
        %v888 = vmul.f32 %v712, %v806
        %v889 = vmul.f32 %v713, %v810
        %v890 = vmul.f32 %v714, %v814
        %v891 = vmul.f32 %v715, %v818
        %v892 = vmul.f32 %v716, %v790
        %v893 = vmul.f32 %v717, %v794
        %v894 = vmul.f32 %v718, %v798
        %v895 = vmul.f32 %v719, %v802
        %v896 = vmul.f32 %v720, %v806
        %v897 = vmul.f32 %v721, %v810
        %v898 = vmul.f32 %v722, %v814
        %v899 = vmul.f32 %v723, %v818
        %v900 = vmul.f32 %v708, %v822
        %v901 = vmul.f32 %v709, %v826
        %v902 = vmul.f32 %v710, %v830
        %v903 = vmul.f32 %v711, %v834
        %v904 = vmul.f32 %v712, %v838
        %v905 = vmul.f32 %v713, %v842
        %v906 = vmul.f32 %v714, %v846
        %v907 = vmul.f32 %v715, %v850
        %v908 = vmul.f32 %v716, %v822
        %v909 = vmul.f32 %v717, %v826
        %v910 = vmul.f32 %v718, %v830
        %v911 = vmul.f32 %v719, %v834
        %v912 = vmul.f32 %v720, %v838
        %v913 = vmul.f32 %v721, %v842
        %v914 = vmul.f32 %v722, %v846
        %v915 = vmul.f32 %v723, %v850
        %v916 = vadd.f32 %v643, %v852
        %v917 = vadd.f32 %v644, %v853
        %v918 = vadd.f32 %v645, %v854
        %v919 = vadd.f32 %v646, %v855
        %v920 = vadd.f32 %v647, %v856
        %v921 = vadd.f32 %v648, %v857
        %v922 = vadd.f32 %v649, %v858
        %v923 = vadd.f32 %v650, %v859
        %v924 = vadd.f32 %v651, %v860
        %v925 = vadd.f32 %v652, %v861
        %v926 = vadd.f32 %v653, %v862
        %v927 = vadd.f32 %v654, %v863
        %v928 = vadd.f32 %v655, %v864
        %v929 = vadd.f32 %v656, %v865
        %v930 = vadd.f32 %v657, %v866
        %v931 = vadd.f32 %v658, %v867
        %v932 = vadd.f32 %v659, %v868
        %v933 = vadd.f32 %v660, %v869
        %v934 = vadd.f32 %v661, %v870
        %v935 = vadd.f32 %v662, %v871
        %v936 = vadd.f32 %v663, %v872
        %v937 = vadd.f32 %v664, %v873
        %v938 = vadd.f32 %v665, %v874
        %v939 = vadd.f32 %v666, %v875
        %v940 = vadd.f32 %v667, %v876
        %v941 = vadd.f32 %v668, %v877
        %v942 = vadd.f32 %v669, %v878
        %v943 = vadd.f32 %v670, %v879
        %v944 = vadd.f32 %v671, %v880
        %v945 = vadd.f32 %v672, %v881
        %v946 = vadd.f32 %v673, %v882
        %v947 = vadd.f32 %v674, %v883
        %v948 = vadd.f32 %v675, %v884
        %v949 = vadd.f32 %v676, %v885
        %v950 = vadd.f32 %v677, %v886
        %v951 = vadd.f32 %v678, %v887
        %v952 = vadd.f32 %v679, %v888
        %v953 = vadd.f32 %v680, %v889
        %v954 = vadd.f32 %v681, %v890
        %v955 = vadd.f32 %v682, %v891
        %v956 = vadd.f32 %v683, %v892
        %v957 = vadd.f32 %v684, %v893
        %v958 = vadd.f32 %v685, %v894
        %v959 = vadd.f32 %v686, %v895
        %v960 = vadd.f32 %v687, %v896
        %v961 = vadd.f32 %v688, %v897
        %v962 = vadd.f32 %v689, %v898
        %v963 = vadd.f32 %v690, %v899
        %v964 = vadd.f32 %v691, %v900
        %v965 = vadd.f32 %v692, %v901
        %v966 = vadd.f32 %v693, %v902
        %v967 = vadd.f32 %v694, %v903
        %v968 = vadd.f32 %v695, %v904
        %v969 = vadd.f32 %v696, %v905
        %v970 = vadd.f32 %v697, %v906
        %v971 = vadd.f32 %v698, %v907
        %v972 = vadd.f32 %v699, %v908
        %v973 = vadd.f32 %v700, %v909
        %v974 = vadd.f32 %v701, %v910
        %v975 = vadd.f32 %v702, %v911
        %v976 = vadd.f32 %v703, %v912
        %v977 = vadd.f32 %v704, %v913
        %v978 = vadd.f32 %v705, %v914
        %v979 = vadd.f32 %v706, %v915
        %s980 = scalar_lea.vmem [#allocation2], 384
        %v981 = vld [vmem:[%s980] sm:$0xff]
        %v982 = vld [vmem:[%s980 + $0x8] sm:$0xff]
        %v983 = vld [vmem:[%s980 + $0x10] sm:$0xff]
        %v984 = vld [vmem:[%s980 + $0x18] sm:$0xff]
        %v985 = vld [vmem:[%s980 + $0x20] sm:$0xff]
        %v986 = vld [vmem:[%s980 + $0x28] sm:$0xff]
        %v987 = vld [vmem:[%s980 + $0x30] sm:$0xff]
        %v988 = vld [vmem:[%s980 + $0x38] sm:$0xff]
        %v989 = vld [vmem:[%s980 + $0x40] sm:$0xff]
        %v990 = vld [vmem:[%s980 + $0x48] sm:$0xff]
        %v991 = vld [vmem:[%s980 + $0x50] sm:$0xff]
        %v992 = vld [vmem:[%s980 + $0x58] sm:$0xff]
        %v993 = vld [vmem:[%s980 + $0x60] sm:$0xff]
        %v994 = vld [vmem:[%s980 + $0x68] sm:$0xff]
        %v995 = vld [vmem:[%s980 + $0x70] sm:$0xff]
        %v996 = vld [vmem:[%s980 + $0x78] sm:$0xff]
        %997 = vset.pattern.permute.xlu0 3
        %998 = vperm.xlu0 %997, %v178
        %v999 = vpop.permute.xlu0 %998
        %1001 = vset.pattern.permute.xlu0 3
        %1002 = vperm.xlu0 %1001, %v179
        %v1003 = vpop.permute.xlu0 %1002
        %1005 = vset.pattern.permute.xlu0 3
        %1006 = vperm.xlu0 %1005, %v180
        %v1007 = vpop.permute.xlu0 %1006
        %1009 = vset.pattern.permute.xlu0 3
        %1010 = vperm.xlu0 %1009, %v181
        %v1011 = vpop.permute.xlu0 %1010
        %1013 = vset.pattern.permute.xlu0 3
        %1014 = vperm.xlu0 %1013, %v182
        %v1015 = vpop.permute.xlu0 %1014
        %1017 = vset.pattern.permute.xlu0 3
        %1018 = vperm.xlu0 %1017, %v183
        %v1019 = vpop.permute.xlu0 %1018
        %1021 = vset.pattern.permute.xlu0 3
        %1022 = vperm.xlu0 %1021, %v184
        %v1023 = vpop.permute.xlu0 %1022
        %1025 = vset.pattern.permute.xlu0 3
        %1026 = vperm.xlu0 %1025, %v185
        %v1027 = vpop.permute.xlu0 %1026
        %1029 = vset.pattern.permute.xlu0 3
        %1030 = vperm.xlu0 %1029, %v186
        %v1031 = vpop.permute.xlu0 %1030
        %1033 = vset.pattern.permute.xlu0 3
        %1034 = vperm.xlu0 %1033, %v187
        %v1035 = vpop.permute.xlu0 %1034
        %1037 = vset.pattern.permute.xlu0 3
        %1038 = vperm.xlu0 %1037, %v188
        %v1039 = vpop.permute.xlu0 %1038
        %1041 = vset.pattern.permute.xlu0 3
        %1042 = vperm.xlu0 %1041, %v189
        %v1043 = vpop.permute.xlu0 %1042
        %1045 = vset.pattern.permute.xlu0 3
        %1046 = vperm.xlu0 %1045, %v190
        %v1047 = vpop.permute.xlu0 %1046
        %1049 = vset.pattern.permute.xlu0 3
        %1050 = vperm.xlu0 %1049, %v191
        %v1051 = vpop.permute.xlu0 %1050
        %1053 = vset.pattern.permute.xlu0 3
        %1054 = vperm.xlu0 %1053, %v192
        %v1055 = vpop.permute.xlu0 %1054
        %1057 = vset.pattern.permute.xlu0 3
        %1058 = vperm.xlu0 %1057, %v193
        %v1059 = vpop.permute.xlu0 %1058
        %1061 = vset.pattern.permute.xlu0 3
        %1062 = vperm.xlu0 %1061, %v194
        %v1063 = vpop.permute.xlu0 %1062
        %1065 = vset.pattern.permute.xlu0 3
        %1066 = vperm.xlu0 %1065, %v195
        %v1067 = vpop.permute.xlu0 %1066
        %1069 = vset.pattern.permute.xlu0 3
        %1070 = vperm.xlu0 %1069, %v196
        %v1071 = vpop.permute.xlu0 %1070
        %1073 = vset.pattern.permute.xlu0 3
        %1074 = vperm.xlu0 %1073, %v197
        %v1075 = vpop.permute.xlu0 %1074
        %1077 = vset.pattern.permute.xlu0 3
        %1078 = vperm.xlu0 %1077, %v198
        %v1079 = vpop.permute.xlu0 %1078
        %1081 = vset.pattern.permute.xlu0 3
        %1082 = vperm.xlu0 %1081, %v199
        %v1083 = vpop.permute.xlu0 %1082
        %1085 = vset.pattern.permute.xlu0 3
        %1086 = vperm.xlu0 %1085, %v200
        %v1087 = vpop.permute.xlu0 %1086
        %1089 = vset.pattern.permute.xlu0 3
        %1090 = vperm.xlu0 %1089, %v201
        %v1091 = vpop.permute.xlu0 %1090
        %1093 = vset.pattern.permute.xlu0 3
        %1094 = vperm.xlu0 %1093, %v202
        %v1095 = vpop.permute.xlu0 %1094
        %1097 = vset.pattern.permute.xlu0 3
        %1098 = vperm.xlu0 %1097, %v203
        %v1099 = vpop.permute.xlu0 %1098
        %1101 = vset.pattern.permute.xlu0 3
        %1102 = vperm.xlu0 %1101, %v204
        %v1103 = vpop.permute.xlu0 %1102
        %1105 = vset.pattern.permute.xlu0 3
        %1106 = vperm.xlu0 %1105, %v205
        %v1107 = vpop.permute.xlu0 %1106
        %1109 = vset.pattern.permute.xlu0 3
        %1110 = vperm.xlu0 %1109, %v206
        %v1111 = vpop.permute.xlu0 %1110
        %1113 = vset.pattern.permute.xlu0 3
        %1114 = vperm.xlu0 %1113, %v207
        %v1115 = vpop.permute.xlu0 %1114
        %1117 = vset.pattern.permute.xlu0 3
        %1118 = vperm.xlu0 %1117, %v208
        %v1119 = vpop.permute.xlu0 %1118
        %1121 = vset.pattern.permute.xlu0 3
        %1122 = vperm.xlu0 %1121, %v209
        %v1123 = vpop.permute.xlu0 %1122
        %v1125 = vmul.f32 %v981, %v999
        %v1126 = vmul.f32 %v982, %v1003
        %v1127 = vmul.f32 %v983, %v1007
        %v1128 = vmul.f32 %v984, %v1011
        %v1129 = vmul.f32 %v985, %v1015
        %v1130 = vmul.f32 %v986, %v1019
        %v1131 = vmul.f32 %v987, %v1023
        %v1132 = vmul.f32 %v988, %v1027
        %v1133 = vmul.f32 %v989, %v999
        %v1134 = vmul.f32 %v990, %v1003
        %v1135 = vmul.f32 %v991, %v1007
        %v1136 = vmul.f32 %v992, %v1011
        %v1137 = vmul.f32 %v993, %v1015
        %v1138 = vmul.f32 %v994, %v1019
        %v1139 = vmul.f32 %v995, %v1023
        %v1140 = vmul.f32 %v996, %v1027
        %v1141 = vmul.f32 %v981, %v1031
        %v1142 = vmul.f32 %v982, %v1035
        %v1143 = vmul.f32 %v983, %v1039
        %v1144 = vmul.f32 %v984, %v1043
        %v1145 = vmul.f32 %v985, %v1047
        %v1146 = vmul.f32 %v986, %v1051
        %v1147 = vmul.f32 %v987, %v1055
        %v1148 = vmul.f32 %v988, %v1059
        %v1149 = vmul.f32 %v989, %v1031
        %v1150 = vmul.f32 %v990, %v1035
        %v1151 = vmul.f32 %v991, %v1039
        %v1152 = vmul.f32 %v992, %v1043
        %v1153 = vmul.f32 %v993, %v1047
        %v1154 = vmul.f32 %v994, %v1051
        %v1155 = vmul.f32 %v995, %v1055
        %v1156 = vmul.f32 %v996, %v1059
        %v1157 = vmul.f32 %v981, %v1063
        %v1158 = vmul.f32 %v982, %v1067
        %v1159 = vmul.f32 %v983, %v1071
        %v1160 = vmul.f32 %v984, %v1075
        %v1161 = vmul.f32 %v985, %v1079
        %v1162 = vmul.f32 %v986, %v1083
        %v1163 = vmul.f32 %v987, %v1087
        %v1164 = vmul.f32 %v988, %v1091
        %v1165 = vmul.f32 %v989, %v1063
        %v1166 = vmul.f32 %v990, %v1067
        %v1167 = vmul.f32 %v991, %v1071
        %v1168 = vmul.f32 %v992, %v1075
        %v1169 = vmul.f32 %v993, %v1079
        %v1170 = vmul.f32 %v994, %v1083
        %v1171 = vmul.f32 %v995, %v1087
        %v1172 = vmul.f32 %v996, %v1091
        %v1173 = vmul.f32 %v981, %v1095
        %v1174 = vmul.f32 %v982, %v1099
        %v1175 = vmul.f32 %v983, %v1103
        %v1176 = vmul.f32 %v984, %v1107
        %v1177 = vmul.f32 %v985, %v1111
        %v1178 = vmul.f32 %v986, %v1115
        %v1179 = vmul.f32 %v987, %v1119
        %v1180 = vmul.f32 %v988, %v1123
        %v1181 = vmul.f32 %v989, %v1095
        %v1182 = vmul.f32 %v990, %v1099
        %v1183 = vmul.f32 %v991, %v1103
        %v1184 = vmul.f32 %v992, %v1107
        %v1185 = vmul.f32 %v993, %v1111
        %v1186 = vmul.f32 %v994, %v1115
        %v1187 = vmul.f32 %v995, %v1119
        %v1188 = vmul.f32 %v996, %v1123
        %v1189 = vadd.f32 %v916, %v1125
        %v1190 = vadd.f32 %v917, %v1126
        %v1191 = vadd.f32 %v918, %v1127
        %v1192 = vadd.f32 %v919, %v1128
        %v1193 = vadd.f32 %v920, %v1129
        %v1194 = vadd.f32 %v921, %v1130
        %v1195 = vadd.f32 %v922, %v1131
        %v1196 = vadd.f32 %v923, %v1132
        %v1197 = vadd.f32 %v924, %v1133
        %v1198 = vadd.f32 %v925, %v1134
        %v1199 = vadd.f32 %v926, %v1135
        %v1200 = vadd.f32 %v927, %v1136
        %v1201 = vadd.f32 %v928, %v1137
        %v1202 = vadd.f32 %v929, %v1138
        %v1203 = vadd.f32 %v930, %v1139
        %v1204 = vadd.f32 %v931, %v1140
        %v1205 = vadd.f32 %v932, %v1141
        %v1206 = vadd.f32 %v933, %v1142
        %v1207 = vadd.f32 %v934, %v1143
        %v1208 = vadd.f32 %v935, %v1144
        %v1209 = vadd.f32 %v936, %v1145
        %v1210 = vadd.f32 %v937, %v1146
        %v1211 = vadd.f32 %v938, %v1147
        %v1212 = vadd.f32 %v939, %v1148
        %v1213 = vadd.f32 %v940, %v1149
        %v1214 = vadd.f32 %v941, %v1150
        %v1215 = vadd.f32 %v942, %v1151
        %v1216 = vadd.f32 %v943, %v1152
        %v1217 = vadd.f32 %v944, %v1153
        %v1218 = vadd.f32 %v945, %v1154
        %v1219 = vadd.f32 %v946, %v1155
        %v1220 = vadd.f32 %v947, %v1156
        %v1221 = vadd.f32 %v948, %v1157
        %v1222 = vadd.f32 %v949, %v1158
        %v1223 = vadd.f32 %v950, %v1159
        %v1224 = vadd.f32 %v951, %v1160
        %v1225 = vadd.f32 %v952, %v1161
        %v1226 = vadd.f32 %v953, %v1162
        %v1227 = vadd.f32 %v954, %v1163
        %v1228 = vadd.f32 %v955, %v1164
        %v1229 = vadd.f32 %v956, %v1165
        %v1230 = vadd.f32 %v957, %v1166
        %v1231 = vadd.f32 %v958, %v1167
        %v1232 = vadd.f32 %v959, %v1168
        %v1233 = vadd.f32 %v960, %v1169
        %v1234 = vadd.f32 %v961, %v1170
        %v1235 = vadd.f32 %v962, %v1171
        %v1236 = vadd.f32 %v963, %v1172
        %v1237 = vadd.f32 %v964, %v1173
        %v1238 = vadd.f32 %v965, %v1174
        %v1239 = vadd.f32 %v966, %v1175
        %v1240 = vadd.f32 %v967, %v1176
        %v1241 = vadd.f32 %v968, %v1177
        %v1242 = vadd.f32 %v969, %v1178
        %v1243 = vadd.f32 %v970, %v1179
        %v1244 = vadd.f32 %v971, %v1180
        %v1245 = vadd.f32 %v972, %v1181
        %v1246 = vadd.f32 %v973, %v1182
        %v1247 = vadd.f32 %v974, %v1183
        %v1248 = vadd.f32 %v975, %v1184
        %v1249 = vadd.f32 %v976, %v1185
        %v1250 = vadd.f32 %v977, %v1186
        %v1251 = vadd.f32 %v978, %v1187
        %v1252 = vadd.f32 %v979, %v1188
        %s1253 = scalar_lea.vmem [#allocation2], 512
        %v1254 = vld [vmem:[%s1253] sm:$0xff]
        %v1255 = vld [vmem:[%s1253 + $0x8] sm:$0xff]
        %v1256 = vld [vmem:[%s1253 + $0x10] sm:$0xff]
        %v1257 = vld [vmem:[%s1253 + $0x18] sm:$0xff]
        %v1258 = vld [vmem:[%s1253 + $0x20] sm:$0xff]
        %v1259 = vld [vmem:[%s1253 + $0x28] sm:$0xff]
        %v1260 = vld [vmem:[%s1253 + $0x30] sm:$0xff]
        %v1261 = vld [vmem:[%s1253 + $0x38] sm:$0xff]
        %v1262 = vld [vmem:[%s1253 + $0x40] sm:$0xff]
        %v1263 = vld [vmem:[%s1253 + $0x48] sm:$0xff]
        %v1264 = vld [vmem:[%s1253 + $0x50] sm:$0xff]
        %v1265 = vld [vmem:[%s1253 + $0x58] sm:$0xff]
        %v1266 = vld [vmem:[%s1253 + $0x60] sm:$0xff]
        %v1267 = vld [vmem:[%s1253 + $0x68] sm:$0xff]
        %v1268 = vld [vmem:[%s1253 + $0x70] sm:$0xff]
        %v1269 = vld [vmem:[%s1253 + $0x78] sm:$0xff]
        %1270 = vset.pattern.permute.xlu0 4
        %1271 = vperm.xlu0 %1270, %v178
        %v1272 = vpop.permute.xlu0 %1271
        %1274 = vset.pattern.permute.xlu0 4
        %1275 = vperm.xlu0 %1274, %v179
        %v1276 = vpop.permute.xlu0 %1275
        %1278 = vset.pattern.permute.xlu0 4
        %1279 = vperm.xlu0 %1278, %v180
        %v1280 = vpop.permute.xlu0 %1279
        %1282 = vset.pattern.permute.xlu0 4
        %1283 = vperm.xlu0 %1282, %v181
        %v1284 = vpop.permute.xlu0 %1283
        %1286 = vset.pattern.permute.xlu0 4
        %1287 = vperm.xlu0 %1286, %v182
        %v1288 = vpop.permute.xlu0 %1287
        %1290 = vset.pattern.permute.xlu0 4
        %1291 = vperm.xlu0 %1290, %v183
        %v1292 = vpop.permute.xlu0 %1291
        %1294 = vset.pattern.permute.xlu0 4
        %1295 = vperm.xlu0 %1294, %v184
        %v1296 = vpop.permute.xlu0 %1295
        %1298 = vset.pattern.permute.xlu0 4
        %1299 = vperm.xlu0 %1298, %v185
        %v1300 = vpop.permute.xlu0 %1299
        %1302 = vset.pattern.permute.xlu0 4
        %1303 = vperm.xlu0 %1302, %v186
        %v1304 = vpop.permute.xlu0 %1303
        %1306 = vset.pattern.permute.xlu0 4
        %1307 = vperm.xlu0 %1306, %v187
        %v1308 = vpop.permute.xlu0 %1307
        %1310 = vset.pattern.permute.xlu0 4
        %1311 = vperm.xlu0 %1310, %v188
        %v1312 = vpop.permute.xlu0 %1311
        %1314 = vset.pattern.permute.xlu0 4
        %1315 = vperm.xlu0 %1314, %v189
        %v1316 = vpop.permute.xlu0 %1315
        %1318 = vset.pattern.permute.xlu0 4
        %1319 = vperm.xlu0 %1318, %v190
        %v1320 = vpop.permute.xlu0 %1319
        %1322 = vset.pattern.permute.xlu0 4
        %1323 = vperm.xlu0 %1322, %v191
        %v1324 = vpop.permute.xlu0 %1323
        %1326 = vset.pattern.permute.xlu0 4
        %1327 = vperm.xlu0 %1326, %v192
        %v1328 = vpop.permute.xlu0 %1327
        %1330 = vset.pattern.permute.xlu0 4
        %1331 = vperm.xlu0 %1330, %v193
        %v1332 = vpop.permute.xlu0 %1331
        %1334 = vset.pattern.permute.xlu0 4
        %1335 = vperm.xlu0 %1334, %v194
        %v1336 = vpop.permute.xlu0 %1335
        %1338 = vset.pattern.permute.xlu0 4
        %1339 = vperm.xlu0 %1338, %v195
        %v1340 = vpop.permute.xlu0 %1339
        %1342 = vset.pattern.permute.xlu0 4
        %1343 = vperm.xlu0 %1342, %v196
        %v1344 = vpop.permute.xlu0 %1343
        %1346 = vset.pattern.permute.xlu0 4
        %1347 = vperm.xlu0 %1346, %v197
        %v1348 = vpop.permute.xlu0 %1347
        %1350 = vset.pattern.permute.xlu0 4
        %1351 = vperm.xlu0 %1350, %v198
        %v1352 = vpop.permute.xlu0 %1351
        %1354 = vset.pattern.permute.xlu0 4
        %1355 = vperm.xlu0 %1354, %v199
        %v1356 = vpop.permute.xlu0 %1355
        %1358 = vset.pattern.permute.xlu0 4
        %1359 = vperm.xlu0 %1358, %v200
        %v1360 = vpop.permute.xlu0 %1359
        %1362 = vset.pattern.permute.xlu0 4
        %1363 = vperm.xlu0 %1362, %v201
        %v1364 = vpop.permute.xlu0 %1363
        %1366 = vset.pattern.permute.xlu0 4
        %1367 = vperm.xlu0 %1366, %v202
        %v1368 = vpop.permute.xlu0 %1367
        %1370 = vset.pattern.permute.xlu0 4
        %1371 = vperm.xlu0 %1370, %v203
        %v1372 = vpop.permute.xlu0 %1371
        %1374 = vset.pattern.permute.xlu0 4
        %1375 = vperm.xlu0 %1374, %v204
        %v1376 = vpop.permute.xlu0 %1375
        %1378 = vset.pattern.permute.xlu0 4
        %1379 = vperm.xlu0 %1378, %v205
        %v1380 = vpop.permute.xlu0 %1379
        %1382 = vset.pattern.permute.xlu0 4
        %1383 = vperm.xlu0 %1382, %v206
        %v1384 = vpop.permute.xlu0 %1383
        %1386 = vset.pattern.permute.xlu0 4
        %1387 = vperm.xlu0 %1386, %v207
        %v1388 = vpop.permute.xlu0 %1387
        %1390 = vset.pattern.permute.xlu0 4
        %1391 = vperm.xlu0 %1390, %v208
        %v1392 = vpop.permute.xlu0 %1391
        %1394 = vset.pattern.permute.xlu0 4
        %1395 = vperm.xlu0 %1394, %v209
        %v1396 = vpop.permute.xlu0 %1395
        %v1398 = vmul.f32 %v1254, %v1272
        %v1399 = vmul.f32 %v1255, %v1276
        %v1400 = vmul.f32 %v1256, %v1280
        %v1401 = vmul.f32 %v1257, %v1284
        %v1402 = vmul.f32 %v1258, %v1288
        %v1403 = vmul.f32 %v1259, %v1292
        %v1404 = vmul.f32 %v1260, %v1296
        %v1405 = vmul.f32 %v1261, %v1300
        %v1406 = vmul.f32 %v1262, %v1272
        %v1407 = vmul.f32 %v1263, %v1276
        %v1408 = vmul.f32 %v1264, %v1280
        %v1409 = vmul.f32 %v1265, %v1284
        %v1410 = vmul.f32 %v1266, %v1288
        %v1411 = vmul.f32 %v1267, %v1292
        %v1412 = vmul.f32 %v1268, %v1296
        %v1413 = vmul.f32 %v1269, %v1300
        %v1414 = vmul.f32 %v1254, %v1304
        %v1415 = vmul.f32 %v1255, %v1308
        %v1416 = vmul.f32 %v1256, %v1312
        %v1417 = vmul.f32 %v1257, %v1316
        %v1418 = vmul.f32 %v1258, %v1320
        %v1419 = vmul.f32 %v1259, %v1324
        %v1420 = vmul.f32 %v1260, %v1328
        %v1421 = vmul.f32 %v1261, %v1332
        %v1422 = vmul.f32 %v1262, %v1304
        %v1423 = vmul.f32 %v1263, %v1308
        %v1424 = vmul.f32 %v1264, %v1312
        %v1425 = vmul.f32 %v1265, %v1316
        %v1426 = vmul.f32 %v1266, %v1320
        %v1427 = vmul.f32 %v1267, %v1324
        %v1428 = vmul.f32 %v1268, %v1328
        %v1429 = vmul.f32 %v1269, %v1332
        %v1430 = vmul.f32 %v1254, %v1336
        %v1431 = vmul.f32 %v1255, %v1340
        %v1432 = vmul.f32 %v1256, %v1344
        %v1433 = vmul.f32 %v1257, %v1348
        %v1434 = vmul.f32 %v1258, %v1352
        %v1435 = vmul.f32 %v1259, %v1356
        %v1436 = vmul.f32 %v1260, %v1360
        %v1437 = vmul.f32 %v1261, %v1364
        %v1438 = vmul.f32 %v1262, %v1336
        %v1439 = vmul.f32 %v1263, %v1340
        %v1440 = vmul.f32 %v1264, %v1344
        %v1441 = vmul.f32 %v1265, %v1348
        %v1442 = vmul.f32 %v1266, %v1352
        %v1443 = vmul.f32 %v1267, %v1356
        %v1444 = vmul.f32 %v1268, %v1360
        %v1445 = vmul.f32 %v1269, %v1364
        %v1446 = vmul.f32 %v1254, %v1368
        %v1447 = vmul.f32 %v1255, %v1372
        %v1448 = vmul.f32 %v1256, %v1376
        %v1449 = vmul.f32 %v1257, %v1380
        %v1450 = vmul.f32 %v1258, %v1384
        %v1451 = vmul.f32 %v1259, %v1388
        %v1452 = vmul.f32 %v1260, %v1392
        %v1453 = vmul.f32 %v1261, %v1396
        %v1454 = vmul.f32 %v1262, %v1368
        %v1455 = vmul.f32 %v1263, %v1372
        %v1456 = vmul.f32 %v1264, %v1376
        %v1457 = vmul.f32 %v1265, %v1380
        %v1458 = vmul.f32 %v1266, %v1384
        %v1459 = vmul.f32 %v1267, %v1388
        %v1460 = vmul.f32 %v1268, %v1392
        %v1461 = vmul.f32 %v1269, %v1396
        %v1462 = vadd.f32 %v1189, %v1398
        %v1463 = vadd.f32 %v1190, %v1399
        %v1464 = vadd.f32 %v1191, %v1400
        %v1465 = vadd.f32 %v1192, %v1401
        %v1466 = vadd.f32 %v1193, %v1402
        %v1467 = vadd.f32 %v1194, %v1403
        %v1468 = vadd.f32 %v1195, %v1404
        %v1469 = vadd.f32 %v1196, %v1405
        %v1470 = vadd.f32 %v1197, %v1406
        %v1471 = vadd.f32 %v1198, %v1407
        %v1472 = vadd.f32 %v1199, %v1408
        %v1473 = vadd.f32 %v1200, %v1409
        %v1474 = vadd.f32 %v1201, %v1410
        %v1475 = vadd.f32 %v1202, %v1411
        %v1476 = vadd.f32 %v1203, %v1412
        %v1477 = vadd.f32 %v1204, %v1413
        %v1478 = vadd.f32 %v1205, %v1414
        %v1479 = vadd.f32 %v1206, %v1415
        %v1480 = vadd.f32 %v1207, %v1416
        %v1481 = vadd.f32 %v1208, %v1417
        %v1482 = vadd.f32 %v1209, %v1418
        %v1483 = vadd.f32 %v1210, %v1419
        %v1484 = vadd.f32 %v1211, %v1420
        %v1485 = vadd.f32 %v1212, %v1421
        %v1486 = vadd.f32 %v1213, %v1422
        %v1487 = vadd.f32 %v1214, %v1423
        %v1488 = vadd.f32 %v1215, %v1424
        %v1489 = vadd.f32 %v1216, %v1425
        %v1490 = vadd.f32 %v1217, %v1426
        %v1491 = vadd.f32 %v1218, %v1427
        %v1492 = vadd.f32 %v1219, %v1428
        %v1493 = vadd.f32 %v1220, %v1429
        %v1494 = vadd.f32 %v1221, %v1430
        %v1495 = vadd.f32 %v1222, %v1431
        %v1496 = vadd.f32 %v1223, %v1432
        %v1497 = vadd.f32 %v1224, %v1433
        %v1498 = vadd.f32 %v1225, %v1434
        %v1499 = vadd.f32 %v1226, %v1435
        %v1500 = vadd.f32 %v1227, %v1436
        %v1501 = vadd.f32 %v1228, %v1437
        %v1502 = vadd.f32 %v1229, %v1438
        %v1503 = vadd.f32 %v1230, %v1439
        %v1504 = vadd.f32 %v1231, %v1440
        %v1505 = vadd.f32 %v1232, %v1441
        %v1506 = vadd.f32 %v1233, %v1442
        %v1507 = vadd.f32 %v1234, %v1443
        %v1508 = vadd.f32 %v1235, %v1444
        %v1509 = vadd.f32 %v1236, %v1445
        %v1510 = vadd.f32 %v1237, %v1446
        %v1511 = vadd.f32 %v1238, %v1447
        %v1512 = vadd.f32 %v1239, %v1448
        %v1513 = vadd.f32 %v1240, %v1449
        %v1514 = vadd.f32 %v1241, %v1450
        %v1515 = vadd.f32 %v1242, %v1451
        %v1516 = vadd.f32 %v1243, %v1452
        %v1517 = vadd.f32 %v1244, %v1453
        %v1518 = vadd.f32 %v1245, %v1454
        %v1519 = vadd.f32 %v1246, %v1455
        %v1520 = vadd.f32 %v1247, %v1456
        %v1521 = vadd.f32 %v1248, %v1457
        %v1522 = vadd.f32 %v1249, %v1458
        %v1523 = vadd.f32 %v1250, %v1459
        %v1524 = vadd.f32 %v1251, %v1460
        %v1525 = vadd.f32 %v1252, %v1461
        %s1526 = scalar_lea.vmem [#allocation2], 640
        %v1527 = vld [vmem:[%s1526] sm:$0xff]
        %v1528 = vld [vmem:[%s1526 + $0x8] sm:$0xff]
        %v1529 = vld [vmem:[%s1526 + $0x10] sm:$0xff]
        %v1530 = vld [vmem:[%s1526 + $0x18] sm:$0xff]
        %v1531 = vld [vmem:[%s1526 + $0x20] sm:$0xff]
        %v1532 = vld [vmem:[%s1526 + $0x28] sm:$0xff]
        %v1533 = vld [vmem:[%s1526 + $0x30] sm:$0xff]
        %v1534 = vld [vmem:[%s1526 + $0x38] sm:$0xff]
        %v1535 = vld [vmem:[%s1526 + $0x40] sm:$0xff]
        %v1536 = vld [vmem:[%s1526 + $0x48] sm:$0xff]
        %v1537 = vld [vmem:[%s1526 + $0x50] sm:$0xff]
        %v1538 = vld [vmem:[%s1526 + $0x58] sm:$0xff]
        %v1539 = vld [vmem:[%s1526 + $0x60] sm:$0xff]
        %v1540 = vld [vmem:[%s1526 + $0x68] sm:$0xff]
        %v1541 = vld [vmem:[%s1526 + $0x70] sm:$0xff]
        %v1542 = vld [vmem:[%s1526 + $0x78] sm:$0xff]
        %1543 = vset.pattern.permute.xlu0 5
        %1544 = vperm.xlu0 %1543, %v178
        %v1545 = vpop.permute.xlu0 %1544
        %1547 = vset.pattern.permute.xlu0 5
        %1548 = vperm.xlu0 %1547, %v179
        %v1549 = vpop.permute.xlu0 %1548
        %1551 = vset.pattern.permute.xlu0 5
        %1552 = vperm.xlu0 %1551, %v180
        %v1553 = vpop.permute.xlu0 %1552
        %1555 = vset.pattern.permute.xlu0 5
        %1556 = vperm.xlu0 %1555, %v181
        %v1557 = vpop.permute.xlu0 %1556
        %1559 = vset.pattern.permute.xlu0 5
        %1560 = vperm.xlu0 %1559, %v182
        %v1561 = vpop.permute.xlu0 %1560
        %1563 = vset.pattern.permute.xlu0 5
        %1564 = vperm.xlu0 %1563, %v183
        %v1565 = vpop.permute.xlu0 %1564
        %1567 = vset.pattern.permute.xlu0 5
        %1568 = vperm.xlu0 %1567, %v184
        %v1569 = vpop.permute.xlu0 %1568
        %1571 = vset.pattern.permute.xlu0 5
        %1572 = vperm.xlu0 %1571, %v185
        %v1573 = vpop.permute.xlu0 %1572
        %1575 = vset.pattern.permute.xlu0 5
        %1576 = vperm.xlu0 %1575, %v186
        %v1577 = vpop.permute.xlu0 %1576
        %1579 = vset.pattern.permute.xlu0 5
        %1580 = vperm.xlu0 %1579, %v187
        %v1581 = vpop.permute.xlu0 %1580
        %1583 = vset.pattern.permute.xlu0 5
        %1584 = vperm.xlu0 %1583, %v188
        %v1585 = vpop.permute.xlu0 %1584
        %1587 = vset.pattern.permute.xlu0 5
        %1588 = vperm.xlu0 %1587, %v189
        %v1589 = vpop.permute.xlu0 %1588
        %1591 = vset.pattern.permute.xlu0 5
        %1592 = vperm.xlu0 %1591, %v190
        %v1593 = vpop.permute.xlu0 %1592
        %1595 = vset.pattern.permute.xlu0 5
        %1596 = vperm.xlu0 %1595, %v191
        %v1597 = vpop.permute.xlu0 %1596
        %1599 = vset.pattern.permute.xlu0 5
        %1600 = vperm.xlu0 %1599, %v192
        %v1601 = vpop.permute.xlu0 %1600
        %1603 = vset.pattern.permute.xlu0 5
        %1604 = vperm.xlu0 %1603, %v193
        %v1605 = vpop.permute.xlu0 %1604
        %1607 = vset.pattern.permute.xlu0 5
        %1608 = vperm.xlu0 %1607, %v194
        %v1609 = vpop.permute.xlu0 %1608
        %1611 = vset.pattern.permute.xlu0 5
        %1612 = vperm.xlu0 %1611, %v195
        %v1613 = vpop.permute.xlu0 %1612
        %1615 = vset.pattern.permute.xlu0 5
        %1616 = vperm.xlu0 %1615, %v196
        %v1617 = vpop.permute.xlu0 %1616
        %1619 = vset.pattern.permute.xlu0 5
        %1620 = vperm.xlu0 %1619, %v197
        %v1621 = vpop.permute.xlu0 %1620
        %1623 = vset.pattern.permute.xlu0 5
        %1624 = vperm.xlu0 %1623, %v198
        %v1625 = vpop.permute.xlu0 %1624
        %1627 = vset.pattern.permute.xlu0 5
        %1628 = vperm.xlu0 %1627, %v199
        %v1629 = vpop.permute.xlu0 %1628
        %1631 = vset.pattern.permute.xlu0 5
        %1632 = vperm.xlu0 %1631, %v200
        %v1633 = vpop.permute.xlu0 %1632
        %1635 = vset.pattern.permute.xlu0 5
        %1636 = vperm.xlu0 %1635, %v201
        %v1637 = vpop.permute.xlu0 %1636
        %1639 = vset.pattern.permute.xlu0 5
        %1640 = vperm.xlu0 %1639, %v202
        %v1641 = vpop.permute.xlu0 %1640
        %1643 = vset.pattern.permute.xlu0 5
        %1644 = vperm.xlu0 %1643, %v203
        %v1645 = vpop.permute.xlu0 %1644
        %1647 = vset.pattern.permute.xlu0 5
        %1648 = vperm.xlu0 %1647, %v204
        %v1649 = vpop.permute.xlu0 %1648
        %1651 = vset.pattern.permute.xlu0 5
        %1652 = vperm.xlu0 %1651, %v205
        %v1653 = vpop.permute.xlu0 %1652
        %1655 = vset.pattern.permute.xlu0 5
        %1656 = vperm.xlu0 %1655, %v206
        %v1657 = vpop.permute.xlu0 %1656
        %1659 = vset.pattern.permute.xlu0 5
        %1660 = vperm.xlu0 %1659, %v207
        %v1661 = vpop.permute.xlu0 %1660
        %1663 = vset.pattern.permute.xlu0 5
        %1664 = vperm.xlu0 %1663, %v208
        %v1665 = vpop.permute.xlu0 %1664
        %1667 = vset.pattern.permute.xlu0 5
        %1668 = vperm.xlu0 %1667, %v209
        %v1669 = vpop.permute.xlu0 %1668
        %v1671 = vmul.f32 %v1527, %v1545
        %v1672 = vmul.f32 %v1528, %v1549
        %v1673 = vmul.f32 %v1529, %v1553
        %v1674 = vmul.f32 %v1530, %v1557
        %v1675 = vmul.f32 %v1531, %v1561
        %v1676 = vmul.f32 %v1532, %v1565
        %v1677 = vmul.f32 %v1533, %v1569
        %v1678 = vmul.f32 %v1534, %v1573
        %v1679 = vmul.f32 %v1535, %v1545
        %v1680 = vmul.f32 %v1536, %v1549
        %v1681 = vmul.f32 %v1537, %v1553
        %v1682 = vmul.f32 %v1538, %v1557
        %v1683 = vmul.f32 %v1539, %v1561
        %v1684 = vmul.f32 %v1540, %v1565
        %v1685 = vmul.f32 %v1541, %v1569
        %v1686 = vmul.f32 %v1542, %v1573
        %v1687 = vmul.f32 %v1527, %v1577
        %v1688 = vmul.f32 %v1528, %v1581
        %v1689 = vmul.f32 %v1529, %v1585
        %v1690 = vmul.f32 %v1530, %v1589
        %v1691 = vmul.f32 %v1531, %v1593
        %v1692 = vmul.f32 %v1532, %v1597
        %v1693 = vmul.f32 %v1533, %v1601
        %v1694 = vmul.f32 %v1534, %v1605
        %v1695 = vmul.f32 %v1535, %v1577
        %v1696 = vmul.f32 %v1536, %v1581
        %v1697 = vmul.f32 %v1537, %v1585
        %v1698 = vmul.f32 %v1538, %v1589
        %v1699 = vmul.f32 %v1539, %v1593
        %v1700 = vmul.f32 %v1540, %v1597
        %v1701 = vmul.f32 %v1541, %v1601
        %v1702 = vmul.f32 %v1542, %v1605
        %v1703 = vmul.f32 %v1527, %v1609
        %v1704 = vmul.f32 %v1528, %v1613
        %v1705 = vmul.f32 %v1529, %v1617
        %v1706 = vmul.f32 %v1530, %v1621
        %v1707 = vmul.f32 %v1531, %v1625
        %v1708 = vmul.f32 %v1532, %v1629
        %v1709 = vmul.f32 %v1533, %v1633
        %v1710 = vmul.f32 %v1534, %v1637
        %v1711 = vmul.f32 %v1535, %v1609
        %v1712 = vmul.f32 %v1536, %v1613
        %v1713 = vmul.f32 %v1537, %v1617
        %v1714 = vmul.f32 %v1538, %v1621
        %v1715 = vmul.f32 %v1539, %v1625
        %v1716 = vmul.f32 %v1540, %v1629
        %v1717 = vmul.f32 %v1541, %v1633
        %v1718 = vmul.f32 %v1542, %v1637
        %v1719 = vmul.f32 %v1527, %v1641
        %v1720 = vmul.f32 %v1528, %v1645
        %v1721 = vmul.f32 %v1529, %v1649
        %v1722 = vmul.f32 %v1530, %v1653
        %v1723 = vmul.f32 %v1531, %v1657
        %v1724 = vmul.f32 %v1532, %v1661
        %v1725 = vmul.f32 %v1533, %v1665
        %v1726 = vmul.f32 %v1534, %v1669
        %v1727 = vmul.f32 %v1535, %v1641
        %v1728 = vmul.f32 %v1536, %v1645
        %v1729 = vmul.f32 %v1537, %v1649
        %v1730 = vmul.f32 %v1538, %v1653
        %v1731 = vmul.f32 %v1539, %v1657
        %v1732 = vmul.f32 %v1540, %v1661
        %v1733 = vmul.f32 %v1541, %v1665
        %v1734 = vmul.f32 %v1542, %v1669
        %v1735 = vadd.f32 %v1462, %v1671
        %v1736 = vadd.f32 %v1463, %v1672
        %v1737 = vadd.f32 %v1464, %v1673
        %v1738 = vadd.f32 %v1465, %v1674
        %v1739 = vadd.f32 %v1466, %v1675
        %v1740 = vadd.f32 %v1467, %v1676
        %v1741 = vadd.f32 %v1468, %v1677
        %v1742 = vadd.f32 %v1469, %v1678
        %v1743 = vadd.f32 %v1470, %v1679
        %v1744 = vadd.f32 %v1471, %v1680
        %v1745 = vadd.f32 %v1472, %v1681
        %v1746 = vadd.f32 %v1473, %v1682
        %v1747 = vadd.f32 %v1474, %v1683
        %v1748 = vadd.f32 %v1475, %v1684
        %v1749 = vadd.f32 %v1476, %v1685
        %v1750 = vadd.f32 %v1477, %v1686
        %v1751 = vadd.f32 %v1478, %v1687
        %v1752 = vadd.f32 %v1479, %v1688
        %v1753 = vadd.f32 %v1480, %v1689
        %v1754 = vadd.f32 %v1481, %v1690
        %v1755 = vadd.f32 %v1482, %v1691
        %v1756 = vadd.f32 %v1483, %v1692
        %v1757 = vadd.f32 %v1484, %v1693
        %v1758 = vadd.f32 %v1485, %v1694
        %v1759 = vadd.f32 %v1486, %v1695
        %v1760 = vadd.f32 %v1487, %v1696
        %v1761 = vadd.f32 %v1488, %v1697
        %v1762 = vadd.f32 %v1489, %v1698
        %v1763 = vadd.f32 %v1490, %v1699
        %v1764 = vadd.f32 %v1491, %v1700
        %v1765 = vadd.f32 %v1492, %v1701
        %v1766 = vadd.f32 %v1493, %v1702
        %v1767 = vadd.f32 %v1494, %v1703
        %v1768 = vadd.f32 %v1495, %v1704
        %v1769 = vadd.f32 %v1496, %v1705
        %v1770 = vadd.f32 %v1497, %v1706
        %v1771 = vadd.f32 %v1498, %v1707
        %v1772 = vadd.f32 %v1499, %v1708
        %v1773 = vadd.f32 %v1500, %v1709
        %v1774 = vadd.f32 %v1501, %v1710
        %v1775 = vadd.f32 %v1502, %v1711
        %v1776 = vadd.f32 %v1503, %v1712
        %v1777 = vadd.f32 %v1504, %v1713
        %v1778 = vadd.f32 %v1505, %v1714
        %v1779 = vadd.f32 %v1506, %v1715
        %v1780 = vadd.f32 %v1507, %v1716
        %v1781 = vadd.f32 %v1508, %v1717
        %v1782 = vadd.f32 %v1509, %v1718
        %v1783 = vadd.f32 %v1510, %v1719
        %v1784 = vadd.f32 %v1511, %v1720
        %v1785 = vadd.f32 %v1512, %v1721
        %v1786 = vadd.f32 %v1513, %v1722
        %v1787 = vadd.f32 %v1514, %v1723
        %v1788 = vadd.f32 %v1515, %v1724
        %v1789 = vadd.f32 %v1516, %v1725
        %v1790 = vadd.f32 %v1517, %v1726
        %v1791 = vadd.f32 %v1518, %v1727
        %v1792 = vadd.f32 %v1519, %v1728
        %v1793 = vadd.f32 %v1520, %v1729
        %v1794 = vadd.f32 %v1521, %v1730
        %v1795 = vadd.f32 %v1522, %v1731
        %v1796 = vadd.f32 %v1523, %v1732
        %v1797 = vadd.f32 %v1524, %v1733
        %v1798 = vadd.f32 %v1525, %v1734
        %s1799 = scalar_lea.vmem [#allocation2], 768
        %v1800 = vld [vmem:[%s1799] sm:$0xff]
        %v1801 = vld [vmem:[%s1799 + $0x8] sm:$0xff]
        %v1802 = vld [vmem:[%s1799 + $0x10] sm:$0xff]
        %v1803 = vld [vmem:[%s1799 + $0x18] sm:$0xff]
        %v1804 = vld [vmem:[%s1799 + $0x20] sm:$0xff]
        %v1805 = vld [vmem:[%s1799 + $0x28] sm:$0xff]
        %v1806 = vld [vmem:[%s1799 + $0x30] sm:$0xff]
        %v1807 = vld [vmem:[%s1799 + $0x38] sm:$0xff]
        %v1808 = vld [vmem:[%s1799 + $0x40] sm:$0xff]
        %v1809 = vld [vmem:[%s1799 + $0x48] sm:$0xff]
        %v1810 = vld [vmem:[%s1799 + $0x50] sm:$0xff]
        %v1811 = vld [vmem:[%s1799 + $0x58] sm:$0xff]
        %v1812 = vld [vmem:[%s1799 + $0x60] sm:$0xff]
        %v1813 = vld [vmem:[%s1799 + $0x68] sm:$0xff]
        %v1814 = vld [vmem:[%s1799 + $0x70] sm:$0xff]
        %v1815 = vld [vmem:[%s1799 + $0x78] sm:$0xff]
        %1816 = vset.pattern.permute.xlu0 6
        %1817 = vperm.xlu0 %1816, %v178
        %v1818 = vpop.permute.xlu0 %1817
        %1820 = vset.pattern.permute.xlu0 6
        %1821 = vperm.xlu0 %1820, %v179
        %v1822 = vpop.permute.xlu0 %1821
        %1824 = vset.pattern.permute.xlu0 6
        %1825 = vperm.xlu0 %1824, %v180
        %v1826 = vpop.permute.xlu0 %1825
        %1828 = vset.pattern.permute.xlu0 6
        %1829 = vperm.xlu0 %1828, %v181
        %v1830 = vpop.permute.xlu0 %1829
        %1832 = vset.pattern.permute.xlu0 6
        %1833 = vperm.xlu0 %1832, %v182
        %v1834 = vpop.permute.xlu0 %1833
        %1836 = vset.pattern.permute.xlu0 6
        %1837 = vperm.xlu0 %1836, %v183
        %v1838 = vpop.permute.xlu0 %1837
        %1840 = vset.pattern.permute.xlu0 6
        %1841 = vperm.xlu0 %1840, %v184
        %v1842 = vpop.permute.xlu0 %1841
        %1844 = vset.pattern.permute.xlu0 6
        %1845 = vperm.xlu0 %1844, %v185
        %v1846 = vpop.permute.xlu0 %1845
        %1848 = vset.pattern.permute.xlu0 6
        %1849 = vperm.xlu0 %1848, %v186
        %v1850 = vpop.permute.xlu0 %1849
        %1852 = vset.pattern.permute.xlu0 6
        %1853 = vperm.xlu0 %1852, %v187
        %v1854 = vpop.permute.xlu0 %1853
        %1856 = vset.pattern.permute.xlu0 6
        %1857 = vperm.xlu0 %1856, %v188
        %v1858 = vpop.permute.xlu0 %1857
        %1860 = vset.pattern.permute.xlu0 6
        %1861 = vperm.xlu0 %1860, %v189
        %v1862 = vpop.permute.xlu0 %1861
        %1864 = vset.pattern.permute.xlu0 6
        %1865 = vperm.xlu0 %1864, %v190
        %v1866 = vpop.permute.xlu0 %1865
        %1868 = vset.pattern.permute.xlu0 6
        %1869 = vperm.xlu0 %1868, %v191
        %v1870 = vpop.permute.xlu0 %1869
        %1872 = vset.pattern.permute.xlu0 6
        %1873 = vperm.xlu0 %1872, %v192
        %v1874 = vpop.permute.xlu0 %1873
        %1876 = vset.pattern.permute.xlu0 6
        %1877 = vperm.xlu0 %1876, %v193
        %v1878 = vpop.permute.xlu0 %1877
        %1880 = vset.pattern.permute.xlu0 6
        %1881 = vperm.xlu0 %1880, %v194
        %v1882 = vpop.permute.xlu0 %1881
        %1884 = vset.pattern.permute.xlu0 6
        %1885 = vperm.xlu0 %1884, %v195
        %v1886 = vpop.permute.xlu0 %1885
        %1888 = vset.pattern.permute.xlu0 6
        %1889 = vperm.xlu0 %1888, %v196
        %v1890 = vpop.permute.xlu0 %1889
        %1892 = vset.pattern.permute.xlu0 6
        %1893 = vperm.xlu0 %1892, %v197
        %v1894 = vpop.permute.xlu0 %1893
        %1896 = vset.pattern.permute.xlu0 6
        %1897 = vperm.xlu0 %1896, %v198
        %v1898 = vpop.permute.xlu0 %1897
        %1900 = vset.pattern.permute.xlu0 6
        %1901 = vperm.xlu0 %1900, %v199
        %v1902 = vpop.permute.xlu0 %1901
        %1904 = vset.pattern.permute.xlu0 6
        %1905 = vperm.xlu0 %1904, %v200
        %v1906 = vpop.permute.xlu0 %1905
        %1908 = vset.pattern.permute.xlu0 6
        %1909 = vperm.xlu0 %1908, %v201
        %v1910 = vpop.permute.xlu0 %1909
        %1912 = vset.pattern.permute.xlu0 6
        %1913 = vperm.xlu0 %1912, %v202
        %v1914 = vpop.permute.xlu0 %1913
        %1916 = vset.pattern.permute.xlu0 6
        %1917 = vperm.xlu0 %1916, %v203
        %v1918 = vpop.permute.xlu0 %1917
        %1920 = vset.pattern.permute.xlu0 6
        %1921 = vperm.xlu0 %1920, %v204
        %v1922 = vpop.permute.xlu0 %1921
        %1924 = vset.pattern.permute.xlu0 6
        %1925 = vperm.xlu0 %1924, %v205
        %v1926 = vpop.permute.xlu0 %1925
        %1928 = vset.pattern.permute.xlu0 6
        %1929 = vperm.xlu0 %1928, %v206
        %v1930 = vpop.permute.xlu0 %1929
        %1932 = vset.pattern.permute.xlu0 6
        %1933 = vperm.xlu0 %1932, %v207
        %v1934 = vpop.permute.xlu0 %1933
        %1936 = vset.pattern.permute.xlu0 6
        %1937 = vperm.xlu0 %1936, %v208
        %v1938 = vpop.permute.xlu0 %1937
        %1940 = vset.pattern.permute.xlu0 6
        %1941 = vperm.xlu0 %1940, %v209
        %v1942 = vpop.permute.xlu0 %1941
        %v1944 = vmul.f32 %v1800, %v1818
        %v1945 = vmul.f32 %v1801, %v1822
        %v1946 = vmul.f32 %v1802, %v1826
        %v1947 = vmul.f32 %v1803, %v1830
        %v1948 = vmul.f32 %v1804, %v1834
        %v1949 = vmul.f32 %v1805, %v1838
        %v1950 = vmul.f32 %v1806, %v1842
        %v1951 = vmul.f32 %v1807, %v1846
        %v1952 = vmul.f32 %v1808, %v1818
        %v1953 = vmul.f32 %v1809, %v1822
        %v1954 = vmul.f32 %v1810, %v1826
        %v1955 = vmul.f32 %v1811, %v1830
        %v1956 = vmul.f32 %v1812, %v1834
        %v1957 = vmul.f32 %v1813, %v1838
        %v1958 = vmul.f32 %v1814, %v1842
        %v1959 = vmul.f32 %v1815, %v1846
        %v1960 = vmul.f32 %v1800, %v1850
        %v1961 = vmul.f32 %v1801, %v1854
        %v1962 = vmul.f32 %v1802, %v1858
        %v1963 = vmul.f32 %v1803, %v1862
        %v1964 = vmul.f32 %v1804, %v1866
        %v1965 = vmul.f32 %v1805, %v1870
        %v1966 = vmul.f32 %v1806, %v1874
        %v1967 = vmul.f32 %v1807, %v1878
        %v1968 = vmul.f32 %v1808, %v1850
        %v1969 = vmul.f32 %v1809, %v1854
        %v1970 = vmul.f32 %v1810, %v1858
        %v1971 = vmul.f32 %v1811, %v1862
        %v1972 = vmul.f32 %v1812, %v1866
        %v1973 = vmul.f32 %v1813, %v1870
        %v1974 = vmul.f32 %v1814, %v1874
        %v1975 = vmul.f32 %v1815, %v1878
        %v1976 = vmul.f32 %v1800, %v1882
        %v1977 = vmul.f32 %v1801, %v1886
        %v1978 = vmul.f32 %v1802, %v1890
        %v1979 = vmul.f32 %v1803, %v1894
        %v1980 = vmul.f32 %v1804, %v1898
        %v1981 = vmul.f32 %v1805, %v1902
        %v1982 = vmul.f32 %v1806, %v1906
        %v1983 = vmul.f32 %v1807, %v1910
        %v1984 = vmul.f32 %v1808, %v1882
        %v1985 = vmul.f32 %v1809, %v1886
        %v1986 = vmul.f32 %v1810, %v1890
        %v1987 = vmul.f32 %v1811, %v1894
        %v1988 = vmul.f32 %v1812, %v1898
        %v1989 = vmul.f32 %v1813, %v1902
        %v1990 = vmul.f32 %v1814, %v1906
        %v1991 = vmul.f32 %v1815, %v1910
        %v1992 = vmul.f32 %v1800, %v1914
        %v1993 = vmul.f32 %v1801, %v1918
        %v1994 = vmul.f32 %v1802, %v1922
        %v1995 = vmul.f32 %v1803, %v1926
        %v1996 = vmul.f32 %v1804, %v1930
        %v1997 = vmul.f32 %v1805, %v1934
        %v1998 = vmul.f32 %v1806, %v1938
        %v1999 = vmul.f32 %v1807, %v1942
        %v2000 = vmul.f32 %v1808, %v1914
        %v2001 = vmul.f32 %v1809, %v1918
        %v2002 = vmul.f32 %v1810, %v1922
        %v2003 = vmul.f32 %v1811, %v1926
        %v2004 = vmul.f32 %v1812, %v1930
        %v2005 = vmul.f32 %v1813, %v1934
        %v2006 = vmul.f32 %v1814, %v1938
        %v2007 = vmul.f32 %v1815, %v1942
        %v2008 = vadd.f32 %v1735, %v1944
        %v2009 = vadd.f32 %v1736, %v1945
        %v2010 = vadd.f32 %v1737, %v1946
        %v2011 = vadd.f32 %v1738, %v1947
        %v2012 = vadd.f32 %v1739, %v1948
        %v2013 = vadd.f32 %v1740, %v1949
        %v2014 = vadd.f32 %v1741, %v1950
        %v2015 = vadd.f32 %v1742, %v1951
        %v2016 = vadd.f32 %v1743, %v1952
        %v2017 = vadd.f32 %v1744, %v1953
        %v2018 = vadd.f32 %v1745, %v1954
        %v2019 = vadd.f32 %v1746, %v1955
        %v2020 = vadd.f32 %v1747, %v1956
        %v2021 = vadd.f32 %v1748, %v1957
        %v2022 = vadd.f32 %v1749, %v1958
        %v2023 = vadd.f32 %v1750, %v1959
        %v2024 = vadd.f32 %v1751, %v1960
        %v2025 = vadd.f32 %v1752, %v1961
        %v2026 = vadd.f32 %v1753, %v1962
        %v2027 = vadd.f32 %v1754, %v1963
        %v2028 = vadd.f32 %v1755, %v1964
        %v2029 = vadd.f32 %v1756, %v1965
        %v2030 = vadd.f32 %v1757, %v1966
        %v2031 = vadd.f32 %v1758, %v1967
        %v2032 = vadd.f32 %v1759, %v1968
        %v2033 = vadd.f32 %v1760, %v1969
        %v2034 = vadd.f32 %v1761, %v1970
        %v2035 = vadd.f32 %v1762, %v1971
        %v2036 = vadd.f32 %v1763, %v1972
        %v2037 = vadd.f32 %v1764, %v1973
        %v2038 = vadd.f32 %v1765, %v1974
        %v2039 = vadd.f32 %v1766, %v1975
        %v2040 = vadd.f32 %v1767, %v1976
        %v2041 = vadd.f32 %v1768, %v1977
        %v2042 = vadd.f32 %v1769, %v1978
        %v2043 = vadd.f32 %v1770, %v1979
        %v2044 = vadd.f32 %v1771, %v1980
        %v2045 = vadd.f32 %v1772, %v1981
        %v2046 = vadd.f32 %v1773, %v1982
        %v2047 = vadd.f32 %v1774, %v1983
        %v2048 = vadd.f32 %v1775, %v1984
        %v2049 = vadd.f32 %v1776, %v1985
        %v2050 = vadd.f32 %v1777, %v1986
        %v2051 = vadd.f32 %v1778, %v1987
        %v2052 = vadd.f32 %v1779, %v1988
        %v2053 = vadd.f32 %v1780, %v1989
        %v2054 = vadd.f32 %v1781, %v1990
        %v2055 = vadd.f32 %v1782, %v1991
        %v2056 = vadd.f32 %v1783, %v1992
        %v2057 = vadd.f32 %v1784, %v1993
        %v2058 = vadd.f32 %v1785, %v1994
        %v2059 = vadd.f32 %v1786, %v1995
        %v2060 = vadd.f32 %v1787, %v1996
        %v2061 = vadd.f32 %v1788, %v1997
        %v2062 = vadd.f32 %v1789, %v1998
        %v2063 = vadd.f32 %v1790, %v1999
        %v2064 = vadd.f32 %v1791, %v2000
        %v2065 = vadd.f32 %v1792, %v2001
        %v2066 = vadd.f32 %v1793, %v2002
        %v2067 = vadd.f32 %v1794, %v2003
        %v2068 = vadd.f32 %v1795, %v2004
        %v2069 = vadd.f32 %v1796, %v2005
        %v2070 = vadd.f32 %v1797, %v2006
        %v2071 = vadd.f32 %v1798, %v2007
        %s2072 = scalar_lea.vmem [#allocation2], 896
        %v2073 = vld [vmem:[%s2072] sm:$0xff]
        %v2074 = vld [vmem:[%s2072 + $0x8] sm:$0xff]
        %v2075 = vld [vmem:[%s2072 + $0x10] sm:$0xff]
        %v2076 = vld [vmem:[%s2072 + $0x18] sm:$0xff]
        %v2077 = vld [vmem:[%s2072 + $0x20] sm:$0xff]
        %v2078 = vld [vmem:[%s2072 + $0x28] sm:$0xff]
        %v2079 = vld [vmem:[%s2072 + $0x30] sm:$0xff]
        %v2080 = vld [vmem:[%s2072 + $0x38] sm:$0xff]
        %v2081 = vld [vmem:[%s2072 + $0x40] sm:$0xff]
        %v2082 = vld [vmem:[%s2072 + $0x48] sm:$0xff]
        %v2083 = vld [vmem:[%s2072 + $0x50] sm:$0xff]
        %v2084 = vld [vmem:[%s2072 + $0x58] sm:$0xff]
        %v2085 = vld [vmem:[%s2072 + $0x60] sm:$0xff]
        %v2086 = vld [vmem:[%s2072 + $0x68] sm:$0xff]
        %v2087 = vld [vmem:[%s2072 + $0x70] sm:$0xff]
        %v2088 = vld [vmem:[%s2072 + $0x78] sm:$0xff]
        %2089 = vset.pattern.permute.xlu0 7
        %2090 = vperm.xlu0 %2089, %v178
        %v2091 = vpop.permute.xlu0 %2090
        %2093 = vset.pattern.permute.xlu0 7
        %2094 = vperm.xlu0 %2093, %v179
        %v2095 = vpop.permute.xlu0 %2094
        %2097 = vset.pattern.permute.xlu0 7
        %2098 = vperm.xlu0 %2097, %v180
        %v2099 = vpop.permute.xlu0 %2098
        %2101 = vset.pattern.permute.xlu0 7
        %2102 = vperm.xlu0 %2101, %v181
        %v2103 = vpop.permute.xlu0 %2102
        %2105 = vset.pattern.permute.xlu0 7
        %2106 = vperm.xlu0 %2105, %v182
        %v2107 = vpop.permute.xlu0 %2106
        %2109 = vset.pattern.permute.xlu0 7
        %2110 = vperm.xlu0 %2109, %v183
        %v2111 = vpop.permute.xlu0 %2110
        %2113 = vset.pattern.permute.xlu0 7
        %2114 = vperm.xlu0 %2113, %v184
        %v2115 = vpop.permute.xlu0 %2114
        %2117 = vset.pattern.permute.xlu0 7
        %2118 = vperm.xlu0 %2117, %v185
        %v2119 = vpop.permute.xlu0 %2118
        %2121 = vset.pattern.permute.xlu0 7
        %2122 = vperm.xlu0 %2121, %v186
        %v2123 = vpop.permute.xlu0 %2122
        %2125 = vset.pattern.permute.xlu0 7
        %2126 = vperm.xlu0 %2125, %v187
        %v2127 = vpop.permute.xlu0 %2126
        %2129 = vset.pattern.permute.xlu0 7
        %2130 = vperm.xlu0 %2129, %v188
        %v2131 = vpop.permute.xlu0 %2130
        %2133 = vset.pattern.permute.xlu0 7
        %2134 = vperm.xlu0 %2133, %v189
        %v2135 = vpop.permute.xlu0 %2134
        %2137 = vset.pattern.permute.xlu0 7
        %2138 = vperm.xlu0 %2137, %v190
        %v2139 = vpop.permute.xlu0 %2138
        %2141 = vset.pattern.permute.xlu0 7
        %2142 = vperm.xlu0 %2141, %v191
        %v2143 = vpop.permute.xlu0 %2142
        %2145 = vset.pattern.permute.xlu0 7
        %2146 = vperm.xlu0 %2145, %v192
        %v2147 = vpop.permute.xlu0 %2146
        %2149 = vset.pattern.permute.xlu0 7
        %2150 = vperm.xlu0 %2149, %v193
        %v2151 = vpop.permute.xlu0 %2150
        %2153 = vset.pattern.permute.xlu0 7
        %2154 = vperm.xlu0 %2153, %v194
        %v2155 = vpop.permute.xlu0 %2154
        %2157 = vset.pattern.permute.xlu0 7
        %2158 = vperm.xlu0 %2157, %v195
        %v2159 = vpop.permute.xlu0 %2158
        %2161 = vset.pattern.permute.xlu0 7
        %2162 = vperm.xlu0 %2161, %v196
        %v2163 = vpop.permute.xlu0 %2162
        %2165 = vset.pattern.permute.xlu0 7
        %2166 = vperm.xlu0 %2165, %v197
        %v2167 = vpop.permute.xlu0 %2166
        %2169 = vset.pattern.permute.xlu0 7
        %2170 = vperm.xlu0 %2169, %v198
        %v2171 = vpop.permute.xlu0 %2170
        %2173 = vset.pattern.permute.xlu0 7
        %2174 = vperm.xlu0 %2173, %v199
        %v2175 = vpop.permute.xlu0 %2174
        %2177 = vset.pattern.permute.xlu0 7
        %2178 = vperm.xlu0 %2177, %v200
        %v2179 = vpop.permute.xlu0 %2178
        %2181 = vset.pattern.permute.xlu0 7
        %2182 = vperm.xlu0 %2181, %v201
        %v2183 = vpop.permute.xlu0 %2182
        %2185 = vset.pattern.permute.xlu0 7
        %2186 = vperm.xlu0 %2185, %v202
        %v2187 = vpop.permute.xlu0 %2186
        %2189 = vset.pattern.permute.xlu0 7
        %2190 = vperm.xlu0 %2189, %v203
        %v2191 = vpop.permute.xlu0 %2190
        %2193 = vset.pattern.permute.xlu0 7
        %2194 = vperm.xlu0 %2193, %v204
        %v2195 = vpop.permute.xlu0 %2194
        %2197 = vset.pattern.permute.xlu0 7
        %2198 = vperm.xlu0 %2197, %v205
        %v2199 = vpop.permute.xlu0 %2198
        %2201 = vset.pattern.permute.xlu0 7
        %2202 = vperm.xlu0 %2201, %v206
        %v2203 = vpop.permute.xlu0 %2202
        %2205 = vset.pattern.permute.xlu0 7
        %2206 = vperm.xlu0 %2205, %v207
        %v2207 = vpop.permute.xlu0 %2206
        %2209 = vset.pattern.permute.xlu0 7
        %2210 = vperm.xlu0 %2209, %v208
        %v2211 = vpop.permute.xlu0 %2210
        %2213 = vset.pattern.permute.xlu0 7
        %2214 = vperm.xlu0 %2213, %v209
        %v2215 = vpop.permute.xlu0 %2214
        %v2217 = vmul.f32 %v2073, %v2091
        %v2218 = vmul.f32 %v2074, %v2095
        %v2219 = vmul.f32 %v2075, %v2099
        %v2220 = vmul.f32 %v2076, %v2103
        %v2221 = vmul.f32 %v2077, %v2107
        %v2222 = vmul.f32 %v2078, %v2111
        %v2223 = vmul.f32 %v2079, %v2115
        %v2224 = vmul.f32 %v2080, %v2119
        %v2225 = vmul.f32 %v2081, %v2091
        %v2226 = vmul.f32 %v2082, %v2095
        %v2227 = vmul.f32 %v2083, %v2099
        %v2228 = vmul.f32 %v2084, %v2103
        %v2229 = vmul.f32 %v2085, %v2107
        %v2230 = vmul.f32 %v2086, %v2111
        %v2231 = vmul.f32 %v2087, %v2115
        %v2232 = vmul.f32 %v2088, %v2119
        %v2233 = vmul.f32 %v2073, %v2123
        %v2234 = vmul.f32 %v2074, %v2127
        %v2235 = vmul.f32 %v2075, %v2131
        %v2236 = vmul.f32 %v2076, %v2135
        %v2237 = vmul.f32 %v2077, %v2139
        %v2238 = vmul.f32 %v2078, %v2143
        %v2239 = vmul.f32 %v2079, %v2147
        %v2240 = vmul.f32 %v2080, %v2151
        %v2241 = vmul.f32 %v2081, %v2123
        %v2242 = vmul.f32 %v2082, %v2127
        %v2243 = vmul.f32 %v2083, %v2131
        %v2244 = vmul.f32 %v2084, %v2135
        %v2245 = vmul.f32 %v2085, %v2139
        %v2246 = vmul.f32 %v2086, %v2143
        %v2247 = vmul.f32 %v2087, %v2147
        %v2248 = vmul.f32 %v2088, %v2151
        %v2249 = vmul.f32 %v2073, %v2155
        %v2250 = vmul.f32 %v2074, %v2159
        %v2251 = vmul.f32 %v2075, %v2163
        %v2252 = vmul.f32 %v2076, %v2167
        %v2253 = vmul.f32 %v2077, %v2171
        %v2254 = vmul.f32 %v2078, %v2175
        %v2255 = vmul.f32 %v2079, %v2179
        %v2256 = vmul.f32 %v2080, %v2183
        %v2257 = vmul.f32 %v2081, %v2155
        %v2258 = vmul.f32 %v2082, %v2159
        %v2259 = vmul.f32 %v2083, %v2163
        %v2260 = vmul.f32 %v2084, %v2167
        %v2261 = vmul.f32 %v2085, %v2171
        %v2262 = vmul.f32 %v2086, %v2175
        %v2263 = vmul.f32 %v2087, %v2179
        %v2264 = vmul.f32 %v2088, %v2183
        %v2265 = vmul.f32 %v2073, %v2187
        %v2266 = vmul.f32 %v2074, %v2191
        %v2267 = vmul.f32 %v2075, %v2195
        %v2268 = vmul.f32 %v2076, %v2199
        %v2269 = vmul.f32 %v2077, %v2203
        %v2270 = vmul.f32 %v2078, %v2207
        %v2271 = vmul.f32 %v2079, %v2211
        %v2272 = vmul.f32 %v2080, %v2215
        %v2273 = vmul.f32 %v2081, %v2187
        %v2274 = vmul.f32 %v2082, %v2191
        %v2275 = vmul.f32 %v2083, %v2195
        %v2276 = vmul.f32 %v2084, %v2199
        %v2277 = vmul.f32 %v2085, %v2203
        %v2278 = vmul.f32 %v2086, %v2207
        %v2279 = vmul.f32 %v2087, %v2211
        %v2280 = vmul.f32 %v2088, %v2215
        %v2281 = vadd.f32 %v2008, %v2217
        %v2282 = vadd.f32 %v2009, %v2218
        %v2283 = vadd.f32 %v2010, %v2219
        %v2284 = vadd.f32 %v2011, %v2220
        %v2285 = vadd.f32 %v2012, %v2221
        %v2286 = vadd.f32 %v2013, %v2222
        %v2287 = vadd.f32 %v2014, %v2223
        %v2288 = vadd.f32 %v2015, %v2224
        %v2289 = vadd.f32 %v2016, %v2225
        %v2290 = vadd.f32 %v2017, %v2226
        %v2291 = vadd.f32 %v2018, %v2227
        %v2292 = vadd.f32 %v2019, %v2228
        %v2293 = vadd.f32 %v2020, %v2229
        %v2294 = vadd.f32 %v2021, %v2230
        %v2295 = vadd.f32 %v2022, %v2231
        %v2296 = vadd.f32 %v2023, %v2232
        %v2297 = vadd.f32 %v2024, %v2233
        %v2298 = vadd.f32 %v2025, %v2234
        %v2299 = vadd.f32 %v2026, %v2235
        %v2300 = vadd.f32 %v2027, %v2236
        %v2301 = vadd.f32 %v2028, %v2237
        %v2302 = vadd.f32 %v2029, %v2238
        %v2303 = vadd.f32 %v2030, %v2239
        %v2304 = vadd.f32 %v2031, %v2240
        %v2305 = vadd.f32 %v2032, %v2241
        %v2306 = vadd.f32 %v2033, %v2242
        %v2307 = vadd.f32 %v2034, %v2243
        %v2308 = vadd.f32 %v2035, %v2244
        %v2309 = vadd.f32 %v2036, %v2245
        %v2310 = vadd.f32 %v2037, %v2246
        %v2311 = vadd.f32 %v2038, %v2247
        %v2312 = vadd.f32 %v2039, %v2248
        %v2313 = vadd.f32 %v2040, %v2249
        %v2314 = vadd.f32 %v2041, %v2250
        %v2315 = vadd.f32 %v2042, %v2251
        %v2316 = vadd.f32 %v2043, %v2252
        %v2317 = vadd.f32 %v2044, %v2253
        %v2318 = vadd.f32 %v2045, %v2254
        %v2319 = vadd.f32 %v2046, %v2255
        %v2320 = vadd.f32 %v2047, %v2256
        %v2321 = vadd.f32 %v2048, %v2257
        %v2322 = vadd.f32 %v2049, %v2258
        %v2323 = vadd.f32 %v2050, %v2259
        %v2324 = vadd.f32 %v2051, %v2260
        %v2325 = vadd.f32 %v2052, %v2261
        %v2326 = vadd.f32 %v2053, %v2262
        %v2327 = vadd.f32 %v2054, %v2263
        %v2328 = vadd.f32 %v2055, %v2264
        %v2329 = vadd.f32 %v2056, %v2265
        %v2330 = vadd.f32 %v2057, %v2266
        %v2331 = vadd.f32 %v2058, %v2267
        %v2332 = vadd.f32 %v2059, %v2268
        %v2333 = vadd.f32 %v2060, %v2269
        %v2334 = vadd.f32 %v2061, %v2270
        %v2335 = vadd.f32 %v2062, %v2271
        %v2336 = vadd.f32 %v2063, %v2272
        %v2337 = vadd.f32 %v2064, %v2273
        %v2338 = vadd.f32 %v2065, %v2274
        %v2339 = vadd.f32 %v2066, %v2275
        %v2340 = vadd.f32 %v2067, %v2276
        %v2341 = vadd.f32 %v2068, %v2277
        %v2342 = vadd.f32 %v2069, %v2278
        %v2343 = vadd.f32 %v2070, %v2279
        %v2344 = vadd.f32 %v2071, %v2280
        %v2345 = vrcp.pop 2.0
        %v2346 = vmul.f32 %v2345, %v2281
        %v2347 = vmul.f32 %v2345, %v2282
        %v2348 = vmul.f32 %v2345, %v2283
        %v2349 = vmul.f32 %v2345, %v2284
        %v2350 = vmul.f32 %v2345, %v2285
        %v2351 = vmul.f32 %v2345, %v2286
        %v2352 = vmul.f32 %v2345, %v2287
        %v2353 = vmul.f32 %v2345, %v2288
        %v2354 = vmul.f32 %v2345, %v2289
        %v2355 = vmul.f32 %v2345, %v2290
        %v2356 = vmul.f32 %v2345, %v2291
        %v2357 = vmul.f32 %v2345, %v2292
        %v2358 = vmul.f32 %v2345, %v2293
        %v2359 = vmul.f32 %v2345, %v2294
        %v2360 = vmul.f32 %v2345, %v2295
        %v2361 = vmul.f32 %v2345, %v2296
        %v2362 = vmul.f32 %v2345, %v2297
        %v2363 = vmul.f32 %v2345, %v2298
        %v2364 = vmul.f32 %v2345, %v2299
        %v2365 = vmul.f32 %v2345, %v2300
        %v2366 = vmul.f32 %v2345, %v2301
        %v2367 = vmul.f32 %v2345, %v2302
        %v2368 = vmul.f32 %v2345, %v2303
        %v2369 = vmul.f32 %v2345, %v2304
        %v2370 = vmul.f32 %v2345, %v2305
        %v2371 = vmul.f32 %v2345, %v2306
        %v2372 = vmul.f32 %v2345, %v2307
        %v2373 = vmul.f32 %v2345, %v2308
        %v2374 = vmul.f32 %v2345, %v2309
        %v2375 = vmul.f32 %v2345, %v2310
        %v2376 = vmul.f32 %v2345, %v2311
        %v2377 = vmul.f32 %v2345, %v2312
        %v2378 = vmul.f32 %v2345, %v2313
        %v2379 = vmul.f32 %v2345, %v2314
        %v2380 = vmul.f32 %v2345, %v2315
        %v2381 = vmul.f32 %v2345, %v2316
        %v2382 = vmul.f32 %v2345, %v2317
        %v2383 = vmul.f32 %v2345, %v2318
        %v2384 = vmul.f32 %v2345, %v2319
        %v2385 = vmul.f32 %v2345, %v2320
        %v2386 = vmul.f32 %v2345, %v2321
        %v2387 = vmul.f32 %v2345, %v2322
        %v2388 = vmul.f32 %v2345, %v2323
        %v2389 = vmul.f32 %v2345, %v2324
        %v2390 = vmul.f32 %v2345, %v2325
        %v2391 = vmul.f32 %v2345, %v2326
        %v2392 = vmul.f32 %v2345, %v2327
        %v2393 = vmul.f32 %v2345, %v2328
        %v2394 = vmul.f32 %v2345, %v2329
        %v2395 = vmul.f32 %v2345, %v2330
        %v2396 = vmul.f32 %v2345, %v2331
        %v2397 = vmul.f32 %v2345, %v2332
        %v2398 = vmul.f32 %v2345, %v2333
        %v2399 = vmul.f32 %v2345, %v2334
        %v2400 = vmul.f32 %v2345, %v2335
        %v2401 = vmul.f32 %v2345, %v2336
        %v2402 = vmul.f32 %v2345, %v2337
        %v2403 = vmul.f32 %v2345, %v2338
        %v2404 = vmul.f32 %v2345, %v2339
        %v2405 = vmul.f32 %v2345, %v2340
        %v2406 = vmul.f32 %v2345, %v2341
        %v2407 = vmul.f32 %v2345, %v2342
        %v2408 = vmul.f32 %v2345, %v2343
        %v2409 = vmul.f32 %v2345, %v2344
        %v2410 = vadd.f32 %v2346, %v2347
        %v2411 = vadd.f32 %v2410, %v2348
        %v2412 = vadd.f32 %v2411, %v2349
        %v2413 = vadd.f32 %v2412, %v2350
        %v2414 = vadd.f32 %v2413, %v2351
        %v2415 = vadd.f32 %v2414, %v2352
        %v2416 = vadd.f32 %v2415, %v2353
        %v2417 = vrot.slane %v2416, 4
        %v2418 = vadd.f32 %v2416, %v2417
        %v2419 = vrot.slane %v2418, 2
        %v2420 = vadd.f32 %v2418, %v2419
        %v2421 = vrot.slane %v2420, 1
        %v2422 = vadd.f32 %v2420, %v2421
        %v2423 = vadd.f32 %v2354, %v2355
        %v2424 = vadd.f32 %v2423, %v2356
        %v2425 = vadd.f32 %v2424, %v2357
        %v2426 = vadd.f32 %v2425, %v2358
        %v2427 = vadd.f32 %v2426, %v2359
        %v2428 = vadd.f32 %v2427, %v2360
        %v2429 = vadd.f32 %v2428, %v2361
        %v2430 = vrot.slane %v2429, 4
        %v2431 = vadd.f32 %v2429, %v2430
        %v2432 = vrot.slane %v2431, 2
        %v2433 = vadd.f32 %v2431, %v2432
        %v2434 = vrot.slane %v2433, 1
        %v2435 = vadd.f32 %v2433, %v2434
        %v2436 = vadd.f32 %v2362, %v2363
        %v2437 = vadd.f32 %v2436, %v2364
        %v2438 = vadd.f32 %v2437, %v2365
        %v2439 = vadd.f32 %v2438, %v2366
        %v2440 = vadd.f32 %v2439, %v2367
        %v2441 = vadd.f32 %v2440, %v2368
        %v2442 = vadd.f32 %v2441, %v2369
        %v2443 = vrot.slane %v2442, 4
        %v2444 = vadd.f32 %v2442, %v2443
        %v2445 = vrot.slane %v2444, 2
        %v2446 = vadd.f32 %v2444, %v2445
        %v2447 = vrot.slane %v2446, 1
        %v2448 = vadd.f32 %v2446, %v2447
        %v2449 = vadd.f32 %v2370, %v2371
        %v2450 = vadd.f32 %v2449, %v2372
        %v2451 = vadd.f32 %v2450, %v2373
        %v2452 = vadd.f32 %v2451, %v2374
        %v2453 = vadd.f32 %v2452, %v2375
        %v2454 = vadd.f32 %v2453, %v2376
        %v2455 = vadd.f32 %v2454, %v2377
        %v2456 = vrot.slane %v2455, 4
        %v2457 = vadd.f32 %v2455, %v2456
        %v2458 = vrot.slane %v2457, 2
        %v2459 = vadd.f32 %v2457, %v2458
        %v2460 = vrot.slane %v2459, 1
        %v2461 = vadd.f32 %v2459, %v2460
        %v2462 = vadd.f32 %v2378, %v2379
        %v2463 = vadd.f32 %v2462, %v2380
        %v2464 = vadd.f32 %v2463, %v2381
        %v2465 = vadd.f32 %v2464, %v2382
        %v2466 = vadd.f32 %v2465, %v2383
        %v2467 = vadd.f32 %v2466, %v2384
        %v2468 = vadd.f32 %v2467, %v2385
        %v2469 = vrot.slane %v2468, 4
        %v2470 = vadd.f32 %v2468, %v2469
        %v2471 = vrot.slane %v2470, 2
        %v2472 = vadd.f32 %v2470, %v2471
        %v2473 = vrot.slane %v2472, 1
        %v2474 = vadd.f32 %v2472, %v2473
        %v2475 = vadd.f32 %v2386, %v2387
        %v2476 = vadd.f32 %v2475, %v2388
        %v2477 = vadd.f32 %v2476, %v2389
        %v2478 = vadd.f32 %v2477, %v2390
        %v2479 = vadd.f32 %v2478, %v2391
        %v2480 = vadd.f32 %v2479, %v2392
        %v2481 = vadd.f32 %v2480, %v2393
        %v2482 = vrot.slane %v2481, 4
        %v2483 = vadd.f32 %v2481, %v2482
        %v2484 = vrot.slane %v2483, 2
        %v2485 = vadd.f32 %v2483, %v2484
        %v2486 = vrot.slane %v2485, 1
        %v2487 = vadd.f32 %v2485, %v2486
        %v2488 = vadd.f32 %v2394, %v2395
        %v2489 = vadd.f32 %v2488, %v2396
        %v2490 = vadd.f32 %v2489, %v2397
        %v2491 = vadd.f32 %v2490, %v2398
        %v2492 = vadd.f32 %v2491, %v2399
        %v2493 = vadd.f32 %v2492, %v2400
        %v2494 = vadd.f32 %v2493, %v2401
        %v2495 = vrot.slane %v2494, 4
        %v2496 = vadd.f32 %v2494, %v2495
        %v2497 = vrot.slane %v2496, 2
        %v2498 = vadd.f32 %v2496, %v2497
        %v2499 = vrot.slane %v2498, 1
        %v2500 = vadd.f32 %v2498, %v2499
        %v2501 = vadd.f32 %v2402, %v2403
        %v2502 = vadd.f32 %v2501, %v2404
        %v2503 = vadd.f32 %v2502, %v2405
        %v2504 = vadd.f32 %v2503, %v2406
        %v2505 = vadd.f32 %v2504, %v2407
        %v2506 = vadd.f32 %v2505, %v2408
        %v2507 = vadd.f32 %v2506, %v2409
        %v2508 = vrot.slane %v2507, 4
        %v2509 = vadd.f32 %v2507, %v2508
        %v2510 = vrot.slane %v2509, 2
        %v2511 = vadd.f32 %v2509, %v2510
        %v2512 = vrot.slane %v2511, 1
        %v2513 = vadd.f32 %v2511, %v2512
        %v2514 = vmul.f32 %v2422, %v2422
        %v2515 = vmul.f32 %v2435, %v2435
        %v2516 = vmul.f32 %v2448, %v2448
        %v2517 = vmul.f32 %v2461, %v2461
        %v2518 = vmul.f32 %v2474, %v2474
        %v2519 = vmul.f32 %v2487, %v2487
        %v2520 = vmul.f32 %v2500, %v2500
        %v2521 = vmul.f32 %v2513, %v2513
        %2522 = vadd.xlane.f32.xlu0 %v2514
        %v2523 = vpop.xlane.xlu0 %2522
        %2524 = vadd.xlane.f32.xlu0 %v2515
        %v2525 = vpop.xlane.xlu0 %2524
        %2526 = vadd.xlane.f32.xlu0 %v2516
        %v2527 = vpop.xlane.xlu0 %2526
        %2528 = vadd.xlane.f32.xlu0 %v2517
        %v2529 = vpop.xlane.xlu0 %2528
        %2530 = vadd.xlane.f32.xlu0 %v2518
        %v2531 = vpop.xlane.xlu0 %2530
        %2532 = vadd.xlane.f32.xlu0 %v2519
        %v2533 = vpop.xlane.xlu0 %2532
        %2534 = vadd.xlane.f32.xlu0 %v2520
        %v2535 = vpop.xlane.xlu0 %2534
        %2536 = vadd.xlane.f32.xlu0 %v2521
        %v2537 = vpop.xlane.xlu0 %2536
        %v2538 = vadd.f32 %v2523, 1e-08
        %v2539 = vadd.f32 %v2525, 1e-08
        %v2540 = vadd.f32 %v2527, 1e-08
        %v2541 = vadd.f32 %v2529, 1e-08
        %v2542 = vadd.f32 %v2531, 1e-08
        %v2543 = vadd.f32 %v2533, 1e-08
        %v2544 = vadd.f32 %v2535, 1e-08
        %v2545 = vadd.f32 %v2537, 1e-08
        %v2546 = vrsqrt.pop %v2538
        %v2547 = vrsqrt.pop %v2539
        %v2548 = vrsqrt.pop %v2540
        %v2549 = vrsqrt.pop %v2541
        %v2550 = vrsqrt.pop %v2542
        %v2551 = vrsqrt.pop %v2543
        %v2552 = vrsqrt.pop %v2544
        %v2553 = vrsqrt.pop %v2545
        %v2554 = vmul.f32 %v2523, %v2546
        %v2555 = vmul.f32 %v2525, %v2547
        %v2556 = vmul.f32 %v2527, %v2548
        %v2557 = vmul.f32 %v2529, %v2549
        %v2558 = vmul.f32 %v2531, %v2550
        %v2559 = vmul.f32 %v2533, %v2551
        %v2560 = vmul.f32 %v2535, %v2552
        %v2561 = vmul.f32 %v2537, %v2553
        %v2562 = vadd.f32 %v2523, 1.0
        %v2563 = vadd.f32 %v2525, 1.0
        %v2564 = vadd.f32 %v2527, 1.0
        %v2565 = vadd.f32 %v2529, 1.0
        %v2566 = vadd.f32 %v2531, 1.0
        %v2567 = vadd.f32 %v2533, 1.0
        %v2568 = vadd.f32 %v2535, 1.0
        %v2569 = vadd.f32 %v2537, 1.0
        %v2570 = vrcp.pop %v2562
        %v2571 = vrcp.pop %v2563
        %v2572 = vrcp.pop %v2564
        %v2573 = vrcp.pop %v2565
        %v2574 = vrcp.pop %v2566
        %v2575 = vrcp.pop %v2567
        %v2576 = vrcp.pop %v2568
        %v2577 = vrcp.pop %v2569
        %v2578 = vmul.f32 %v2554, %v2570
        %v2579 = vmul.f32 %v2555, %v2571
        %v2580 = vmul.f32 %v2556, %v2572
        %v2581 = vmul.f32 %v2557, %v2573
        %v2582 = vmul.f32 %v2558, %v2574
        %v2583 = vmul.f32 %v2559, %v2575
        %v2584 = vmul.f32 %v2560, %v2576
        %v2585 = vmul.f32 %v2561, %v2577
        %v2586 = vmul.f32 %v2578, %v2422
        %v2587 = vmul.f32 %v2579, %v2435
        %v2588 = vmul.f32 %v2580, %v2448
        %v2589 = vmul.f32 %v2581, %v2461
        %v2590 = vmul.f32 %v2582, %v2474
        %v2591 = vmul.f32 %v2583, %v2487
        %v2592 = vmul.f32 %v2584, %v2500
        %v2593 = vmul.f32 %v2585, %v2513
        %v2594 = vmul.f32 %v2586, %v2281
        %v2595 = vmul.f32 %v2586, %v2282
        %v2596 = vmul.f32 %v2586, %v2283
        %v2597 = vmul.f32 %v2586, %v2284
        %v2598 = vmul.f32 %v2586, %v2285
        %v2599 = vmul.f32 %v2586, %v2286
        %v2600 = vmul.f32 %v2586, %v2287
        %v2601 = vmul.f32 %v2586, %v2288
        %v2602 = vmul.f32 %v2587, %v2289
        %v2603 = vmul.f32 %v2587, %v2290
        %v2604 = vmul.f32 %v2587, %v2291
        %v2605 = vmul.f32 %v2587, %v2292
        %v2606 = vmul.f32 %v2587, %v2293
        %v2607 = vmul.f32 %v2587, %v2294
        %v2608 = vmul.f32 %v2587, %v2295
        %v2609 = vmul.f32 %v2587, %v2296
        %v2610 = vmul.f32 %v2588, %v2297
        %v2611 = vmul.f32 %v2588, %v2298
        %v2612 = vmul.f32 %v2588, %v2299
        %v2613 = vmul.f32 %v2588, %v2300
        %v2614 = vmul.f32 %v2588, %v2301
        %v2615 = vmul.f32 %v2588, %v2302
        %v2616 = vmul.f32 %v2588, %v2303
        %v2617 = vmul.f32 %v2588, %v2304
        %v2618 = vmul.f32 %v2589, %v2305
        %v2619 = vmul.f32 %v2589, %v2306
        %v2620 = vmul.f32 %v2589, %v2307
        %v2621 = vmul.f32 %v2589, %v2308
        %v2622 = vmul.f32 %v2589, %v2309
        %v2623 = vmul.f32 %v2589, %v2310
        %v2624 = vmul.f32 %v2589, %v2311
        %v2625 = vmul.f32 %v2589, %v2312
        %v2626 = vmul.f32 %v2590, %v2313
        %v2627 = vmul.f32 %v2590, %v2314
        %v2628 = vmul.f32 %v2590, %v2315
        %v2629 = vmul.f32 %v2590, %v2316
        %v2630 = vmul.f32 %v2590, %v2317
        %v2631 = vmul.f32 %v2590, %v2318
        %v2632 = vmul.f32 %v2590, %v2319
        %v2633 = vmul.f32 %v2590, %v2320
        %v2634 = vmul.f32 %v2591, %v2321
        %v2635 = vmul.f32 %v2591, %v2322
        %v2636 = vmul.f32 %v2591, %v2323
        %v2637 = vmul.f32 %v2591, %v2324
        %v2638 = vmul.f32 %v2591, %v2325
        %v2639 = vmul.f32 %v2591, %v2326
        %v2640 = vmul.f32 %v2591, %v2327
        %v2641 = vmul.f32 %v2591, %v2328
        %v2642 = vmul.f32 %v2592, %v2329
        %v2643 = vmul.f32 %v2592, %v2330
        %v2644 = vmul.f32 %v2592, %v2331
        %v2645 = vmul.f32 %v2592, %v2332
        %v2646 = vmul.f32 %v2592, %v2333
        %v2647 = vmul.f32 %v2592, %v2334
        %v2648 = vmul.f32 %v2592, %v2335
        %v2649 = vmul.f32 %v2592, %v2336
        %v2650 = vmul.f32 %v2593, %v2337
        %v2651 = vmul.f32 %v2593, %v2338
        %v2652 = vmul.f32 %v2593, %v2339
        %v2653 = vmul.f32 %v2593, %v2340
        %v2654 = vmul.f32 %v2593, %v2341
        %v2655 = vmul.f32 %v2593, %v2342
        %v2656 = vmul.f32 %v2593, %v2343
        %v2657 = vmul.f32 %v2593, %v2344
        %2658 = vadd.xlane.f32.xlu0 %v2594
        %v2659 = vpop.xlane.xlu0 %2658
        %2660 = vadd.xlane.f32.xlu0 %v2595
        %v2661 = vpop.xlane.xlu0 %2660
        %2662 = vadd.xlane.f32.xlu0 %v2596
        %v2663 = vpop.xlane.xlu0 %2662
        %2664 = vadd.xlane.f32.xlu0 %v2597
        %v2665 = vpop.xlane.xlu0 %2664
        %2666 = vadd.xlane.f32.xlu0 %v2598
        %v2667 = vpop.xlane.xlu0 %2666
        %2668 = vadd.xlane.f32.xlu0 %v2599
        %v2669 = vpop.xlane.xlu0 %2668
        %2670 = vadd.xlane.f32.xlu0 %v2600
        %v2671 = vpop.xlane.xlu0 %2670
        %2672 = vadd.xlane.f32.xlu0 %v2601
        %v2673 = vpop.xlane.xlu0 %2672
        %2674 = vadd.xlane.f32.xlu0 %v2602
        %v2675 = vpop.xlane.xlu0 %2674
        %2676 = vadd.xlane.f32.xlu0 %v2603
        %v2677 = vpop.xlane.xlu0 %2676
        %2678 = vadd.xlane.f32.xlu0 %v2604
        %v2679 = vpop.xlane.xlu0 %2678
        %2680 = vadd.xlane.f32.xlu0 %v2605
        %v2681 = vpop.xlane.xlu0 %2680
        %2682 = vadd.xlane.f32.xlu0 %v2606
        %v2683 = vpop.xlane.xlu0 %2682
        %2684 = vadd.xlane.f32.xlu0 %v2607
        %v2685 = vpop.xlane.xlu0 %2684
        %2686 = vadd.xlane.f32.xlu0 %v2608
        %v2687 = vpop.xlane.xlu0 %2686
        %2688 = vadd.xlane.f32.xlu0 %v2609
        %v2689 = vpop.xlane.xlu0 %2688
        %2690 = vadd.xlane.f32.xlu0 %v2610
        %v2691 = vpop.xlane.xlu0 %2690
        %2692 = vadd.xlane.f32.xlu0 %v2611
        %v2693 = vpop.xlane.xlu0 %2692
        %2694 = vadd.xlane.f32.xlu0 %v2612
        %v2695 = vpop.xlane.xlu0 %2694
        %2696 = vadd.xlane.f32.xlu0 %v2613
        %v2697 = vpop.xlane.xlu0 %2696
        %2698 = vadd.xlane.f32.xlu0 %v2614
        %v2699 = vpop.xlane.xlu0 %2698
        %2700 = vadd.xlane.f32.xlu0 %v2615
        %v2701 = vpop.xlane.xlu0 %2700
        %2702 = vadd.xlane.f32.xlu0 %v2616
        %v2703 = vpop.xlane.xlu0 %2702
        %2704 = vadd.xlane.f32.xlu0 %v2617
        %v2705 = vpop.xlane.xlu0 %2704
        %2706 = vadd.xlane.f32.xlu0 %v2618
        %v2707 = vpop.xlane.xlu0 %2706
        %2708 = vadd.xlane.f32.xlu0 %v2619
        %v2709 = vpop.xlane.xlu0 %2708
        %2710 = vadd.xlane.f32.xlu0 %v2620
        %v2711 = vpop.xlane.xlu0 %2710
        %2712 = vadd.xlane.f32.xlu0 %v2621
        %v2713 = vpop.xlane.xlu0 %2712
        %2714 = vadd.xlane.f32.xlu0 %v2622
        %v2715 = vpop.xlane.xlu0 %2714
        %2716 = vadd.xlane.f32.xlu0 %v2623
        %v2717 = vpop.xlane.xlu0 %2716
        %2718 = vadd.xlane.f32.xlu0 %v2624
        %v2719 = vpop.xlane.xlu0 %2718
        %2720 = vadd.xlane.f32.xlu0 %v2625
        %v2721 = vpop.xlane.xlu0 %2720
        %2722 = vadd.xlane.f32.xlu0 %v2626
        %v2723 = vpop.xlane.xlu0 %2722
        %2724 = vadd.xlane.f32.xlu0 %v2627
        %v2725 = vpop.xlane.xlu0 %2724
        %2726 = vadd.xlane.f32.xlu0 %v2628
        %v2727 = vpop.xlane.xlu0 %2726
        %2728 = vadd.xlane.f32.xlu0 %v2629
        %v2729 = vpop.xlane.xlu0 %2728
        %2730 = vadd.xlane.f32.xlu0 %v2630
        %v2731 = vpop.xlane.xlu0 %2730
        %2732 = vadd.xlane.f32.xlu0 %v2631
        %v2733 = vpop.xlane.xlu0 %2732
        %2734 = vadd.xlane.f32.xlu0 %v2632
        %v2735 = vpop.xlane.xlu0 %2734
        %2736 = vadd.xlane.f32.xlu0 %v2633
        %v2737 = vpop.xlane.xlu0 %2736
        %2738 = vadd.xlane.f32.xlu0 %v2634
        %v2739 = vpop.xlane.xlu0 %2738
        %2740 = vadd.xlane.f32.xlu0 %v2635
        %v2741 = vpop.xlane.xlu0 %2740
        %2742 = vadd.xlane.f32.xlu0 %v2636
        %v2743 = vpop.xlane.xlu0 %2742
        %2744 = vadd.xlane.f32.xlu0 %v2637
        %v2745 = vpop.xlane.xlu0 %2744
        %2746 = vadd.xlane.f32.xlu0 %v2638
        %v2747 = vpop.xlane.xlu0 %2746
        %2748 = vadd.xlane.f32.xlu0 %v2639
        %v2749 = vpop.xlane.xlu0 %2748
        %2750 = vadd.xlane.f32.xlu0 %v2640
        %v2751 = vpop.xlane.xlu0 %2750
        %2752 = vadd.xlane.f32.xlu0 %v2641
        %v2753 = vpop.xlane.xlu0 %2752
        %2754 = vadd.xlane.f32.xlu0 %v2642
        %v2755 = vpop.xlane.xlu0 %2754
        %2756 = vadd.xlane.f32.xlu0 %v2643
        %v2757 = vpop.xlane.xlu0 %2756
        %2758 = vadd.xlane.f32.xlu0 %v2644
        %v2759 = vpop.xlane.xlu0 %2758
        %2760 = vadd.xlane.f32.xlu0 %v2645
        %v2761 = vpop.xlane.xlu0 %2760
        %2762 = vadd.xlane.f32.xlu0 %v2646
        %v2763 = vpop.xlane.xlu0 %2762
        %2764 = vadd.xlane.f32.xlu0 %v2647
        %v2765 = vpop.xlane.xlu0 %2764
        %2766 = vadd.xlane.f32.xlu0 %v2648
        %v2767 = vpop.xlane.xlu0 %2766
        %2768 = vadd.xlane.f32.xlu0 %v2649
        %v2769 = vpop.xlane.xlu0 %2768
        %2770 = vadd.xlane.f32.xlu0 %v2650
        %v2771 = vpop.xlane.xlu0 %2770
        %2772 = vadd.xlane.f32.xlu0 %v2651
        %v2773 = vpop.xlane.xlu0 %2772
        %2774 = vadd.xlane.f32.xlu0 %v2652
        %v2775 = vpop.xlane.xlu0 %2774
        %2776 = vadd.xlane.f32.xlu0 %v2653
        %v2777 = vpop.xlane.xlu0 %2776
        %2778 = vadd.xlane.f32.xlu0 %v2654
        %v2779 = vpop.xlane.xlu0 %2778
        %2780 = vadd.xlane.f32.xlu0 %v2655
        %v2781 = vpop.xlane.xlu0 %2780
        %2782 = vadd.xlane.f32.xlu0 %v2656
        %v2783 = vpop.xlane.xlu0 %2782
        %2784 = vadd.xlane.f32.xlu0 %v2657
        %v2785 = vpop.xlane.xlu0 %2784
        %v2786 = vadd.f32 %v2659, 0.0
        %v2787 = vadd.f32 %v2661, 0.0
        %v2788 = vadd.f32 %v2663, 0.0
        %v2789 = vadd.f32 %v2665, 0.0
        %v2790 = vadd.f32 %v2667, 0.0
        %v2791 = vadd.f32 %v2669, 0.0
        %v2792 = vadd.f32 %v2671, 0.0
        %v2793 = vadd.f32 %v2673, 0.0
        %v2794 = vadd.f32 %v2675, 0.0
        %v2795 = vadd.f32 %v2677, 0.0
        %v2796 = vadd.f32 %v2679, 0.0
        %v2797 = vadd.f32 %v2681, 0.0
        %v2798 = vadd.f32 %v2683, 0.0
        %v2799 = vadd.f32 %v2685, 0.0
        %v2800 = vadd.f32 %v2687, 0.0
        %v2801 = vadd.f32 %v2689, 0.0
        %v2802 = vadd.f32 %v2691, 0.0
        %v2803 = vadd.f32 %v2693, 0.0
        %v2804 = vadd.f32 %v2695, 0.0
        %v2805 = vadd.f32 %v2697, 0.0
        %v2806 = vadd.f32 %v2699, 0.0
        %v2807 = vadd.f32 %v2701, 0.0
        %v2808 = vadd.f32 %v2703, 0.0
        %v2809 = vadd.f32 %v2705, 0.0
        %v2810 = vadd.f32 %v2707, 0.0
        %v2811 = vadd.f32 %v2709, 0.0
        %v2812 = vadd.f32 %v2711, 0.0
        %v2813 = vadd.f32 %v2713, 0.0
        %v2814 = vadd.f32 %v2715, 0.0
        %v2815 = vadd.f32 %v2717, 0.0
        %v2816 = vadd.f32 %v2719, 0.0
        %v2817 = vadd.f32 %v2721, 0.0
        %v2818 = vadd.f32 %v2723, 0.0
        %v2819 = vadd.f32 %v2725, 0.0
        %v2820 = vadd.f32 %v2727, 0.0
        %v2821 = vadd.f32 %v2729, 0.0
        %v2822 = vadd.f32 %v2731, 0.0
        %v2823 = vadd.f32 %v2733, 0.0
        %v2824 = vadd.f32 %v2735, 0.0
        %v2825 = vadd.f32 %v2737, 0.0
        %v2826 = vadd.f32 %v2739, 0.0
        %v2827 = vadd.f32 %v2741, 0.0
        %v2828 = vadd.f32 %v2743, 0.0
        %v2829 = vadd.f32 %v2745, 0.0
        %v2830 = vadd.f32 %v2747, 0.0
        %v2831 = vadd.f32 %v2749, 0.0
        %v2832 = vadd.f32 %v2751, 0.0
        %v2833 = vadd.f32 %v2753, 0.0
        %v2834 = vadd.f32 %v2755, 0.0
        %v2835 = vadd.f32 %v2757, 0.0
        %v2836 = vadd.f32 %v2759, 0.0
        %v2837 = vadd.f32 %v2761, 0.0
        %v2838 = vadd.f32 %v2763, 0.0
        %v2839 = vadd.f32 %v2765, 0.0
        %v2840 = vadd.f32 %v2767, 0.0
        %v2841 = vadd.f32 %v2769, 0.0
        %v2842 = vadd.f32 %v2771, 0.0
        %v2843 = vadd.f32 %v2773, 0.0
        %v2844 = vadd.f32 %v2775, 0.0
        %v2845 = vadd.f32 %v2777, 0.0
        %v2846 = vadd.f32 %v2779, 0.0
        %v2847 = vadd.f32 %v2781, 0.0
        %v2848 = vadd.f32 %v2783, 0.0
        %v2849 = vadd.f32 %v2785, 0.0
        %v2850 = vmax.f32 %v2786, %v2794
        %v2851 = vmax.f32 %v2787, %v2795
        %v2852 = vmax.f32 %v2788, %v2796
        %v2853 = vmax.f32 %v2789, %v2797
        %v2854 = vmax.f32 %v2790, %v2798
        %v2855 = vmax.f32 %v2791, %v2799
        %v2856 = vmax.f32 %v2792, %v2800
        %v2857 = vmax.f32 %v2793, %v2801
        %v2858 = vmax.f32 %v2802, %v2810
        %v2859 = vmax.f32 %v2803, %v2811
        %v2860 = vmax.f32 %v2804, %v2812
        %v2861 = vmax.f32 %v2805, %v2813
        %v2862 = vmax.f32 %v2806, %v2814
        %v2863 = vmax.f32 %v2807, %v2815
        %v2864 = vmax.f32 %v2808, %v2816
        %v2865 = vmax.f32 %v2809, %v2817
        %v2866 = vmax.f32 %v2818, %v2826
        %v2867 = vmax.f32 %v2819, %v2827
        %v2868 = vmax.f32 %v2820, %v2828
        %v2869 = vmax.f32 %v2821, %v2829
        %v2870 = vmax.f32 %v2822, %v2830
        %v2871 = vmax.f32 %v2823, %v2831
        %v2872 = vmax.f32 %v2824, %v2832
        %v2873 = vmax.f32 %v2825, %v2833
        %v2874 = vmax.f32 %v2834, %v2842
        %v2875 = vmax.f32 %v2835, %v2843
        %v2876 = vmax.f32 %v2836, %v2844
        %v2877 = vmax.f32 %v2837, %v2845
        %v2878 = vmax.f32 %v2838, %v2846
        %v2879 = vmax.f32 %v2839, %v2847
        %v2880 = vmax.f32 %v2840, %v2848
        %v2881 = vmax.f32 %v2841, %v2849
        %v2882 = vsub.f32 %v2786, %v2850
        %v2883 = vsub.f32 %v2787, %v2851
        %v2884 = vsub.f32 %v2788, %v2852
        %v2885 = vsub.f32 %v2789, %v2853
        %v2886 = vsub.f32 %v2790, %v2854
        %v2887 = vsub.f32 %v2791, %v2855
        %v2888 = vsub.f32 %v2792, %v2856
        %v2889 = vsub.f32 %v2793, %v2857
        %v2890 = vsub.f32 %v2794, %v2850
        %v2891 = vsub.f32 %v2795, %v2851
        %v2892 = vsub.f32 %v2796, %v2852
        %v2893 = vsub.f32 %v2797, %v2853
        %v2894 = vsub.f32 %v2798, %v2854
        %v2895 = vsub.f32 %v2799, %v2855
        %v2896 = vsub.f32 %v2800, %v2856
        %v2897 = vsub.f32 %v2801, %v2857
        %v2898 = vsub.f32 %v2802, %v2858
        %v2899 = vsub.f32 %v2803, %v2859
        %v2900 = vsub.f32 %v2804, %v2860
        %v2901 = vsub.f32 %v2805, %v2861
        %v2902 = vsub.f32 %v2806, %v2862
        %v2903 = vsub.f32 %v2807, %v2863
        %v2904 = vsub.f32 %v2808, %v2864
        %v2905 = vsub.f32 %v2809, %v2865
        %v2906 = vsub.f32 %v2810, %v2858
        %v2907 = vsub.f32 %v2811, %v2859
        %v2908 = vsub.f32 %v2812, %v2860
        %v2909 = vsub.f32 %v2813, %v2861
        %v2910 = vsub.f32 %v2814, %v2862
        %v2911 = vsub.f32 %v2815, %v2863
        %v2912 = vsub.f32 %v2816, %v2864
        %v2913 = vsub.f32 %v2817, %v2865
        %v2914 = vsub.f32 %v2818, %v2866
        %v2915 = vsub.f32 %v2819, %v2867
        %v2916 = vsub.f32 %v2820, %v2868
        %v2917 = vsub.f32 %v2821, %v2869
        %v2918 = vsub.f32 %v2822, %v2870
        %v2919 = vsub.f32 %v2823, %v2871
        %v2920 = vsub.f32 %v2824, %v2872
        %v2921 = vsub.f32 %v2825, %v2873
        %v2922 = vsub.f32 %v2826, %v2866
        %v2923 = vsub.f32 %v2827, %v2867
        %v2924 = vsub.f32 %v2828, %v2868
        %v2925 = vsub.f32 %v2829, %v2869
        %v2926 = vsub.f32 %v2830, %v2870
        %v2927 = vsub.f32 %v2831, %v2871
        %v2928 = vsub.f32 %v2832, %v2872
        %v2929 = vsub.f32 %v2833, %v2873
        %v2930 = vsub.f32 %v2834, %v2874
        %v2931 = vsub.f32 %v2835, %v2875
        %v2932 = vsub.f32 %v2836, %v2876
        %v2933 = vsub.f32 %v2837, %v2877
        %v2934 = vsub.f32 %v2838, %v2878
        %v2935 = vsub.f32 %v2839, %v2879
        %v2936 = vsub.f32 %v2840, %v2880
        %v2937 = vsub.f32 %v2841, %v2881
        %v2938 = vsub.f32 %v2842, %v2874
        %v2939 = vsub.f32 %v2843, %v2875
        %v2940 = vsub.f32 %v2844, %v2876
        %v2941 = vsub.f32 %v2845, %v2877
        %v2942 = vsub.f32 %v2846, %v2878
        %v2943 = vsub.f32 %v2847, %v2879
        %v2944 = vsub.f32 %v2848, %v2880
        %v2945 = vsub.f32 %v2849, %v2881
        %v2946 = vmul.f32 %v2882, 1.442695
        %v2947 = vpow.pop %v2946
        %v2948 = vmul.f32 %v2883, 1.442695
        %v2949 = vpow.pop %v2948
        %v2950 = vmul.f32 %v2884, 1.442695
        %v2951 = vpow.pop %v2950
        %v2952 = vmul.f32 %v2885, 1.442695
        %v2953 = vpow.pop %v2952
        %v2954 = vmul.f32 %v2886, 1.442695
        %v2955 = vpow.pop %v2954
        %v2956 = vmul.f32 %v2887, 1.442695
        %v2957 = vpow.pop %v2956
        %v2958 = vmul.f32 %v2888, 1.442695
        %v2959 = vpow.pop %v2958
        %v2960 = vmul.f32 %v2889, 1.442695
        %v2961 = vpow.pop %v2960
        %v2962 = vmul.f32 %v2890, 1.442695
        %v2963 = vpow.pop %v2962
        %v2964 = vmul.f32 %v2891, 1.442695
        %v2965 = vpow.pop %v2964
        %v2966 = vmul.f32 %v2892, 1.442695
        %v2967 = vpow.pop %v2966
        %v2968 = vmul.f32 %v2893, 1.442695
        %v2969 = vpow.pop %v2968
        %v2970 = vmul.f32 %v2894, 1.442695
        %v2971 = vpow.pop %v2970
        %v2972 = vmul.f32 %v2895, 1.442695
        %v2973 = vpow.pop %v2972
        %v2974 = vmul.f32 %v2896, 1.442695
        %v2975 = vpow.pop %v2974
        %v2976 = vmul.f32 %v2897, 1.442695
        %v2977 = vpow.pop %v2976
        %v2978 = vmul.f32 %v2898, 1.442695
        %v2979 = vpow.pop %v2978
        %v2980 = vmul.f32 %v2899, 1.442695
        %v2981 = vpow.pop %v2980
        %v2982 = vmul.f32 %v2900, 1.442695
        %v2983 = vpow.pop %v2982
        %v2984 = vmul.f32 %v2901, 1.442695
        %v2985 = vpow.pop %v2984
        %v2986 = vmul.f32 %v2902, 1.442695
        %v2987 = vpow.pop %v2986
        %v2988 = vmul.f32 %v2903, 1.442695
        %v2989 = vpow.pop %v2988
        %v2990 = vmul.f32 %v2904, 1.442695
        %v2991 = vpow.pop %v2990
        %v2992 = vmul.f32 %v2905, 1.442695
        %v2993 = vpow.pop %v2992
        %v2994 = vmul.f32 %v2906, 1.442695
        %v2995 = vpow.pop %v2994
        %v2996 = vmul.f32 %v2907, 1.442695
        %v2997 = vpow.pop %v2996
        %v2998 = vmul.f32 %v2908, 1.442695
        %v2999 = vpow.pop %v2998
        %v3000 = vmul.f32 %v2909, 1.442695
        %v3001 = vpow.pop %v3000
        %v3002 = vmul.f32 %v2910, 1.442695
        %v3003 = vpow.pop %v3002
        %v3004 = vmul.f32 %v2911, 1.442695
        %v3005 = vpow.pop %v3004
        %v3006 = vmul.f32 %v2912, 1.442695
        %v3007 = vpow.pop %v3006
        %v3008 = vmul.f32 %v2913, 1.442695
        %v3009 = vpow.pop %v3008
        %v3010 = vmul.f32 %v2914, 1.442695
        %v3011 = vpow.pop %v3010
        %v3012 = vmul.f32 %v2915, 1.442695
        %v3013 = vpow.pop %v3012
        %v3014 = vmul.f32 %v2916, 1.442695
        %v3015 = vpow.pop %v3014
        %v3016 = vmul.f32 %v2917, 1.442695
        %v3017 = vpow.pop %v3016
        %v3018 = vmul.f32 %v2918, 1.442695
        %v3019 = vpow.pop %v3018
        %v3020 = vmul.f32 %v2919, 1.442695
        %v3021 = vpow.pop %v3020
        %v3022 = vmul.f32 %v2920, 1.442695
        %v3023 = vpow.pop %v3022
        %v3024 = vmul.f32 %v2921, 1.442695
        %v3025 = vpow.pop %v3024
        %v3026 = vmul.f32 %v2922, 1.442695
        %v3027 = vpow.pop %v3026
        %v3028 = vmul.f32 %v2923, 1.442695
        %v3029 = vpow.pop %v3028
        %v3030 = vmul.f32 %v2924, 1.442695
        %v3031 = vpow.pop %v3030
        %v3032 = vmul.f32 %v2925, 1.442695
        %v3033 = vpow.pop %v3032
        %v3034 = vmul.f32 %v2926, 1.442695
        %v3035 = vpow.pop %v3034
        %v3036 = vmul.f32 %v2927, 1.442695
        %v3037 = vpow.pop %v3036
        %v3038 = vmul.f32 %v2928, 1.442695
        %v3039 = vpow.pop %v3038
        %v3040 = vmul.f32 %v2929, 1.442695
        %v3041 = vpow.pop %v3040
        %v3042 = vmul.f32 %v2930, 1.442695
        %v3043 = vpow.pop %v3042
        %v3044 = vmul.f32 %v2931, 1.442695
        %v3045 = vpow.pop %v3044
        %v3046 = vmul.f32 %v2932, 1.442695
        %v3047 = vpow.pop %v3046
        %v3048 = vmul.f32 %v2933, 1.442695
        %v3049 = vpow.pop %v3048
        %v3050 = vmul.f32 %v2934, 1.442695
        %v3051 = vpow.pop %v3050
        %v3052 = vmul.f32 %v2935, 1.442695
        %v3053 = vpow.pop %v3052
        %v3054 = vmul.f32 %v2936, 1.442695
        %v3055 = vpow.pop %v3054
        %v3056 = vmul.f32 %v2937, 1.442695
        %v3057 = vpow.pop %v3056
        %v3058 = vmul.f32 %v2938, 1.442695
        %v3059 = vpow.pop %v3058
        %v3060 = vmul.f32 %v2939, 1.442695
        %v3061 = vpow.pop %v3060
        %v3062 = vmul.f32 %v2940, 1.442695
        %v3063 = vpow.pop %v3062
        %v3064 = vmul.f32 %v2941, 1.442695
        %v3065 = vpow.pop %v3064
        %v3066 = vmul.f32 %v2942, 1.442695
        %v3067 = vpow.pop %v3066
        %v3068 = vmul.f32 %v2943, 1.442695
        %v3069 = vpow.pop %v3068
        %v3070 = vmul.f32 %v2944, 1.442695
        %v3071 = vpow.pop %v3070
        %v3072 = vmul.f32 %v2945, 1.442695
        %v3073 = vpow.pop %v3072
        %v3074 = vadd.f32 %v2947, %v2963
        %v3075 = vadd.f32 %v2949, %v2965
        %v3076 = vadd.f32 %v2951, %v2967
        %v3077 = vadd.f32 %v2953, %v2969
        %v3078 = vadd.f32 %v2955, %v2971
        %v3079 = vadd.f32 %v2957, %v2973
        %v3080 = vadd.f32 %v2959, %v2975
        %v3081 = vadd.f32 %v2961, %v2977
        %v3082 = vadd.f32 %v2979, %v2995
        %v3083 = vadd.f32 %v2981, %v2997
        %v3084 = vadd.f32 %v2983, %v2999
        %v3085 = vadd.f32 %v2985, %v3001
        %v3086 = vadd.f32 %v2987, %v3003
        %v3087 = vadd.f32 %v2989, %v3005
        %v3088 = vadd.f32 %v2991, %v3007
        %v3089 = vadd.f32 %v2993, %v3009
        %v3090 = vadd.f32 %v3011, %v3027
        %v3091 = vadd.f32 %v3013, %v3029
        %v3092 = vadd.f32 %v3015, %v3031
        %v3093 = vadd.f32 %v3017, %v3033
        %v3094 = vadd.f32 %v3019, %v3035
        %v3095 = vadd.f32 %v3021, %v3037
        %v3096 = vadd.f32 %v3023, %v3039
        %v3097 = vadd.f32 %v3025, %v3041
        %v3098 = vadd.f32 %v3043, %v3059
        %v3099 = vadd.f32 %v3045, %v3061
        %v3100 = vadd.f32 %v3047, %v3063
        %v3101 = vadd.f32 %v3049, %v3065
        %v3102 = vadd.f32 %v3051, %v3067
        %v3103 = vadd.f32 %v3053, %v3069
        %v3104 = vadd.f32 %v3055, %v3071
        %v3105 = vadd.f32 %v3057, %v3073
        %v3106 = vrcp.pop %v3074
        %v3107 = vrcp.pop %v3075
        %v3108 = vrcp.pop %v3076
        %v3109 = vrcp.pop %v3077
        %v3110 = vrcp.pop %v3078
        %v3111 = vrcp.pop %v3079
        %v3112 = vrcp.pop %v3080
        %v3113 = vrcp.pop %v3081
        %v3114 = vrcp.pop %v3082
        %v3115 = vrcp.pop %v3083
        %v3116 = vrcp.pop %v3084
        %v3117 = vrcp.pop %v3085
        %v3118 = vrcp.pop %v3086
        %v3119 = vrcp.pop %v3087
        %v3120 = vrcp.pop %v3088
        %v3121 = vrcp.pop %v3089
        %v3122 = vrcp.pop %v3090
        %v3123 = vrcp.pop %v3091
        %v3124 = vrcp.pop %v3092
        %v3125 = vrcp.pop %v3093
        %v3126 = vrcp.pop %v3094
        %v3127 = vrcp.pop %v3095
        %v3128 = vrcp.pop %v3096
        %v3129 = vrcp.pop %v3097
        %v3130 = vrcp.pop %v3098
        %v3131 = vrcp.pop %v3099
        %v3132 = vrcp.pop %v3100
        %v3133 = vrcp.pop %v3101
        %v3134 = vrcp.pop %v3102
        %v3135 = vrcp.pop %v3103
        %v3136 = vrcp.pop %v3104
        %v3137 = vrcp.pop %v3105
        %v3138 = vmul.f32 %v2947, %v3106
        %v3139 = vmul.f32 %v2949, %v3107
        %v3140 = vmul.f32 %v2951, %v3108
        %v3141 = vmul.f32 %v2953, %v3109
        %v3142 = vmul.f32 %v2955, %v3110
        %v3143 = vmul.f32 %v2957, %v3111
        %v3144 = vmul.f32 %v2959, %v3112
        %v3145 = vmul.f32 %v2961, %v3113
        %v3146 = vmul.f32 %v2963, %v3106
        %v3147 = vmul.f32 %v2965, %v3107
        %v3148 = vmul.f32 %v2967, %v3108
        %v3149 = vmul.f32 %v2969, %v3109
        %v3150 = vmul.f32 %v2971, %v3110
        %v3151 = vmul.f32 %v2973, %v3111
        %v3152 = vmul.f32 %v2975, %v3112
        %v3153 = vmul.f32 %v2977, %v3113
        %v3154 = vmul.f32 %v2979, %v3114
        %v3155 = vmul.f32 %v2981, %v3115
        %v3156 = vmul.f32 %v2983, %v3116
        %v3157 = vmul.f32 %v2985, %v3117
        %v3158 = vmul.f32 %v2987, %v3118
        %v3159 = vmul.f32 %v2989, %v3119
        %v3160 = vmul.f32 %v2991, %v3120
        %v3161 = vmul.f32 %v2993, %v3121
        %v3162 = vmul.f32 %v2995, %v3114
        %v3163 = vmul.f32 %v2997, %v3115
        %v3164 = vmul.f32 %v2999, %v3116
        %v3165 = vmul.f32 %v3001, %v3117
        %v3166 = vmul.f32 %v3003, %v3118
        %v3167 = vmul.f32 %v3005, %v3119
        %v3168 = vmul.f32 %v3007, %v3120
        %v3169 = vmul.f32 %v3009, %v3121
        %v3170 = vmul.f32 %v3011, %v3122
        %v3171 = vmul.f32 %v3013, %v3123
        %v3172 = vmul.f32 %v3015, %v3124
        %v3173 = vmul.f32 %v3017, %v3125
        %v3174 = vmul.f32 %v3019, %v3126
        %v3175 = vmul.f32 %v3021, %v3127
        %v3176 = vmul.f32 %v3023, %v3128
        %v3177 = vmul.f32 %v3025, %v3129
        %v3178 = vmul.f32 %v3027, %v3122
        %v3179 = vmul.f32 %v3029, %v3123
        %v3180 = vmul.f32 %v3031, %v3124
        %v3181 = vmul.f32 %v3033, %v3125
        %v3182 = vmul.f32 %v3035, %v3126
        %v3183 = vmul.f32 %v3037, %v3127
        %v3184 = vmul.f32 %v3039, %v3128
        %v3185 = vmul.f32 %v3041, %v3129
        %v3186 = vmul.f32 %v3043, %v3130
        %v3187 = vmul.f32 %v3045, %v3131
        %v3188 = vmul.f32 %v3047, %v3132
        %v3189 = vmul.f32 %v3049, %v3133
        %v3190 = vmul.f32 %v3051, %v3134
        %v3191 = vmul.f32 %v3053, %v3135
        %v3192 = vmul.f32 %v3055, %v3136
        %v3193 = vmul.f32 %v3057, %v3137
        %v3194 = vmul.f32 %v3059, %v3130
        %v3195 = vmul.f32 %v3061, %v3131
        %v3196 = vmul.f32 %v3063, %v3132
        %v3197 = vmul.f32 %v3065, %v3133
        %v3198 = vmul.f32 %v3067, %v3134
        %v3199 = vmul.f32 %v3069, %v3135
        %v3200 = vmul.f32 %v3071, %v3136
        %v3201 = vmul.f32 %v3073, %v3137
        %v3202 = vmul.f32 %v3138, %v2281
        %v3203 = vmul.f32 %v3139, %v2282
        %v3204 = vmul.f32 %v3140, %v2283
        %v3205 = vmul.f32 %v3141, %v2284
        %v3206 = vmul.f32 %v3142, %v2285
        %v3207 = vmul.f32 %v3143, %v2286
        %v3208 = vmul.f32 %v3144, %v2287
        %v3209 = vmul.f32 %v3145, %v2288
        %v3210 = vmul.f32 %v3146, %v2289
        %v3211 = vmul.f32 %v3147, %v2290
        %v3212 = vmul.f32 %v3148, %v2291
        %v3213 = vmul.f32 %v3149, %v2292
        %v3214 = vmul.f32 %v3150, %v2293
        %v3215 = vmul.f32 %v3151, %v2294
        %v3216 = vmul.f32 %v3152, %v2295
        %v3217 = vmul.f32 %v3153, %v2296
        %v3218 = vmul.f32 %v3154, %v2297
        %v3219 = vmul.f32 %v3155, %v2298
        %v3220 = vmul.f32 %v3156, %v2299
        %v3221 = vmul.f32 %v3157, %v2300
        %v3222 = vmul.f32 %v3158, %v2301
        %v3223 = vmul.f32 %v3159, %v2302
        %v3224 = vmul.f32 %v3160, %v2303
        %v3225 = vmul.f32 %v3161, %v2304
        %v3226 = vmul.f32 %v3162, %v2305
        %v3227 = vmul.f32 %v3163, %v2306
        %v3228 = vmul.f32 %v3164, %v2307
        %v3229 = vmul.f32 %v3165, %v2308
        %v3230 = vmul.f32 %v3166, %v2309
        %v3231 = vmul.f32 %v3167, %v2310
        %v3232 = vmul.f32 %v3168, %v2311
        %v3233 = vmul.f32 %v3169, %v2312
        %v3234 = vmul.f32 %v3170, %v2313
        %v3235 = vmul.f32 %v3171, %v2314
        %v3236 = vmul.f32 %v3172, %v2315
        %v3237 = vmul.f32 %v3173, %v2316
        %v3238 = vmul.f32 %v3174, %v2317
        %v3239 = vmul.f32 %v3175, %v2318
        %v3240 = vmul.f32 %v3176, %v2319
        %v3241 = vmul.f32 %v3177, %v2320
        %v3242 = vmul.f32 %v3178, %v2321
        %v3243 = vmul.f32 %v3179, %v2322
        %v3244 = vmul.f32 %v3180, %v2323
        %v3245 = vmul.f32 %v3181, %v2324
        %v3246 = vmul.f32 %v3182, %v2325
        %v3247 = vmul.f32 %v3183, %v2326
        %v3248 = vmul.f32 %v3184, %v2327
        %v3249 = vmul.f32 %v3185, %v2328
        %v3250 = vmul.f32 %v3186, %v2329
        %v3251 = vmul.f32 %v3187, %v2330
        %v3252 = vmul.f32 %v3188, %v2331
        %v3253 = vmul.f32 %v3189, %v2332
        %v3254 = vmul.f32 %v3190, %v2333
        %v3255 = vmul.f32 %v3191, %v2334
        %v3256 = vmul.f32 %v3192, %v2335
        %v3257 = vmul.f32 %v3193, %v2336
        %v3258 = vmul.f32 %v3194, %v2337
        %v3259 = vmul.f32 %v3195, %v2338
        %v3260 = vmul.f32 %v3196, %v2339
        %v3261 = vmul.f32 %v3197, %v2340
        %v3262 = vmul.f32 %v3198, %v2341
        %v3263 = vmul.f32 %v3199, %v2342
        %v3264 = vmul.f32 %v3200, %v2343
        %v3265 = vmul.f32 %v3201, %v2344
        %v3266 = vadd.f32 %v3202, %v3203
        %v3267 = vadd.f32 %v3266, %v3204
        %v3268 = vadd.f32 %v3267, %v3205
        %v3269 = vadd.f32 %v3268, %v3206
        %v3270 = vadd.f32 %v3269, %v3207
        %v3271 = vadd.f32 %v3270, %v3208
        %v3272 = vadd.f32 %v3271, %v3209
        %v3273 = vrot.slane %v3272, 4
        %v3274 = vadd.f32 %v3272, %v3273
        %v3275 = vrot.slane %v3274, 2
        %v3276 = vadd.f32 %v3274, %v3275
        %v3277 = vrot.slane %v3276, 1
        %v3278 = vadd.f32 %v3276, %v3277
        %v3279 = vadd.f32 %v3210, %v3211
        %v3280 = vadd.f32 %v3279, %v3212
        %v3281 = vadd.f32 %v3280, %v3213
        %v3282 = vadd.f32 %v3281, %v3214
        %v3283 = vadd.f32 %v3282, %v3215
        %v3284 = vadd.f32 %v3283, %v3216
        %v3285 = vadd.f32 %v3284, %v3217
        %v3286 = vrot.slane %v3285, 4
        %v3287 = vadd.f32 %v3285, %v3286
        %v3288 = vrot.slane %v3287, 2
        %v3289 = vadd.f32 %v3287, %v3288
        %v3290 = vrot.slane %v3289, 1
        %v3291 = vadd.f32 %v3289, %v3290
        %v3292 = vadd.f32 %v3218, %v3219
        %v3293 = vadd.f32 %v3292, %v3220
        %v3294 = vadd.f32 %v3293, %v3221
        %v3295 = vadd.f32 %v3294, %v3222
        %v3296 = vadd.f32 %v3295, %v3223
        %v3297 = vadd.f32 %v3296, %v3224
        %v3298 = vadd.f32 %v3297, %v3225
        %v3299 = vrot.slane %v3298, 4
        %v3300 = vadd.f32 %v3298, %v3299
        %v3301 = vrot.slane %v3300, 2
        %v3302 = vadd.f32 %v3300, %v3301
        %v3303 = vrot.slane %v3302, 1
        %v3304 = vadd.f32 %v3302, %v3303
        %v3305 = vadd.f32 %v3226, %v3227
        %v3306 = vadd.f32 %v3305, %v3228
        %v3307 = vadd.f32 %v3306, %v3229
        %v3308 = vadd.f32 %v3307, %v3230
        %v3309 = vadd.f32 %v3308, %v3231
        %v3310 = vadd.f32 %v3309, %v3232
        %v3311 = vadd.f32 %v3310, %v3233
        %v3312 = vrot.slane %v3311, 4
        %v3313 = vadd.f32 %v3311, %v3312
        %v3314 = vrot.slane %v3313, 2
        %v3315 = vadd.f32 %v3313, %v3314
        %v3316 = vrot.slane %v3315, 1
        %v3317 = vadd.f32 %v3315, %v3316
        %v3318 = vadd.f32 %v3234, %v3235
        %v3319 = vadd.f32 %v3318, %v3236
        %v3320 = vadd.f32 %v3319, %v3237
        %v3321 = vadd.f32 %v3320, %v3238
        %v3322 = vadd.f32 %v3321, %v3239
        %v3323 = vadd.f32 %v3322, %v3240
        %v3324 = vadd.f32 %v3323, %v3241
        %v3325 = vrot.slane %v3324, 4
        %v3326 = vadd.f32 %v3324, %v3325
        %v3327 = vrot.slane %v3326, 2
        %v3328 = vadd.f32 %v3326, %v3327
        %v3329 = vrot.slane %v3328, 1
        %v3330 = vadd.f32 %v3328, %v3329
        %v3331 = vadd.f32 %v3242, %v3243
        %v3332 = vadd.f32 %v3331, %v3244
        %v3333 = vadd.f32 %v3332, %v3245
        %v3334 = vadd.f32 %v3333, %v3246
        %v3335 = vadd.f32 %v3334, %v3247
        %v3336 = vadd.f32 %v3335, %v3248
        %v3337 = vadd.f32 %v3336, %v3249
        %v3338 = vrot.slane %v3337, 4
        %v3339 = vadd.f32 %v3337, %v3338
        %v3340 = vrot.slane %v3339, 2
        %v3341 = vadd.f32 %v3339, %v3340
        %v3342 = vrot.slane %v3341, 1
        %v3343 = vadd.f32 %v3341, %v3342
        %v3344 = vadd.f32 %v3250, %v3251
        %v3345 = vadd.f32 %v3344, %v3252
        %v3346 = vadd.f32 %v3345, %v3253
        %v3347 = vadd.f32 %v3346, %v3254
        %v3348 = vadd.f32 %v3347, %v3255
        %v3349 = vadd.f32 %v3348, %v3256
        %v3350 = vadd.f32 %v3349, %v3257
        %v3351 = vrot.slane %v3350, 4
        %v3352 = vadd.f32 %v3350, %v3351
        %v3353 = vrot.slane %v3352, 2
        %v3354 = vadd.f32 %v3352, %v3353
        %v3355 = vrot.slane %v3354, 1
        %v3356 = vadd.f32 %v3354, %v3355
        %v3357 = vadd.f32 %v3258, %v3259
        %v3358 = vadd.f32 %v3357, %v3260
        %v3359 = vadd.f32 %v3358, %v3261
        %v3360 = vadd.f32 %v3359, %v3262
        %v3361 = vadd.f32 %v3360, %v3263
        %v3362 = vadd.f32 %v3361, %v3264
        %v3363 = vadd.f32 %v3362, %v3265
        %v3364 = vrot.slane %v3363, 4
        %v3365 = vadd.f32 %v3363, %v3364
        %v3366 = vrot.slane %v3365, 2
        %v3367 = vadd.f32 %v3365, %v3366
        %v3368 = vrot.slane %v3367, 1
        %v3369 = vadd.f32 %v3367, %v3368
        %v3370 = vmul.f32 %v3278, %v3278
        %v3371 = vmul.f32 %v3291, %v3291
        %v3372 = vmul.f32 %v3304, %v3304
        %v3373 = vmul.f32 %v3317, %v3317
        %v3374 = vmul.f32 %v3330, %v3330
        %v3375 = vmul.f32 %v3343, %v3343
        %v3376 = vmul.f32 %v3356, %v3356
        %v3377 = vmul.f32 %v3369, %v3369
        %3378 = vadd.xlane.f32.xlu0 %v3370
        %v3379 = vpop.xlane.xlu0 %3378
        %3380 = vadd.xlane.f32.xlu0 %v3371
        %v3381 = vpop.xlane.xlu0 %3380
        %3382 = vadd.xlane.f32.xlu0 %v3372
        %v3383 = vpop.xlane.xlu0 %3382
        %3384 = vadd.xlane.f32.xlu0 %v3373
        %v3385 = vpop.xlane.xlu0 %3384
        %3386 = vadd.xlane.f32.xlu0 %v3374
        %v3387 = vpop.xlane.xlu0 %3386
        %3388 = vadd.xlane.f32.xlu0 %v3375
        %v3389 = vpop.xlane.xlu0 %3388
        %3390 = vadd.xlane.f32.xlu0 %v3376
        %v3391 = vpop.xlane.xlu0 %3390
        %3392 = vadd.xlane.f32.xlu0 %v3377
        %v3393 = vpop.xlane.xlu0 %3392
        %v3394 = vadd.f32 %v3379, 1e-08
        %v3395 = vadd.f32 %v3381, 1e-08
        %v3396 = vadd.f32 %v3383, 1e-08
        %v3397 = vadd.f32 %v3385, 1e-08
        %v3398 = vadd.f32 %v3387, 1e-08
        %v3399 = vadd.f32 %v3389, 1e-08
        %v3400 = vadd.f32 %v3391, 1e-08
        %v3401 = vadd.f32 %v3393, 1e-08
        %v3402 = vrsqrt.pop %v3394
        %v3403 = vrsqrt.pop %v3395
        %v3404 = vrsqrt.pop %v3396
        %v3405 = vrsqrt.pop %v3397
        %v3406 = vrsqrt.pop %v3398
        %v3407 = vrsqrt.pop %v3399
        %v3408 = vrsqrt.pop %v3400
        %v3409 = vrsqrt.pop %v3401
        %v3410 = vmul.f32 %v3379, %v3402
        %v3411 = vmul.f32 %v3381, %v3403
        %v3412 = vmul.f32 %v3383, %v3404
        %v3413 = vmul.f32 %v3385, %v3405
        %v3414 = vmul.f32 %v3387, %v3406
        %v3415 = vmul.f32 %v3389, %v3407
        %v3416 = vmul.f32 %v3391, %v3408
        %v3417 = vmul.f32 %v3393, %v3409
        %v3418 = vadd.f32 %v3379, 1.0
        %v3419 = vadd.f32 %v3381, 1.0
        %v3420 = vadd.f32 %v3383, 1.0
        %v3421 = vadd.f32 %v3385, 1.0
        %v3422 = vadd.f32 %v3387, 1.0
        %v3423 = vadd.f32 %v3389, 1.0
        %v3424 = vadd.f32 %v3391, 1.0
        %v3425 = vadd.f32 %v3393, 1.0
        %v3426 = vrcp.pop %v3418
        %v3427 = vrcp.pop %v3419
        %v3428 = vrcp.pop %v3420
        %v3429 = vrcp.pop %v3421
        %v3430 = vrcp.pop %v3422
        %v3431 = vrcp.pop %v3423
        %v3432 = vrcp.pop %v3424
        %v3433 = vrcp.pop %v3425
        %v3434 = vmul.f32 %v3410, %v3426
        %v3435 = vmul.f32 %v3411, %v3427
        %v3436 = vmul.f32 %v3412, %v3428
        %v3437 = vmul.f32 %v3413, %v3429
        %v3438 = vmul.f32 %v3414, %v3430
        %v3439 = vmul.f32 %v3415, %v3431
        %v3440 = vmul.f32 %v3416, %v3432
        %v3441 = vmul.f32 %v3417, %v3433
        %v3442 = vmul.f32 %v3434, %v3278
        %v3443 = vmul.f32 %v3435, %v3291
        %v3444 = vmul.f32 %v3436, %v3304
        %v3445 = vmul.f32 %v3437, %v3317
        %v3446 = vmul.f32 %v3438, %v3330
        %v3447 = vmul.f32 %v3439, %v3343
        %v3448 = vmul.f32 %v3440, %v3356
        %v3449 = vmul.f32 %v3441, %v3369
        %v3450 = vmul.f32 %v3442, %v2281
        %v3451 = vmul.f32 %v3442, %v2282
        %v3452 = vmul.f32 %v3442, %v2283
        %v3453 = vmul.f32 %v3442, %v2284
        %v3454 = vmul.f32 %v3442, %v2285
        %v3455 = vmul.f32 %v3442, %v2286
        %v3456 = vmul.f32 %v3442, %v2287
        %v3457 = vmul.f32 %v3442, %v2288
        %v3458 = vmul.f32 %v3443, %v2289
        %v3459 = vmul.f32 %v3443, %v2290
        %v3460 = vmul.f32 %v3443, %v2291
        %v3461 = vmul.f32 %v3443, %v2292
        %v3462 = vmul.f32 %v3443, %v2293
        %v3463 = vmul.f32 %v3443, %v2294
        %v3464 = vmul.f32 %v3443, %v2295
        %v3465 = vmul.f32 %v3443, %v2296
        %v3466 = vmul.f32 %v3444, %v2297
        %v3467 = vmul.f32 %v3444, %v2298
        %v3468 = vmul.f32 %v3444, %v2299
        %v3469 = vmul.f32 %v3444, %v2300
        %v3470 = vmul.f32 %v3444, %v2301
        %v3471 = vmul.f32 %v3444, %v2302
        %v3472 = vmul.f32 %v3444, %v2303
        %v3473 = vmul.f32 %v3444, %v2304
        %v3474 = vmul.f32 %v3445, %v2305
        %v3475 = vmul.f32 %v3445, %v2306
        %v3476 = vmul.f32 %v3445, %v2307
        %v3477 = vmul.f32 %v3445, %v2308
        %v3478 = vmul.f32 %v3445, %v2309
        %v3479 = vmul.f32 %v3445, %v2310
        %v3480 = vmul.f32 %v3445, %v2311
        %v3481 = vmul.f32 %v3445, %v2312
        %v3482 = vmul.f32 %v3446, %v2313
        %v3483 = vmul.f32 %v3446, %v2314
        %v3484 = vmul.f32 %v3446, %v2315
        %v3485 = vmul.f32 %v3446, %v2316
        %v3486 = vmul.f32 %v3446, %v2317
        %v3487 = vmul.f32 %v3446, %v2318
        %v3488 = vmul.f32 %v3446, %v2319
        %v3489 = vmul.f32 %v3446, %v2320
        %v3490 = vmul.f32 %v3447, %v2321
        %v3491 = vmul.f32 %v3447, %v2322
        %v3492 = vmul.f32 %v3447, %v2323
        %v3493 = vmul.f32 %v3447, %v2324
        %v3494 = vmul.f32 %v3447, %v2325
        %v3495 = vmul.f32 %v3447, %v2326
        %v3496 = vmul.f32 %v3447, %v2327
        %v3497 = vmul.f32 %v3447, %v2328
        %v3498 = vmul.f32 %v3448, %v2329
        %v3499 = vmul.f32 %v3448, %v2330
        %v3500 = vmul.f32 %v3448, %v2331
        %v3501 = vmul.f32 %v3448, %v2332
        %v3502 = vmul.f32 %v3448, %v2333
        %v3503 = vmul.f32 %v3448, %v2334
        %v3504 = vmul.f32 %v3448, %v2335
        %v3505 = vmul.f32 %v3448, %v2336
        %v3506 = vmul.f32 %v3449, %v2337
        %v3507 = vmul.f32 %v3449, %v2338
        %v3508 = vmul.f32 %v3449, %v2339
        %v3509 = vmul.f32 %v3449, %v2340
        %v3510 = vmul.f32 %v3449, %v2341
        %v3511 = vmul.f32 %v3449, %v2342
        %v3512 = vmul.f32 %v3449, %v2343
        %v3513 = vmul.f32 %v3449, %v2344
        %3514 = vadd.xlane.f32.xlu0 %v3450
        %v3515 = vpop.xlane.xlu0 %3514
        %3516 = vadd.xlane.f32.xlu0 %v3451
        %v3517 = vpop.xlane.xlu0 %3516
        %3518 = vadd.xlane.f32.xlu0 %v3452
        %v3519 = vpop.xlane.xlu0 %3518
        %3520 = vadd.xlane.f32.xlu0 %v3453
        %v3521 = vpop.xlane.xlu0 %3520
        %3522 = vadd.xlane.f32.xlu0 %v3454
        %v3523 = vpop.xlane.xlu0 %3522
        %3524 = vadd.xlane.f32.xlu0 %v3455
        %v3525 = vpop.xlane.xlu0 %3524
        %3526 = vadd.xlane.f32.xlu0 %v3456
        %v3527 = vpop.xlane.xlu0 %3526
        %3528 = vadd.xlane.f32.xlu0 %v3457
        %v3529 = vpop.xlane.xlu0 %3528
        %3530 = vadd.xlane.f32.xlu0 %v3458
        %v3531 = vpop.xlane.xlu0 %3530
        %3532 = vadd.xlane.f32.xlu0 %v3459
        %v3533 = vpop.xlane.xlu0 %3532
        %3534 = vadd.xlane.f32.xlu0 %v3460
        %v3535 = vpop.xlane.xlu0 %3534
        %3536 = vadd.xlane.f32.xlu0 %v3461
        %v3537 = vpop.xlane.xlu0 %3536
        %3538 = vadd.xlane.f32.xlu0 %v3462
        %v3539 = vpop.xlane.xlu0 %3538
        %3540 = vadd.xlane.f32.xlu0 %v3463
        %v3541 = vpop.xlane.xlu0 %3540
        %3542 = vadd.xlane.f32.xlu0 %v3464
        %v3543 = vpop.xlane.xlu0 %3542
        %3544 = vadd.xlane.f32.xlu0 %v3465
        %v3545 = vpop.xlane.xlu0 %3544
        %3546 = vadd.xlane.f32.xlu0 %v3466
        %v3547 = vpop.xlane.xlu0 %3546
        %3548 = vadd.xlane.f32.xlu0 %v3467
        %v3549 = vpop.xlane.xlu0 %3548
        %3550 = vadd.xlane.f32.xlu0 %v3468
        %v3551 = vpop.xlane.xlu0 %3550
        %3552 = vadd.xlane.f32.xlu0 %v3469
        %v3553 = vpop.xlane.xlu0 %3552
        %3554 = vadd.xlane.f32.xlu0 %v3470
        %v3555 = vpop.xlane.xlu0 %3554
        %3556 = vadd.xlane.f32.xlu0 %v3471
        %v3557 = vpop.xlane.xlu0 %3556
        %3558 = vadd.xlane.f32.xlu0 %v3472
        %v3559 = vpop.xlane.xlu0 %3558
        %3560 = vadd.xlane.f32.xlu0 %v3473
        %v3561 = vpop.xlane.xlu0 %3560
        %3562 = vadd.xlane.f32.xlu0 %v3474
        %v3563 = vpop.xlane.xlu0 %3562
        %3564 = vadd.xlane.f32.xlu0 %v3475
        %v3565 = vpop.xlane.xlu0 %3564
        %3566 = vadd.xlane.f32.xlu0 %v3476
        %v3567 = vpop.xlane.xlu0 %3566
        %3568 = vadd.xlane.f32.xlu0 %v3477
        %v3569 = vpop.xlane.xlu0 %3568
        %3570 = vadd.xlane.f32.xlu0 %v3478
        %v3571 = vpop.xlane.xlu0 %3570
        %3572 = vadd.xlane.f32.xlu0 %v3479
        %v3573 = vpop.xlane.xlu0 %3572
        %3574 = vadd.xlane.f32.xlu0 %v3480
        %v3575 = vpop.xlane.xlu0 %3574
        %3576 = vadd.xlane.f32.xlu0 %v3481
        %v3577 = vpop.xlane.xlu0 %3576
        %3578 = vadd.xlane.f32.xlu0 %v3482
        %v3579 = vpop.xlane.xlu0 %3578
        %3580 = vadd.xlane.f32.xlu0 %v3483
        %v3581 = vpop.xlane.xlu0 %3580
        %3582 = vadd.xlane.f32.xlu0 %v3484
        %v3583 = vpop.xlane.xlu0 %3582
        %3584 = vadd.xlane.f32.xlu0 %v3485
        %v3585 = vpop.xlane.xlu0 %3584
        %3586 = vadd.xlane.f32.xlu0 %v3486
        %v3587 = vpop.xlane.xlu0 %3586
        %3588 = vadd.xlane.f32.xlu0 %v3487
        %v3589 = vpop.xlane.xlu0 %3588
        %3590 = vadd.xlane.f32.xlu0 %v3488
        %v3591 = vpop.xlane.xlu0 %3590
        %3592 = vadd.xlane.f32.xlu0 %v3489
        %v3593 = vpop.xlane.xlu0 %3592
        %3594 = vadd.xlane.f32.xlu0 %v3490
        %v3595 = vpop.xlane.xlu0 %3594
        %3596 = vadd.xlane.f32.xlu0 %v3491
        %v3597 = vpop.xlane.xlu0 %3596
        %3598 = vadd.xlane.f32.xlu0 %v3492
        %v3599 = vpop.xlane.xlu0 %3598
        %3600 = vadd.xlane.f32.xlu0 %v3493
        %v3601 = vpop.xlane.xlu0 %3600
        %3602 = vadd.xlane.f32.xlu0 %v3494
        %v3603 = vpop.xlane.xlu0 %3602
        %3604 = vadd.xlane.f32.xlu0 %v3495
        %v3605 = vpop.xlane.xlu0 %3604
        %3606 = vadd.xlane.f32.xlu0 %v3496
        %v3607 = vpop.xlane.xlu0 %3606
        %3608 = vadd.xlane.f32.xlu0 %v3497
        %v3609 = vpop.xlane.xlu0 %3608
        %3610 = vadd.xlane.f32.xlu0 %v3498
        %v3611 = vpop.xlane.xlu0 %3610
        %3612 = vadd.xlane.f32.xlu0 %v3499
        %v3613 = vpop.xlane.xlu0 %3612
        %3614 = vadd.xlane.f32.xlu0 %v3500
        %v3615 = vpop.xlane.xlu0 %3614
        %3616 = vadd.xlane.f32.xlu0 %v3501
        %v3617 = vpop.xlane.xlu0 %3616
        %3618 = vadd.xlane.f32.xlu0 %v3502
        %v3619 = vpop.xlane.xlu0 %3618
        %3620 = vadd.xlane.f32.xlu0 %v3503
        %v3621 = vpop.xlane.xlu0 %3620
        %3622 = vadd.xlane.f32.xlu0 %v3504
        %v3623 = vpop.xlane.xlu0 %3622
        %3624 = vadd.xlane.f32.xlu0 %v3505
        %v3625 = vpop.xlane.xlu0 %3624
        %3626 = vadd.xlane.f32.xlu0 %v3506
        %v3627 = vpop.xlane.xlu0 %3626
        %3628 = vadd.xlane.f32.xlu0 %v3507
        %v3629 = vpop.xlane.xlu0 %3628
        %3630 = vadd.xlane.f32.xlu0 %v3508
        %v3631 = vpop.xlane.xlu0 %3630
        %3632 = vadd.xlane.f32.xlu0 %v3509
        %v3633 = vpop.xlane.xlu0 %3632
        %3634 = vadd.xlane.f32.xlu0 %v3510
        %v3635 = vpop.xlane.xlu0 %3634
        %3636 = vadd.xlane.f32.xlu0 %v3511
        %v3637 = vpop.xlane.xlu0 %3636
        %3638 = vadd.xlane.f32.xlu0 %v3512
        %v3639 = vpop.xlane.xlu0 %3638
        %3640 = vadd.xlane.f32.xlu0 %v3513
        %v3641 = vpop.xlane.xlu0 %3640
        %v3642 = vadd.f32 %v2786, %v3515
        %v3643 = vadd.f32 %v2787, %v3517
        %v3644 = vadd.f32 %v2788, %v3519
        %v3645 = vadd.f32 %v2789, %v3521
        %v3646 = vadd.f32 %v2790, %v3523
        %v3647 = vadd.f32 %v2791, %v3525
        %v3648 = vadd.f32 %v2792, %v3527
        %v3649 = vadd.f32 %v2793, %v3529
        %v3650 = vadd.f32 %v2794, %v3531
        %v3651 = vadd.f32 %v2795, %v3533
        %v3652 = vadd.f32 %v2796, %v3535
        %v3653 = vadd.f32 %v2797, %v3537
        %v3654 = vadd.f32 %v2798, %v3539
        %v3655 = vadd.f32 %v2799, %v3541
        %v3656 = vadd.f32 %v2800, %v3543
        %v3657 = vadd.f32 %v2801, %v3545
        %v3658 = vadd.f32 %v2802, %v3547
        %v3659 = vadd.f32 %v2803, %v3549
        %v3660 = vadd.f32 %v2804, %v3551
        %v3661 = vadd.f32 %v2805, %v3553
        %v3662 = vadd.f32 %v2806, %v3555
        %v3663 = vadd.f32 %v2807, %v3557
        %v3664 = vadd.f32 %v2808, %v3559
        %v3665 = vadd.f32 %v2809, %v3561
        %v3666 = vadd.f32 %v2810, %v3563
        %v3667 = vadd.f32 %v2811, %v3565
        %v3668 = vadd.f32 %v2812, %v3567
        %v3669 = vadd.f32 %v2813, %v3569
        %v3670 = vadd.f32 %v2814, %v3571
        %v3671 = vadd.f32 %v2815, %v3573
        %v3672 = vadd.f32 %v2816, %v3575
        %v3673 = vadd.f32 %v2817, %v3577
        %v3674 = vadd.f32 %v2818, %v3579
        %v3675 = vadd.f32 %v2819, %v3581
        %v3676 = vadd.f32 %v2820, %v3583
        %v3677 = vadd.f32 %v2821, %v3585
        %v3678 = vadd.f32 %v2822, %v3587
        %v3679 = vadd.f32 %v2823, %v3589
        %v3680 = vadd.f32 %v2824, %v3591
        %v3681 = vadd.f32 %v2825, %v3593
        %v3682 = vadd.f32 %v2826, %v3595
        %v3683 = vadd.f32 %v2827, %v3597
        %v3684 = vadd.f32 %v2828, %v3599
        %v3685 = vadd.f32 %v2829, %v3601
        %v3686 = vadd.f32 %v2830, %v3603
        %v3687 = vadd.f32 %v2831, %v3605
        %v3688 = vadd.f32 %v2832, %v3607
        %v3689 = vadd.f32 %v2833, %v3609
        %v3690 = vadd.f32 %v2834, %v3611
        %v3691 = vadd.f32 %v2835, %v3613
        %v3692 = vadd.f32 %v2836, %v3615
        %v3693 = vadd.f32 %v2837, %v3617
        %v3694 = vadd.f32 %v2838, %v3619
        %v3695 = vadd.f32 %v2839, %v3621
        %v3696 = vadd.f32 %v2840, %v3623
        %v3697 = vadd.f32 %v2841, %v3625
        %v3698 = vadd.f32 %v2842, %v3627
        %v3699 = vadd.f32 %v2843, %v3629
        %v3700 = vadd.f32 %v2844, %v3631
        %v3701 = vadd.f32 %v2845, %v3633
        %v3702 = vadd.f32 %v2846, %v3635
        %v3703 = vadd.f32 %v2847, %v3637
        %v3704 = vadd.f32 %v2848, %v3639
        %v3705 = vadd.f32 %v2849, %v3641
        %v3706 = vmax.f32 %v3642, %v3650
        %v3707 = vmax.f32 %v3643, %v3651
        %v3708 = vmax.f32 %v3644, %v3652
        %v3709 = vmax.f32 %v3645, %v3653
        %v3710 = vmax.f32 %v3646, %v3654
        %v3711 = vmax.f32 %v3647, %v3655
        %v3712 = vmax.f32 %v3648, %v3656
        %v3713 = vmax.f32 %v3649, %v3657
        %v3714 = vmax.f32 %v3658, %v3666
        %v3715 = vmax.f32 %v3659, %v3667
        %v3716 = vmax.f32 %v3660, %v3668
        %v3717 = vmax.f32 %v3661, %v3669
        %v3718 = vmax.f32 %v3662, %v3670
        %v3719 = vmax.f32 %v3663, %v3671
        %v3720 = vmax.f32 %v3664, %v3672
        %v3721 = vmax.f32 %v3665, %v3673
        %v3722 = vmax.f32 %v3674, %v3682
        %v3723 = vmax.f32 %v3675, %v3683
        %v3724 = vmax.f32 %v3676, %v3684
        %v3725 = vmax.f32 %v3677, %v3685
        %v3726 = vmax.f32 %v3678, %v3686
        %v3727 = vmax.f32 %v3679, %v3687
        %v3728 = vmax.f32 %v3680, %v3688
        %v3729 = vmax.f32 %v3681, %v3689
        %v3730 = vmax.f32 %v3690, %v3698
        %v3731 = vmax.f32 %v3691, %v3699
        %v3732 = vmax.f32 %v3692, %v3700
        %v3733 = vmax.f32 %v3693, %v3701
        %v3734 = vmax.f32 %v3694, %v3702
        %v3735 = vmax.f32 %v3695, %v3703
        %v3736 = vmax.f32 %v3696, %v3704
        %v3737 = vmax.f32 %v3697, %v3705
        %v3738 = vsub.f32 %v3642, %v3706
        %v3739 = vsub.f32 %v3643, %v3707
        %v3740 = vsub.f32 %v3644, %v3708
        %v3741 = vsub.f32 %v3645, %v3709
        %v3742 = vsub.f32 %v3646, %v3710
        %v3743 = vsub.f32 %v3647, %v3711
        %v3744 = vsub.f32 %v3648, %v3712
        %v3745 = vsub.f32 %v3649, %v3713
        %v3746 = vsub.f32 %v3650, %v3706
        %v3747 = vsub.f32 %v3651, %v3707
        %v3748 = vsub.f32 %v3652, %v3708
        %v3749 = vsub.f32 %v3653, %v3709
        %v3750 = vsub.f32 %v3654, %v3710
        %v3751 = vsub.f32 %v3655, %v3711
        %v3752 = vsub.f32 %v3656, %v3712
        %v3753 = vsub.f32 %v3657, %v3713
        %v3754 = vsub.f32 %v3658, %v3714
        %v3755 = vsub.f32 %v3659, %v3715
        %v3756 = vsub.f32 %v3660, %v3716
        %v3757 = vsub.f32 %v3661, %v3717
        %v3758 = vsub.f32 %v3662, %v3718
        %v3759 = vsub.f32 %v3663, %v3719
        %v3760 = vsub.f32 %v3664, %v3720
        %v3761 = vsub.f32 %v3665, %v3721
        %v3762 = vsub.f32 %v3666, %v3714
        %v3763 = vsub.f32 %v3667, %v3715
        %v3764 = vsub.f32 %v3668, %v3716
        %v3765 = vsub.f32 %v3669, %v3717
        %v3766 = vsub.f32 %v3670, %v3718
        %v3767 = vsub.f32 %v3671, %v3719
        %v3768 = vsub.f32 %v3672, %v3720
        %v3769 = vsub.f32 %v3673, %v3721
        %v3770 = vsub.f32 %v3674, %v3722
        %v3771 = vsub.f32 %v3675, %v3723
        %v3772 = vsub.f32 %v3676, %v3724
        %v3773 = vsub.f32 %v3677, %v3725
        %v3774 = vsub.f32 %v3678, %v3726
        %v3775 = vsub.f32 %v3679, %v3727
        %v3776 = vsub.f32 %v3680, %v3728
        %v3777 = vsub.f32 %v3681, %v3729
        %v3778 = vsub.f32 %v3682, %v3722
        %v3779 = vsub.f32 %v3683, %v3723
        %v3780 = vsub.f32 %v3684, %v3724
        %v3781 = vsub.f32 %v3685, %v3725
        %v3782 = vsub.f32 %v3686, %v3726
        %v3783 = vsub.f32 %v3687, %v3727
        %v3784 = vsub.f32 %v3688, %v3728
        %v3785 = vsub.f32 %v3689, %v3729
        %v3786 = vsub.f32 %v3690, %v3730
        %v3787 = vsub.f32 %v3691, %v3731
        %v3788 = vsub.f32 %v3692, %v3732
        %v3789 = vsub.f32 %v3693, %v3733
        %v3790 = vsub.f32 %v3694, %v3734
        %v3791 = vsub.f32 %v3695, %v3735
        %v3792 = vsub.f32 %v3696, %v3736
        %v3793 = vsub.f32 %v3697, %v3737
        %v3794 = vsub.f32 %v3698, %v3730
        %v3795 = vsub.f32 %v3699, %v3731
        %v3796 = vsub.f32 %v3700, %v3732
        %v3797 = vsub.f32 %v3701, %v3733
        %v3798 = vsub.f32 %v3702, %v3734
        %v3799 = vsub.f32 %v3703, %v3735
        %v3800 = vsub.f32 %v3704, %v3736
        %v3801 = vsub.f32 %v3705, %v3737
        %v3802 = vmul.f32 %v3738, 1.442695
        %v3803 = vpow.pop %v3802
        %v3804 = vmul.f32 %v3739, 1.442695
        %v3805 = vpow.pop %v3804
        %v3806 = vmul.f32 %v3740, 1.442695
        %v3807 = vpow.pop %v3806
        %v3808 = vmul.f32 %v3741, 1.442695
        %v3809 = vpow.pop %v3808
        %v3810 = vmul.f32 %v3742, 1.442695
        %v3811 = vpow.pop %v3810
        %v3812 = vmul.f32 %v3743, 1.442695
        %v3813 = vpow.pop %v3812
        %v3814 = vmul.f32 %v3744, 1.442695
        %v3815 = vpow.pop %v3814
        %v3816 = vmul.f32 %v3745, 1.442695
        %v3817 = vpow.pop %v3816
        %v3818 = vmul.f32 %v3746, 1.442695
        %v3819 = vpow.pop %v3818
        %v3820 = vmul.f32 %v3747, 1.442695
        %v3821 = vpow.pop %v3820
        %v3822 = vmul.f32 %v3748, 1.442695
        %v3823 = vpow.pop %v3822
        %v3824 = vmul.f32 %v3749, 1.442695
        %v3825 = vpow.pop %v3824
        %v3826 = vmul.f32 %v3750, 1.442695
        %v3827 = vpow.pop %v3826
        %v3828 = vmul.f32 %v3751, 1.442695
        %v3829 = vpow.pop %v3828
        %v3830 = vmul.f32 %v3752, 1.442695
        %v3831 = vpow.pop %v3830
        %v3832 = vmul.f32 %v3753, 1.442695
        %v3833 = vpow.pop %v3832
        %v3834 = vmul.f32 %v3754, 1.442695
        %v3835 = vpow.pop %v3834
        %v3836 = vmul.f32 %v3755, 1.442695
        %v3837 = vpow.pop %v3836
        %v3838 = vmul.f32 %v3756, 1.442695
        %v3839 = vpow.pop %v3838
        %v3840 = vmul.f32 %v3757, 1.442695
        %v3841 = vpow.pop %v3840
        %v3842 = vmul.f32 %v3758, 1.442695
        %v3843 = vpow.pop %v3842
        %v3844 = vmul.f32 %v3759, 1.442695
        %v3845 = vpow.pop %v3844
        %v3846 = vmul.f32 %v3760, 1.442695
        %v3847 = vpow.pop %v3846
        %v3848 = vmul.f32 %v3761, 1.442695
        %v3849 = vpow.pop %v3848
        %v3850 = vmul.f32 %v3762, 1.442695
        %v3851 = vpow.pop %v3850
        %v3852 = vmul.f32 %v3763, 1.442695
        %v3853 = vpow.pop %v3852
        %v3854 = vmul.f32 %v3764, 1.442695
        %v3855 = vpow.pop %v3854
        %v3856 = vmul.f32 %v3765, 1.442695
        %v3857 = vpow.pop %v3856
        %v3858 = vmul.f32 %v3766, 1.442695
        %v3859 = vpow.pop %v3858
        %v3860 = vmul.f32 %v3767, 1.442695
        %v3861 = vpow.pop %v3860
        %v3862 = vmul.f32 %v3768, 1.442695
        %v3863 = vpow.pop %v3862
        %v3864 = vmul.f32 %v3769, 1.442695
        %v3865 = vpow.pop %v3864
        %v3866 = vmul.f32 %v3770, 1.442695
        %v3867 = vpow.pop %v3866
        %v3868 = vmul.f32 %v3771, 1.442695
        %v3869 = vpow.pop %v3868
        %v3870 = vmul.f32 %v3772, 1.442695
        %v3871 = vpow.pop %v3870
        %v3872 = vmul.f32 %v3773, 1.442695
        %v3873 = vpow.pop %v3872
        %v3874 = vmul.f32 %v3774, 1.442695
        %v3875 = vpow.pop %v3874
        %v3876 = vmul.f32 %v3775, 1.442695
        %v3877 = vpow.pop %v3876
        %v3878 = vmul.f32 %v3776, 1.442695
        %v3879 = vpow.pop %v3878
        %v3880 = vmul.f32 %v3777, 1.442695
        %v3881 = vpow.pop %v3880
        %v3882 = vmul.f32 %v3778, 1.442695
        %v3883 = vpow.pop %v3882
        %v3884 = vmul.f32 %v3779, 1.442695
        %v3885 = vpow.pop %v3884
        %v3886 = vmul.f32 %v3780, 1.442695
        %v3887 = vpow.pop %v3886
        %v3888 = vmul.f32 %v3781, 1.442695
        %v3889 = vpow.pop %v3888
        %v3890 = vmul.f32 %v3782, 1.442695
        %v3891 = vpow.pop %v3890
        %v3892 = vmul.f32 %v3783, 1.442695
        %v3893 = vpow.pop %v3892
        %v3894 = vmul.f32 %v3784, 1.442695
        %v3895 = vpow.pop %v3894
        %v3896 = vmul.f32 %v3785, 1.442695
        %v3897 = vpow.pop %v3896
        %v3898 = vmul.f32 %v3786, 1.442695
        %v3899 = vpow.pop %v3898
        %v3900 = vmul.f32 %v3787, 1.442695
        %v3901 = vpow.pop %v3900
        %v3902 = vmul.f32 %v3788, 1.442695
        %v3903 = vpow.pop %v3902
        %v3904 = vmul.f32 %v3789, 1.442695
        %v3905 = vpow.pop %v3904
        %v3906 = vmul.f32 %v3790, 1.442695
        %v3907 = vpow.pop %v3906
        %v3908 = vmul.f32 %v3791, 1.442695
        %v3909 = vpow.pop %v3908
        %v3910 = vmul.f32 %v3792, 1.442695
        %v3911 = vpow.pop %v3910
        %v3912 = vmul.f32 %v3793, 1.442695
        %v3913 = vpow.pop %v3912
        %v3914 = vmul.f32 %v3794, 1.442695
        %v3915 = vpow.pop %v3914
        %v3916 = vmul.f32 %v3795, 1.442695
        %v3917 = vpow.pop %v3916
        %v3918 = vmul.f32 %v3796, 1.442695
        %v3919 = vpow.pop %v3918
        %v3920 = vmul.f32 %v3797, 1.442695
        %v3921 = vpow.pop %v3920
        %v3922 = vmul.f32 %v3798, 1.442695
        %v3923 = vpow.pop %v3922
        %v3924 = vmul.f32 %v3799, 1.442695
        %v3925 = vpow.pop %v3924
        %v3926 = vmul.f32 %v3800, 1.442695
        %v3927 = vpow.pop %v3926
        %v3928 = vmul.f32 %v3801, 1.442695
        %v3929 = vpow.pop %v3928
        %v3930 = vadd.f32 %v3803, %v3819
        %v3931 = vadd.f32 %v3805, %v3821
        %v3932 = vadd.f32 %v3807, %v3823
        %v3933 = vadd.f32 %v3809, %v3825
        %v3934 = vadd.f32 %v3811, %v3827
        %v3935 = vadd.f32 %v3813, %v3829
        %v3936 = vadd.f32 %v3815, %v3831
        %v3937 = vadd.f32 %v3817, %v3833
        %v3938 = vadd.f32 %v3835, %v3851
        %v3939 = vadd.f32 %v3837, %v3853
        %v3940 = vadd.f32 %v3839, %v3855
        %v3941 = vadd.f32 %v3841, %v3857
        %v3942 = vadd.f32 %v3843, %v3859
        %v3943 = vadd.f32 %v3845, %v3861
        %v3944 = vadd.f32 %v3847, %v3863
        %v3945 = vadd.f32 %v3849, %v3865
        %v3946 = vadd.f32 %v3867, %v3883
        %v3947 = vadd.f32 %v3869, %v3885
        %v3948 = vadd.f32 %v3871, %v3887
        %v3949 = vadd.f32 %v3873, %v3889
        %v3950 = vadd.f32 %v3875, %v3891
        %v3951 = vadd.f32 %v3877, %v3893
        %v3952 = vadd.f32 %v3879, %v3895
        %v3953 = vadd.f32 %v3881, %v3897
        %v3954 = vadd.f32 %v3899, %v3915
        %v3955 = vadd.f32 %v3901, %v3917
        %v3956 = vadd.f32 %v3903, %v3919
        %v3957 = vadd.f32 %v3905, %v3921
        %v3958 = vadd.f32 %v3907, %v3923
        %v3959 = vadd.f32 %v3909, %v3925
        %v3960 = vadd.f32 %v3911, %v3927
        %v3961 = vadd.f32 %v3913, %v3929
        %v3962 = vrcp.pop %v3930
        %v3963 = vrcp.pop %v3931
        %v3964 = vrcp.pop %v3932
        %v3965 = vrcp.pop %v3933
        %v3966 = vrcp.pop %v3934
        %v3967 = vrcp.pop %v3935
        %v3968 = vrcp.pop %v3936
        %v3969 = vrcp.pop %v3937
        %v3970 = vrcp.pop %v3938
        %v3971 = vrcp.pop %v3939
        %v3972 = vrcp.pop %v3940
        %v3973 = vrcp.pop %v3941
        %v3974 = vrcp.pop %v3942
        %v3975 = vrcp.pop %v3943
        %v3976 = vrcp.pop %v3944
        %v3977 = vrcp.pop %v3945
        %v3978 = vrcp.pop %v3946
        %v3979 = vrcp.pop %v3947
        %v3980 = vrcp.pop %v3948
        %v3981 = vrcp.pop %v3949
        %v3982 = vrcp.pop %v3950
        %v3983 = vrcp.pop %v3951
        %v3984 = vrcp.pop %v3952
        %v3985 = vrcp.pop %v3953
        %v3986 = vrcp.pop %v3954
        %v3987 = vrcp.pop %v3955
        %v3988 = vrcp.pop %v3956
        %v3989 = vrcp.pop %v3957
        %v3990 = vrcp.pop %v3958
        %v3991 = vrcp.pop %v3959
        %v3992 = vrcp.pop %v3960
        %v3993 = vrcp.pop %v3961
        %v3994 = vmul.f32 %v3803, %v3962
        %v3995 = vmul.f32 %v3805, %v3963
        %v3996 = vmul.f32 %v3807, %v3964
        %v3997 = vmul.f32 %v3809, %v3965
        %v3998 = vmul.f32 %v3811, %v3966
        %v3999 = vmul.f32 %v3813, %v3967
        %v4000 = vmul.f32 %v3815, %v3968
        %v4001 = vmul.f32 %v3817, %v3969
        %v4002 = vmul.f32 %v3819, %v3962
        %v4003 = vmul.f32 %v3821, %v3963
        %v4004 = vmul.f32 %v3823, %v3964
        %v4005 = vmul.f32 %v3825, %v3965
        %v4006 = vmul.f32 %v3827, %v3966
        %v4007 = vmul.f32 %v3829, %v3967
        %v4008 = vmul.f32 %v3831, %v3968
        %v4009 = vmul.f32 %v3833, %v3969
        %v4010 = vmul.f32 %v3835, %v3970
        %v4011 = vmul.f32 %v3837, %v3971
        %v4012 = vmul.f32 %v3839, %v3972
        %v4013 = vmul.f32 %v3841, %v3973
        %v4014 = vmul.f32 %v3843, %v3974
        %v4015 = vmul.f32 %v3845, %v3975
        %v4016 = vmul.f32 %v3847, %v3976
        %v4017 = vmul.f32 %v3849, %v3977
        %v4018 = vmul.f32 %v3851, %v3970
        %v4019 = vmul.f32 %v3853, %v3971
        %v4020 = vmul.f32 %v3855, %v3972
        %v4021 = vmul.f32 %v3857, %v3973
        %v4022 = vmul.f32 %v3859, %v3974
        %v4023 = vmul.f32 %v3861, %v3975
        %v4024 = vmul.f32 %v3863, %v3976
        %v4025 = vmul.f32 %v3865, %v3977
        %v4026 = vmul.f32 %v3867, %v3978
        %v4027 = vmul.f32 %v3869, %v3979
        %v4028 = vmul.f32 %v3871, %v3980
        %v4029 = vmul.f32 %v3873, %v3981
        %v4030 = vmul.f32 %v3875, %v3982
        %v4031 = vmul.f32 %v3877, %v3983
        %v4032 = vmul.f32 %v3879, %v3984
        %v4033 = vmul.f32 %v3881, %v3985
        %v4034 = vmul.f32 %v3883, %v3978
        %v4035 = vmul.f32 %v3885, %v3979
        %v4036 = vmul.f32 %v3887, %v3980
        %v4037 = vmul.f32 %v3889, %v3981
        %v4038 = vmul.f32 %v3891, %v3982
        %v4039 = vmul.f32 %v3893, %v3983
        %v4040 = vmul.f32 %v3895, %v3984
        %v4041 = vmul.f32 %v3897, %v3985
        %v4042 = vmul.f32 %v3899, %v3986
        %v4043 = vmul.f32 %v3901, %v3987
        %v4044 = vmul.f32 %v3903, %v3988
        %v4045 = vmul.f32 %v3905, %v3989
        %v4046 = vmul.f32 %v3907, %v3990
        %v4047 = vmul.f32 %v3909, %v3991
        %v4048 = vmul.f32 %v3911, %v3992
        %v4049 = vmul.f32 %v3913, %v3993
        %v4050 = vmul.f32 %v3915, %v3986
        %v4051 = vmul.f32 %v3917, %v3987
        %v4052 = vmul.f32 %v3919, %v3988
        %v4053 = vmul.f32 %v3921, %v3989
        %v4054 = vmul.f32 %v3923, %v3990
        %v4055 = vmul.f32 %v3925, %v3991
        %v4056 = vmul.f32 %v3927, %v3992
        %v4057 = vmul.f32 %v3929, %v3993
        %v4058 = vmul.f32 %v3994, %v2281
        %v4059 = vmul.f32 %v3995, %v2282
        %v4060 = vmul.f32 %v3996, %v2283
        %v4061 = vmul.f32 %v3997, %v2284
        %v4062 = vmul.f32 %v3998, %v2285
        %v4063 = vmul.f32 %v3999, %v2286
        %v4064 = vmul.f32 %v4000, %v2287
        %v4065 = vmul.f32 %v4001, %v2288
        %v4066 = vmul.f32 %v4002, %v2289
        %v4067 = vmul.f32 %v4003, %v2290
        %v4068 = vmul.f32 %v4004, %v2291
        %v4069 = vmul.f32 %v4005, %v2292
        %v4070 = vmul.f32 %v4006, %v2293
        %v4071 = vmul.f32 %v4007, %v2294
        %v4072 = vmul.f32 %v4008, %v2295
        %v4073 = vmul.f32 %v4009, %v2296
        %v4074 = vmul.f32 %v4010, %v2297
        %v4075 = vmul.f32 %v4011, %v2298
        %v4076 = vmul.f32 %v4012, %v2299
        %v4077 = vmul.f32 %v4013, %v2300
        %v4078 = vmul.f32 %v4014, %v2301
        %v4079 = vmul.f32 %v4015, %v2302
        %v4080 = vmul.f32 %v4016, %v2303
        %v4081 = vmul.f32 %v4017, %v2304
        %v4082 = vmul.f32 %v4018, %v2305
        %v4083 = vmul.f32 %v4019, %v2306
        %v4084 = vmul.f32 %v4020, %v2307
        %v4085 = vmul.f32 %v4021, %v2308
        %v4086 = vmul.f32 %v4022, %v2309
        %v4087 = vmul.f32 %v4023, %v2310
        %v4088 = vmul.f32 %v4024, %v2311
        %v4089 = vmul.f32 %v4025, %v2312
        %v4090 = vmul.f32 %v4026, %v2313
        %v4091 = vmul.f32 %v4027, %v2314
        %v4092 = vmul.f32 %v4028, %v2315
        %v4093 = vmul.f32 %v4029, %v2316
        %v4094 = vmul.f32 %v4030, %v2317
        %v4095 = vmul.f32 %v4031, %v2318
        %v4096 = vmul.f32 %v4032, %v2319
        %v4097 = vmul.f32 %v4033, %v2320
        %v4098 = vmul.f32 %v4034, %v2321
        %v4099 = vmul.f32 %v4035, %v2322
        %v4100 = vmul.f32 %v4036, %v2323
        %v4101 = vmul.f32 %v4037, %v2324
        %v4102 = vmul.f32 %v4038, %v2325
        %v4103 = vmul.f32 %v4039, %v2326
        %v4104 = vmul.f32 %v4040, %v2327
        %v4105 = vmul.f32 %v4041, %v2328
        %v4106 = vmul.f32 %v4042, %v2329
        %v4107 = vmul.f32 %v4043, %v2330
        %v4108 = vmul.f32 %v4044, %v2331
        %v4109 = vmul.f32 %v4045, %v2332
        %v4110 = vmul.f32 %v4046, %v2333
        %v4111 = vmul.f32 %v4047, %v2334
        %v4112 = vmul.f32 %v4048, %v2335
        %v4113 = vmul.f32 %v4049, %v2336
        %v4114 = vmul.f32 %v4050, %v2337
        %v4115 = vmul.f32 %v4051, %v2338
        %v4116 = vmul.f32 %v4052, %v2339
        %v4117 = vmul.f32 %v4053, %v2340
        %v4118 = vmul.f32 %v4054, %v2341
        %v4119 = vmul.f32 %v4055, %v2342
        %v4120 = vmul.f32 %v4056, %v2343
        %v4121 = vmul.f32 %v4057, %v2344
        %v4122 = vadd.f32 %v4058, %v4059
        %v4123 = vadd.f32 %v4122, %v4060
        %v4124 = vadd.f32 %v4123, %v4061
        %v4125 = vadd.f32 %v4124, %v4062
        %v4126 = vadd.f32 %v4125, %v4063
        %v4127 = vadd.f32 %v4126, %v4064
        %v4128 = vadd.f32 %v4127, %v4065
        %v4129 = vrot.slane %v4128, 4
        %v4130 = vadd.f32 %v4128, %v4129
        %v4131 = vrot.slane %v4130, 2
        %v4132 = vadd.f32 %v4130, %v4131
        %v4133 = vrot.slane %v4132, 1
        %v4134 = vadd.f32 %v4132, %v4133
        %v4135 = vadd.f32 %v4066, %v4067
        %v4136 = vadd.f32 %v4135, %v4068
        %v4137 = vadd.f32 %v4136, %v4069
        %v4138 = vadd.f32 %v4137, %v4070
        %v4139 = vadd.f32 %v4138, %v4071
        %v4140 = vadd.f32 %v4139, %v4072
        %v4141 = vadd.f32 %v4140, %v4073
        %v4142 = vrot.slane %v4141, 4
        %v4143 = vadd.f32 %v4141, %v4142
        %v4144 = vrot.slane %v4143, 2
        %v4145 = vadd.f32 %v4143, %v4144
        %v4146 = vrot.slane %v4145, 1
        %v4147 = vadd.f32 %v4145, %v4146
        %v4148 = vadd.f32 %v4074, %v4075
        %v4149 = vadd.f32 %v4148, %v4076
        %v4150 = vadd.f32 %v4149, %v4077
        %v4151 = vadd.f32 %v4150, %v4078
        %v4152 = vadd.f32 %v4151, %v4079
        %v4153 = vadd.f32 %v4152, %v4080
        %v4154 = vadd.f32 %v4153, %v4081
        %v4155 = vrot.slane %v4154, 4
        %v4156 = vadd.f32 %v4154, %v4155
        %v4157 = vrot.slane %v4156, 2
        %v4158 = vadd.f32 %v4156, %v4157
        %v4159 = vrot.slane %v4158, 1
        %v4160 = vadd.f32 %v4158, %v4159
        %v4161 = vadd.f32 %v4082, %v4083
        %v4162 = vadd.f32 %v4161, %v4084
        %v4163 = vadd.f32 %v4162, %v4085
        %v4164 = vadd.f32 %v4163, %v4086
        %v4165 = vadd.f32 %v4164, %v4087
        %v4166 = vadd.f32 %v4165, %v4088
        %v4167 = vadd.f32 %v4166, %v4089
        %v4168 = vrot.slane %v4167, 4
        %v4169 = vadd.f32 %v4167, %v4168
        %v4170 = vrot.slane %v4169, 2
        %v4171 = vadd.f32 %v4169, %v4170
        %v4172 = vrot.slane %v4171, 1
        %v4173 = vadd.f32 %v4171, %v4172
        %v4174 = vadd.f32 %v4090, %v4091
        %v4175 = vadd.f32 %v4174, %v4092
        %v4176 = vadd.f32 %v4175, %v4093
        %v4177 = vadd.f32 %v4176, %v4094
        %v4178 = vadd.f32 %v4177, %v4095
        %v4179 = vadd.f32 %v4178, %v4096
        %v4180 = vadd.f32 %v4179, %v4097
        %v4181 = vrot.slane %v4180, 4
        %v4182 = vadd.f32 %v4180, %v4181
        %v4183 = vrot.slane %v4182, 2
        %v4184 = vadd.f32 %v4182, %v4183
        %v4185 = vrot.slane %v4184, 1
        %v4186 = vadd.f32 %v4184, %v4185
        %v4187 = vadd.f32 %v4098, %v4099
        %v4188 = vadd.f32 %v4187, %v4100
        %v4189 = vadd.f32 %v4188, %v4101
        %v4190 = vadd.f32 %v4189, %v4102
        %v4191 = vadd.f32 %v4190, %v4103
        %v4192 = vadd.f32 %v4191, %v4104
        %v4193 = vadd.f32 %v4192, %v4105
        %v4194 = vrot.slane %v4193, 4
        %v4195 = vadd.f32 %v4193, %v4194
        %v4196 = vrot.slane %v4195, 2
        %v4197 = vadd.f32 %v4195, %v4196
        %v4198 = vrot.slane %v4197, 1
        %v4199 = vadd.f32 %v4197, %v4198
        %v4200 = vadd.f32 %v4106, %v4107
        %v4201 = vadd.f32 %v4200, %v4108
        %v4202 = vadd.f32 %v4201, %v4109
        %v4203 = vadd.f32 %v4202, %v4110
        %v4204 = vadd.f32 %v4203, %v4111
        %v4205 = vadd.f32 %v4204, %v4112
        %v4206 = vadd.f32 %v4205, %v4113
        %v4207 = vrot.slane %v4206, 4
        %v4208 = vadd.f32 %v4206, %v4207
        %v4209 = vrot.slane %v4208, 2
        %v4210 = vadd.f32 %v4208, %v4209
        %v4211 = vrot.slane %v4210, 1
        %v4212 = vadd.f32 %v4210, %v4211
        %v4213 = vadd.f32 %v4114, %v4115
        %v4214 = vadd.f32 %v4213, %v4116
        %v4215 = vadd.f32 %v4214, %v4117
        %v4216 = vadd.f32 %v4215, %v4118
        %v4217 = vadd.f32 %v4216, %v4119
        %v4218 = vadd.f32 %v4217, %v4120
        %v4219 = vadd.f32 %v4218, %v4121
        %v4220 = vrot.slane %v4219, 4
        %v4221 = vadd.f32 %v4219, %v4220
        %v4222 = vrot.slane %v4221, 2
        %v4223 = vadd.f32 %v4221, %v4222
        %v4224 = vrot.slane %v4223, 1
        %v4225 = vadd.f32 %v4223, %v4224
        %v4226 = vmul.f32 %v4134, %v4134
        %v4227 = vmul.f32 %v4147, %v4147
        %v4228 = vmul.f32 %v4160, %v4160
        %v4229 = vmul.f32 %v4173, %v4173
        %v4230 = vmul.f32 %v4186, %v4186
        %v4231 = vmul.f32 %v4199, %v4199
        %v4232 = vmul.f32 %v4212, %v4212
        %v4233 = vmul.f32 %v4225, %v4225
        %4234 = vadd.xlane.f32.xlu0 %v4226
        %v4235 = vpop.xlane.xlu0 %4234
        %4236 = vadd.xlane.f32.xlu0 %v4227
        %v4237 = vpop.xlane.xlu0 %4236
        %4238 = vadd.xlane.f32.xlu0 %v4228
        %v4239 = vpop.xlane.xlu0 %4238
        %4240 = vadd.xlane.f32.xlu0 %v4229
        %v4241 = vpop.xlane.xlu0 %4240
        %4242 = vadd.xlane.f32.xlu0 %v4230
        %v4243 = vpop.xlane.xlu0 %4242
        %4244 = vadd.xlane.f32.xlu0 %v4231
        %v4245 = vpop.xlane.xlu0 %4244
        %4246 = vadd.xlane.f32.xlu0 %v4232
        %v4247 = vpop.xlane.xlu0 %4246
        %4248 = vadd.xlane.f32.xlu0 %v4233
        %v4249 = vpop.xlane.xlu0 %4248
        %v4250 = vadd.f32 %v4235, 1e-08
        %v4251 = vadd.f32 %v4237, 1e-08
        %v4252 = vadd.f32 %v4239, 1e-08
        %v4253 = vadd.f32 %v4241, 1e-08
        %v4254 = vadd.f32 %v4243, 1e-08
        %v4255 = vadd.f32 %v4245, 1e-08
        %v4256 = vadd.f32 %v4247, 1e-08
        %v4257 = vadd.f32 %v4249, 1e-08
        %v4258 = vrsqrt.pop %v4250
        %v4259 = vrsqrt.pop %v4251
        %v4260 = vrsqrt.pop %v4252
        %v4261 = vrsqrt.pop %v4253
        %v4262 = vrsqrt.pop %v4254
        %v4263 = vrsqrt.pop %v4255
        %v4264 = vrsqrt.pop %v4256
        %v4265 = vrsqrt.pop %v4257
        %v4266 = vmul.f32 %v4235, %v4258
        %v4267 = vmul.f32 %v4237, %v4259
        %v4268 = vmul.f32 %v4239, %v4260
        %v4269 = vmul.f32 %v4241, %v4261
        %v4270 = vmul.f32 %v4243, %v4262
        %v4271 = vmul.f32 %v4245, %v4263
        %v4272 = vmul.f32 %v4247, %v4264
        %v4273 = vmul.f32 %v4249, %v4265
        %v4274 = vadd.f32 %v4235, 1.0
        %v4275 = vadd.f32 %v4237, 1.0
        %v4276 = vadd.f32 %v4239, 1.0
        %v4277 = vadd.f32 %v4241, 1.0
        %v4278 = vadd.f32 %v4243, 1.0
        %v4279 = vadd.f32 %v4245, 1.0
        %v4280 = vadd.f32 %v4247, 1.0
        %v4281 = vadd.f32 %v4249, 1.0
        %v4282 = vrcp.pop %v4274
        %v4283 = vrcp.pop %v4275
        %v4284 = vrcp.pop %v4276
        %v4285 = vrcp.pop %v4277
        %v4286 = vrcp.pop %v4278
        %v4287 = vrcp.pop %v4279
        %v4288 = vrcp.pop %v4280
        %v4289 = vrcp.pop %v4281
        %v4290 = vmul.f32 %v4266, %v4282
        %v4291 = vmul.f32 %v4267, %v4283
        %v4292 = vmul.f32 %v4268, %v4284
        %v4293 = vmul.f32 %v4269, %v4285
        %v4294 = vmul.f32 %v4270, %v4286
        %v4295 = vmul.f32 %v4271, %v4287
        %v4296 = vmul.f32 %v4272, %v4288
        %v4297 = vmul.f32 %v4273, %v4289
        %v4298 = vmul.f32 %v4290, %v4134
        %v4299 = vmul.f32 %v4291, %v4147
        %v4300 = vmul.f32 %v4292, %v4160
        %v4301 = vmul.f32 %v4293, %v4173
        %v4302 = vmul.f32 %v4294, %v4186
        %v4303 = vmul.f32 %v4295, %v4199
        %v4304 = vmul.f32 %v4296, %v4212
        %v4305 = vmul.f32 %v4297, %v4225
        %vm4314 = vcmask 1041409
        %v4315 = vsel %vm4314, %v4299, %v4298
        %vm4316 = vcmask 1042434
        %v4317 = vsel %vm4316, %v4300, %v4315
        %vm4318 = vcmask 1043459
        %v4319 = vsel %vm4318, %v4301, %v4317
        %vm4320 = vcmask 1044484
        %v4321 = vsel %vm4320, %v4302, %v4319
        %vm4322 = vcmask 1045509
        %v4323 = vsel %vm4322, %v4303, %v4321
        %vm4324 = vcmask 1046534
        %v4325 = vsel %vm4324, %v4304, %v4323
        %vm4326 = vcmask 1047559
        %v4327 = vsel %vm4326, %v4305, %v4325
        %4329 = vst [vmem:[%s154] sm:$0xff] %v4327
        %s4330 = sand.u32 %s72, 1
        %s4331 = scalar_lea.sflag [#allocation4], %s4330
        %s4332 = sand.u32 %s72, 1
        %s4333 = smul.addr %s4332, 8
        %s4334 = scalar_lea.vmem [#allocation5], %s4333
        // Predicated region
        $region33: #{tpu_custom_call.1} parent=27 // pred_check
          %p4335 = pneg %p82
        $region34: #{tpu_custom_call.1} parent=27 // pred_check_branch
          %4337 = sbr.rel (%p4335) target = $region36
        $region35: #{tpu_custom_call.1} parent=27 // pred_region
          %s4339 = ssub.s32 128, 128
          %4340 = vsyncadd %s4331, %s4339
          %s4341 = smul.addr %s17, 128
          %s4342 = scalar_lea.hbm %s2, %s4341
          %s4344 = sshll.u32 %s4334, 4
          %s4345 = int_to_ptr.vmem [resolvable:$true] %s4344
          %4347 = dma.vmem_to_hbm [thread:$0]  %s4345, 128, %s4342, %s4331
        $region36: #{tpu_custom_call.1} parent=27 // pred_fallthru
          _
      $region28: #{tpu_custom_call.1} parent=5 // pred_fallthru
        _
      %p4348 = scmp.le.s32.totalorder 2, %s12
      // Predicated region
      $region37: #{tpu_custom_call.1} parent=5 // pred_check
        %p4349 = pneg %p4348
      $region38: #{tpu_custom_call.1} parent=5 // pred_check_branch
        %4351 = sbr.rel (%p4349) target = $region40
      $region39: #{tpu_custom_call.1} parent=5 // pred_region
        %s4352 = ssub.s32 %s12, 2
        // Predicated region
        $region41: #{tpu_custom_call.1} parent=39 // pred_check
          %p4353 = pneg %p88
        $region42: #{tpu_custom_call.1} parent=39 // pred_check_branch
          %4355 = sbr.rel (%p4353) target = $region44
        $region43: #{tpu_custom_call.1} parent=39 // pred_region
          %s4356 = sand.u32 %s73, 1
          %s4357 = scalar_lea.sflag [#allocation4], %s4356
          %s4358 = sand.u32 %s73, 1
          %s4359 = smul.addr %s4358, 8
          %s4360 = scalar_lea.vmem [#allocation5], %s4359
          %4361 = dma.done %s4357, 128
        $region44: #{tpu_custom_call.1} parent=39 // pred_fallthru
          _
      $region40: #{tpu_custom_call.1} parent=5 // pred_fallthru
        _
    $region6: #{tpu_custom_call.1} parent=1 // loop_footer
      %s16 = sadd.s32 1, %s12
    $region7: #{tpu_custom_call.1} parent=1 // loop_footer_branch
      %11 = sbr.rel target = $region3
    $region8: #{tpu_custom_call.1} parent=1 // loop_exit
      _
    %4362 = vsyncpa [#allocation3], 1
    %s4363 = scalar_lea.sflag [#allocation3], 1
    %4364 = vsyncpa %s4363, 1
    %4365 = vsyncpa [#allocation4], 1
    %s4366 = scalar_lea.sflag [#allocation4], 1
    %4367 = vsyncpa %s4366, 1

</llo_original>
